<compile_context>
chip_gen: v5e
topology: v5e:2x2
jax: 0.10.0
libtpu: 0.0.40
codegen_flags: <defaults>
</compile_context>

<pallas_src>
import functools
import math

import jax
import jax.numpy as jnp
from jax import lax
from jax.experimental import pallas as pl
from jax.experimental.pallas import tpu as pltpu

LANE = 128
_NEG = -1e30  # "no edge" score; exp(_NEG - m) underflows to 0 for realistic m


def _round_up(x, m):
    return (x + m - 1) // m * m


# -----------------------------------------------------------------------------
# Kernel 1: fused multi-head projection  h1 = x @ W_stacked   (bf16 output)
# -----------------------------------------------------------------------------
def _project_kernel(x_ref, w_ref, h_ref):
    x = x_ref[...].astype(jnp.bfloat16)
    h = jnp.dot(x, w_ref[...], preferred_element_type=jnp.float32)
    h_ref[...] = h.astype(h_ref.dtype)


def project(x_p, w_stacked_bf16, *, tm):
    np_, fin_p = x_p.shape
    hp = w_stacked_bf16.shape[1]
    return pl.pallas_call(
        _project_kernel,
        out_shape=jax.ShapeDtypeStruct((np_, hp), jnp.bfloat16),
        grid=(np_ // tm,),
        in_specs=[
            pl.BlockSpec((tm, fin_p), lambda i: (i, 0)),
            pl.BlockSpec((fin_p, hp), lambda i: (0, 0)),
        ],
        out_specs=pl.BlockSpec((tm, hp), lambda i: (i, 0)),
        compiler_params=pltpu.CompilerParams(
            dimension_semantics=("parallel",),
            vmem_limit_bytes=32 * 1024 * 1024),
        cost_estimate=pl.CostEstimate(
            flops=2 * np_ * fin_p * hp,
            transcendentals=0,
            bytes_accessed=4 * np_ * fin_p + 2 * fin_p * hp + 2 * np_ * hp),
    )(x_p, w_stacked_bf16)


# -----------------------------------------------------------------------------
# Kernel 2: layer-1 attention for ALL heads (online-softmax style) fused with
# the output-layer projection h2 = sum_h elu(hp_h) @ W_out[h].
# -----------------------------------------------------------------------------
def _attn1_kernel(adj_ref, h1r_ref, h1c_ref, a1l_ref, a1r_ref, wout_ref,
                  h2_ref, f_sc, m_sc, l_sc, acc_sc, *, nheads, nhid_p, alpha):
    j = pl.program_id(1)
    nj = pl.num_programs(1)

    # int8 adjacency tile -> boolean edge mask (select, no f32 mask multiply).
    mask = adj_ref[...].astype(jnp.float32) > 0.0          # (tm, tn)

    @pl.when(j == 0)
    def _init():
        m_sc[...] = jnp.full_like(m_sc, _NEG)
        l_sc[...] = jnp.zeros_like(l_sc)
        acc_sc[...] = jnp.zeros_like(acc_sc)
        # f[i] = a_left_h . h1_i -- computed once per row tile (hoisted out of
        # the column loop), stored in scratch.
        h1r = h1r_ref[...]                                  # (tm, nheads*nhid_p)
        for h in range(nheads):
            h1r_h = h1r[:, h * nhid_p:(h + 1) * nhid_p].astype(jnp.float32)
            f_sc[h] = lax.dot_general(h1r_h, a1l_ref[h:h + 1, :],
                                      (((1,), (1,)), ((), ())),
                                      preferred_element_type=jnp.float32)

    h1c = h1c_ref[...]                                      # (tn, nheads*nhid_p) bf16

    for h in range(nheads):
        h1c_h = h1c[:, h * nhid_p:(h + 1) * nhid_p]         # (tn, nhid_p) bf16
        # g[j] = a_right_h . h1_j  -> (1, tn), streamed per column tile.
        g = lax.dot_general(a1r_ref[h:h + 1, :], h1c_h.astype(jnp.float32),
                            (((1,), (1,)), ((), ())),
                            preferred_element_type=jnp.float32)
        s = f_sc[h] + g                                     # (tm, tn)
        s = jnp.where(s > 0, s, alpha * s)                  # LeakyReLU
        score = jnp.where(mask, -s, _NEG)                   # exp argument, masked

        m_old = m_sc[h]
        m_new = jnp.maximum(m_old, jnp.max(score, axis=-1, keepdims=True))
        rescale = jnp.exp(m_old - m_new)
        p = jnp.exp(score - m_new)                          # masked entries -> 0
        l_sc[h] = rescale * l_sc[h] + jnp.sum(p, axis=-1, keepdims=True)
        acc_sc[h] = rescale * acc_sc[h] + jnp.dot(
            p.astype(jnp.bfloat16), h1c_h, preferred_element_type=jnp.float32)
        m_sc[h] = m_new

    @pl.when(j == nj - 1)
    def _finalize():
        h2 = jnp.zeros(h2_ref.shape, jnp.float32)
        for h in range(nheads):
            hp_h = acc_sc[h] * pl.reciprocal(l_sc[h], approx=True)
            # ELU (alpha=1.0, F.elu default)
            out1 = jnp.where(hp_h > 0, hp_h,
                             jnp.exp(jnp.minimum(hp_h, 0.0)) - 1.0)
            # Output-layer projection partial sum (replaces the concat + mm).
            h2 = h2 + jnp.dot(out1.astype(jnp.bfloat16), wout_ref[h],
                              preferred_element_type=jnp.float32)
        h2_ref[...] = h2.astype(h2_ref.dtype)


def attn_layer1(adj_i8, h1, a1l, a1r, wout_s, *, nheads, nhid_p, nclass_p,
                alpha, tm, tn):
    np_ = adj_i8.shape[0]
    hp = h1.shape[1]
    kernel = functools.partial(_attn1_kernel, nheads=nheads, nhid_p=nhid_p,
                               alpha=alpha)
    flops = (nheads * 2 * np_ * np_ * nhid_p          # e @ h aggregation
             + nheads * 2 * np_ * nhid_p              # f, g score matvecs
             + 2 * np_ * hp * nclass_p)               # W_out projection
    return pl.pallas_call(
        kernel,
        out_shape=jax.ShapeDtypeStruct((np_, nclass_p), jnp.bfloat16),
        grid=(np_ // tm, np_ // tn),
        in_specs=[
            pl.BlockSpec((tm, tn), lambda i, j: (i, j)),            # adj (int8)
            pl.BlockSpec((tm, hp), lambda i, j: (i, 0)),            # h1 rows
            pl.BlockSpec((tn, hp), lambda i, j: (j, 0)),            # h1 cols
            pl.BlockSpec((nheads, nhid_p), lambda i, j: (0, 0)),    # a_left
            pl.BlockSpec((nheads, nhid_p), lambda i, j: (0, 0)),    # a_right
            pl.BlockSpec((nheads, nhid_p, nclass_p), lambda i, j: (0, 0, 0)),
        ],
        out_specs=pl.BlockSpec((tm, nclass_p), lambda i, j: (i, 0)),
        scratch_shapes=[
            pltpu.VMEM((nheads, tm, 1), jnp.float32),        # f (per row tile)
            pltpu.VMEM((nheads, tm, 1), jnp.float32),        # running max
            pltpu.VMEM((nheads, tm, 1), jnp.float32),        # running rowsum
            pltpu.VMEM((nheads, tm, nhid_p), jnp.float32),   # running e @ h
        ],
        compiler_params=pltpu.CompilerParams(
            dimension_semantics=("parallel", "arbitrary"),
            vmem_limit_bytes=32 * 1024 * 1024),
        cost_estimate=pl.CostEstimate(
            flops=flops,
            transcendentals=nheads * np_ * np_,
            bytes_accessed=np_ * np_ + 2 * np_ * hp * (np_ // tm)
                           + 2 * np_ * nclass_p),
    )(adj_i8, h1, h1, a1l, a1r, wout_s)


# -----------------------------------------------------------------------------
# Kernel 3: output attention layer + F.elu + log_softmax epilogue.
# -----------------------------------------------------------------------------
def _attn2_kernel(adj_ref, h2r_ref, h2c_ref, a2l_ref, a2r_ref, o_ref,
                  f_sc, m_sc, l_sc, acc_sc, *, nclass, alpha):
    j = pl.program_id(1)
    nj = pl.num_programs(1)

    mask = adj_ref[...].astype(jnp.float32) > 0.0

    @pl.when(j == 0)
    def _init():
        m_sc[...] = jnp.full_like(m_sc, _NEG)
        l_sc[...] = jnp.zeros_like(l_sc)
        acc_sc[...] = jnp.zeros_like(acc_sc)
        f_sc[...] = lax.dot_general(h2r_ref[...].astype(jnp.float32),
                                    a2l_ref[...],
                                    (((1,), (1,)), ((), ())),
                                    preferred_element_type=jnp.float32)

    h2c = h2c_ref[...]                                      # (tn, nclass_p) bf16
    g = lax.dot_general(a2r_ref[...], h2c.astype(jnp.float32),
                        (((1,), (1,)), ((), ())),
                        preferred_element_type=jnp.float32)  # (1, tn)
    s = f_sc[...] + g
    s = jnp.where(s > 0, s, alpha * s)
    score = jnp.where(mask, -s, _NEG)

    m_old = m_sc[...]
    m_new = jnp.maximum(m_old, jnp.max(score, axis=-1, keepdims=True))
    rescale = jnp.exp(m_old - m_new)
    p = jnp.exp(score - m_new)
    l_sc[...] = rescale * l_sc[...] + jnp.sum(p, axis=-1, keepdims=True)
    acc_sc[...] = rescale * acc_sc[...] + jnp.dot(
        p.astype(jnp.bfloat16), h2c, preferred_element_type=jnp.float32)
    m_sc[...] = m_new

    @pl.when(j == nj - 1)
    def _finalize():
        hp2 = acc_sc[...] * pl.reciprocal(l_sc[...], approx=True)
        out = jnp.where(hp2 > 0, hp2, jnp.exp(jnp.minimum(hp2, 0.0)) - 1.0)
        # log_softmax over the REAL (unpadded) class lanes only.
        lane = lax.broadcasted_iota(jnp.int32, out.shape, dimension=1)
        valid = lane < nclass
        z = jnp.where(valid, out, _NEG)
        zmax = jnp.max(z, axis=-1, keepdims=True)
        ez = jnp.where(valid, jnp.exp(z - zmax), 0.0)
        lse = jnp.log(jnp.sum(ez, axis=-1, keepdims=True))
        o_ref[...] = z - zmax - lse


def attn_layer2(adj_i8, h2, a2l, a2r, *, nclass, alpha, tm, tn):
    np_ = adj_i8.shape[0]
    nclass_p = h2.shape[1]
    kernel = functools.partial(_attn2_kernel, nclass=nclass, alpha=alpha)
    return pl.pallas_call(
        kernel,
        out_shape=jax.ShapeDtypeStruct((np_, nclass_p), jnp.float32),
        grid=(np_ // tm, np_ // tn),
        in_specs=[
            pl.BlockSpec((tm, tn), lambda i, j: (i, j)),            # adj (int8)
            pl.BlockSpec((tm, nclass_p), lambda i, j: (i, 0)),      # h2 rows
            pl.BlockSpec((tn, nclass_p), lambda i, j: (j, 0)),      # h2 cols
            pl.BlockSpec((1, nclass_p), lambda i, j: (0, 0)),
            pl.BlockSpec((1, nclass_p), lambda i, j: (0, 0)),
        ],
        out_specs=pl.BlockSpec((tm, nclass_p), lambda i, j: (i, 0)),
        scratch_shapes=[
            pltpu.VMEM((tm, 1), jnp.float32),
            pltpu.VMEM((tm, 1), jnp.float32),
            pltpu.VMEM((tm, 1), jnp.float32),
            pltpu.VMEM((tm, nclass_p), jnp.float32),
        ],
        compiler_params=pltpu.CompilerParams(
            dimension_semantics=("parallel", "arbitrary"),
            vmem_limit_bytes=32 * 1024 * 1024),
        cost_estimate=pl.CostEstimate(
            flops=2 * np_ * np_ * nclass_p,
            transcendentals=np_ * np_,
            bytes_accessed=np_ * np_ + 2 * np_ * nclass_p * (np_ // tm)
                           + 4 * np_ * nclass_p),
    )(adj_i8, h2, h2, a2l, a2r)


# -----------------------------------------------------------------------------
# SpGAT module: parameters + forward glue (padding / weight stacking).
# -----------------------------------------------------------------------------
def xavier_normal(key, shape, gain):
    fan_in, fan_out = shape[0], shape[1]
    std = gain * math.sqrt(2.0 / (fan_in + fan_out))
    return std * jax.random.normal(key, shape, dtype=jnp.float32)


def init_spgat_params(key, nfeat, nhid, nclass, nheads):
    gain = 1.414
    params = {"attentions": [], "out": None}
    keys = jax.random.split(key, 2 * nheads + 2)
    for h in range(nheads):
        W = xavier_normal(keys[2 * h], (nfeat, nhid), gain)
        a = xavier_normal(keys[2 * h + 1], (1, 2 * nhid), gain)
        params["attentions"].append((W, a))
    W_out = xavier_normal(keys[-2], (nhid * nheads, nclass), gain)
    a_out = xavier_normal(keys[-1], (1, 2 * nclass), gain)
    params["out"] = (W_out, a_out)
    return params


def spgat_forward(params, x, adj, *, alpha, tm=256, tn=512):
    N, nfeat = x.shape
    nheads = len(params["attentions"])
    nhid = params["attentions"][0][0].shape[1]
    W_out, a_out = params["out"]
    nclass = W_out.shape[1]

    # Lane-dense padding (multiples of 128); pad sliced off at the end.
    fin_p = _round_up(nfeat, LANE)
    nhid_p = _round_up(nhid, LANE)
    nclass_p = _round_up(nclass, LANE)
    np_ = _round_up(N, LANE)
    tm = min(tm, np_)
    tn = min(tn, np_)
    if np_ % tm:
        tm = LANE
    if np_ % tn:
        tn = LANE

    # Padded inputs. Padded rows/cols carry no edges, so they never affect
    # real rows (and are sliced off below).
    x_p = jnp.zeros((np_, fin_p), jnp.float32).at[:N, :nfeat].set(x)
    adj_i8 = jnp.zeros((np_, np_), jnp.int8).at[:N, :N].set(
        (adj != 0).astype(jnp.int8))

    # Stacked / padded parameters (all heads fused into one kernel).
    w_cols, a_l, a_r, wout_blocks = [], [], [], []
    for h, (W, a) in enumerate(params["attentions"]):
        w_cols.append(jnp.zeros((fin_p, nhid_p), jnp.float32)
                      .at[:nfeat, :nhid].set(W))
        a_l.append(jnp.zeros((nhid_p,), jnp.float32).at[:nhid].set(a[0, :nhid]))
        a_r.append(jnp.zeros((nhid_p,), jnp.float32).at[:nhid].set(a[0, nhid:]))
        wout_blocks.append(jnp.zeros((nhid_p, nclass_p), jnp.float32)
                           .at[:nhid, :nclass]
                           .set(W_out[h * nhid:(h + 1) * nhid, :]))
    w_stacked = jnp.concatenate(w_cols, axis=1).astype(jnp.bfloat16)
    a1l = jnp.stack(a_l)                                   # (nheads, nhid_p)
    a1r = jnp.stack(a_r)
    wout_s = jnp.stack(wout_blocks).astype(jnp.bfloat16)   # (nheads, nhid_p, nclass_p)
    a2l = jnp.zeros((1, nclass_p), jnp.float32).at[0, :nclass].set(a_out[0, :nclass])
    a2r = jnp.zeros((1, nclass_p), jnp.float32).at[0, :nclass].set(a_out[0, nclass:])

    # F.dropout(x) -- identity in eval mode.
    h1 = project(x_p, w_stacked, tm=tm)                    # (np_, nheads*nhid_p) bf16
    h2 = attn_layer1(adj_i8, h1, a1l, a1r, wout_s,
                     nheads=nheads, nhid_p=nhid_p, nclass_p=nclass_p,
                     alpha=alpha, tm=tm, tn=tn)            # (np_, nclass_p) bf16
    out = attn_layer2(adj_i8, h2, a2l, a2r,
                      nclass=nclass, alpha=alpha, tm=tm, tn=tn)
    return out[:N, :nclass]


if __name__ == "__main__":
    key = jax.random.PRNGKey(0)
    k_param, k_x, k_adj = jax.random.split(key, 3)

    # Small, forward-consistent shapes.
    N = 16        # number of graph nodes
    nfeat = 32
    nhid = 16
    nclass = 8
    nheads = 2
    alpha = 0.2   # LeakyReLU negative slope

    params = init_spgat_params(k_param, nfeat, nhid, nclass, nheads)

    x = jax.random.normal(k_x, (N, nfeat), dtype=jnp.float32)
    # Random sparse-ish adjacency with guaranteed self-loops.
    adj = (jax.random.uniform(k_adj, (N, N)) < 0.25).astype(jnp.float32)
    adj = jnp.maximum(adj, jnp.eye(N, dtype=jnp.float32))

    fwd = jax.jit(functools.partial(spgat_forward, alpha=alpha))
    out = jax.block_until_ready(fwd(params, x, adj))

    assert out.shape == (N, nclass)
    assert bool(jnp.all(jnp.isfinite(out)))
    # log_softmax rows must normalize.
    assert bool(jnp.all(jnp.abs(jnp.sum(jnp.exp(out), axis=1) - 1.0) < 1e-2))
    print("KERNEL_OK")
</pallas_src>

<mosaic_0001>
module attributes {stable_mosaic.version = 11 : i64} {
  func.func @_project_kernel(%arg0: i32, %arg1: memref<128x128xf32, #tpu.memory_space<vmem>>, %arg2: memref<128x256xbf16, #tpu.memory_space<vmem>>, %arg3: memref<128x256xbf16, #tpu.memory_space<vmem>>) attributes {dimension_semantics = [#tpu.dimension_semantics<parallel>], iteration_bounds = array<i64: 1>, scalar_prefetch = 0 : i64, scratch_operands = 0 : i64, tpu.core_type = #tpu.core_type<tc>, window_params = [{transform_indices = @transform_0, window_bounds = array<i64: 128, 128>}, {pipeline_mode = #tpu.pipeline_mode<synchronous>, transform_indices = @transform_1, window_bounds = array<i64: 128, 256>}, {transform_indices = @transform_2, window_bounds = array<i64: 128, 256>}]} {
    %c0 = arith.constant 0 : index
    %c0_0 = arith.constant 0 : index
    %0 = vector.load %arg1[%c0, %c0_0] : memref<128x128xf32, #tpu.memory_space<vmem>>, vector<128x128xf32>
    %1 = arith.truncf %0 : vector<128x128xf32> to vector<128x128xbf16>
    %c0_1 = arith.constant 0 : index
    %c0_2 = arith.constant 0 : index
    %2 = vector.load %arg2[%c0_1, %c0_2] : memref<128x256xbf16, #tpu.memory_space<vmem>>, vector<128x256xbf16>
    %cst = arith.constant dense<0.000000e+00> : vector<128x256xf32>
    %3 = tpu.matmul %1, %2, %cst {dimension_numbers = #tpu.dot_dimension_numbers<[1], [0], [0], [1], [0, 0, 1, 1], [], []>} : vector<128x128xbf16>, vector<128x256xbf16>, vector<128x256xf32> -> vector<128x256xf32>
    %4 = arith.truncf %3 : vector<128x256xf32> to vector<128x256xbf16>
    %c0_3 = arith.constant 0 : index
    %c0_4 = arith.constant 0 : index
    %5 = vector.load %arg3[%c0_3, %c0_4] : memref<128x256xbf16, #tpu.memory_space<vmem>>, vector<128x256xbf16>
    tpu.vector_store %arg3[%c0_3, %c0_4], %4 {strides = array<i32>} : memref<128x256xbf16, #tpu.memory_space<vmem>>, vector<128x256xbf16>,
    return
  }
  func.func @transform_0(%arg0: i32) -> (i32, i32) {
    %c0_i32 = arith.constant 0 : i32
    %c0_i32_0 = arith.constant 0 : i32
    return %arg0, %c0_i32 : i32, i32
  }
  func.func @transform_1(%arg0: i32) -> (i32, i32) {
    %c0_i32 = arith.constant 0 : i32
    %c0_i32_0 = arith.constant 0 : i32
    %c0_i32_1 = arith.constant 0 : i32
    return %c0_i32, %c0_i32_0 : i32, i32
  }
  func.func @transform_2(%arg0: i32) -> (i32, i32) {
    %c0_i32 = arith.constant 0 : i32
    %c0_i32_0 = arith.constant 0 : i32
    return %arg0, %c0_i32 : i32, i32
  }
}

module attributes {stable_mosaic.version = 11 : i64} {
  func.func @_attn1_kernel(%arg0: i32, %arg1: i32, %arg2: memref<128x128xi8, #tpu.memory_space<vmem>>, %arg3: memref<128x256xbf16, #tpu.memory_space<vmem>>, %arg4: memref<128x256xbf16, #tpu.memory_space<vmem>>, %arg5: memref<2x128xf32, #tpu.memory_space<vmem>>, %arg6: memref<2x128xf32, #tpu.memory_space<vmem>>, %arg7: memref<2x128x128xbf16, #tpu.memory_space<vmem>>, %arg8: memref<128x128xbf16, #tpu.memory_space<vmem>>, %arg9: memref<2x128x1xf32, #tpu.memory_space<vmem>>, %arg10: memref<2x128x1xf32, #tpu.memory_space<vmem>>, %arg11: memref<2x128x1xf32, #tpu.memory_space<vmem>>, %arg12: memref<2x128x128xf32, #tpu.memory_space<vmem>>) attributes {dimension_semantics = [#tpu.dimension_semantics<parallel>, #tpu.dimension_semantics<arbitrary>], iteration_bounds = array<i64: 1, 1>, scalar_prefetch = 0 : i64, scratch_operands = 4 : i64, tpu.core_type = #tpu.core_type<tc>, window_params = [{transform_indices = @transform_0, window_bounds = array<i64: 128, 128>}, {transform_indices = @transform_1, window_bounds = array<i64: 128, 256>}, {transform_indices = @transform_2, window_bounds = array<i64: 128, 256>}, {pipeline_mode = #tpu.pipeline_mode<synchronous>, transform_indices = @transform_3, window_bounds = array<i64: 2, 128>}, {pipeline_mode = #tpu.pipeline_mode<synchronous>, transform_indices = @transform_4, window_bounds = array<i64: 2, 128>}, {pipeline_mode = #tpu.pipeline_mode<synchronous>, transform_indices = @transform_5, window_bounds = array<i64: 2, 128, 128>}, {transform_indices = @transform_6, window_bounds = array<i64: 128, 128>}]} {
    %c0 = arith.constant 0 : index
    %c0_0 = arith.constant 0 : index
    %0 = vector.load %arg2[%c0, %c0_0] : memref<128x128xi8, #tpu.memory_space<vmem>>, vector<128x128xi8>
    %1 = arith.sitofp %0 : vector<128x128xi8> to vector<128x128xf32>
    %cst = arith.constant 0.000000e+00 : f32
    %2 = vector.broadcast %cst : f32 to vector<128x128xf32>
    %3 = arith.cmpf ogt, %1, %2 : vector<128x128xf32>
    %c0_i32 = arith.constant 0 : i32
    %4 = arith.cmpi eq, %arg1, %c0_i32 : i32
    %5 = arith.extui %4 : i1 to i32
    %c0_i32_1 = arith.constant 0 : i32
    %6 = arith.cmpi ne, %5, %c0_i32_1 : i32
    scf.if %6 {
      %cst_67 = arith.constant -1.000000e+30 : f32
      %111 = vector.broadcast %cst_67 : f32 to vector<2x128x1xf32>
      %c0_68 = arith.constant 0 : index
      %c0_69 = arith.constant 0 : index
      %c0_70 = arith.constant 0 : index
      %112 = vector.load %arg10[%c0_68, %c0_69, %c0_70] : memref<2x128x1xf32, #tpu.memory_space<vmem>>, vector<2x128x1xf32>
      tpu.vector_store %arg10[%c0_68, %c0_69, %c0_70], %111 {strides = array<i32>} : memref<2x128x1xf32, #tpu.memory_space<vmem>>, vector<2x128x1xf32>,
      %cst_71 = arith.constant 0.000000e+00 : f32
      %113 = vector.broadcast %cst_71 : f32 to vector<2x128x1xf32>
      %c0_72 = arith.constant 0 : index
      %c0_73 = arith.constant 0 : index
      %c0_74 = arith.constant 0 : index
      %114 = vector.load %arg11[%c0_72, %c0_73, %c0_74] : memref<2x128x1xf32, #tpu.memory_space<vmem>>, vector<2x128x1xf32>
      tpu.vector_store %arg11[%c0_72, %c0_73, %c0_74], %113 {strides = array<i32>} : memref<2x128x1xf32, #tpu.memory_space<vmem>>, vector<2x128x1xf32>,
      %cst_75 = arith.constant 0.000000e+00 : f32
      %115 = vector.broadcast %cst_75 : f32 to vector<2x128x128xf32>
      %c0_76 = arith.constant 0 : index
      %c0_77 = arith.constant 0 : index
      %c0_78 = arith.constant 0 : index
      %116 = vector.load %arg12[%c0_76, %c0_77, %c0_78] : memref<2x128x128xf32, #tpu.memory_space<vmem>>, vector<2x128x128xf32>
      tpu.vector_store %arg12[%c0_76, %c0_77, %c0_78], %115 {strides = array<i32>} : memref<2x128x128xf32, #tpu.memory_space<vmem>>, vector<2x128x128xf32>,
      %c0_79 = arith.constant 0 : index
      %c0_80 = arith.constant 0 : index
      %117 = vector.load %arg3[%c0_79, %c0_80] : memref<128x256xbf16, #tpu.memory_space<vmem>>, vector<128x256xbf16>
      %118 = vector.extract_strided_slice %117 {offsets = [0, 0], sizes = [128, 128], strides = [1, 1]} : vector<128x256xbf16> to vector<128x128xbf16>
      %119 = arith.extf %118 : vector<128x128xbf16> to vector<128x128xf32>
      %c0_81 = arith.constant 0 : index
      %c0_82 = arith.constant 0 : index
      %120 = vector.load %arg5[%c0_81, %c0_82] : memref<2x128xf32, #tpu.memory_space<vmem>>, vector<1x128xf32>
      %cst_83 = arith.constant dense<0.000000e+00> : vector<128x1xf32>
      %121 = tpu.matmul %119, %120, %cst_83 {dimension_numbers = #tpu.dot_dimension_numbers<[1], [1], [0], [0], [0, 0, 1, 0], [], []>} : vector<128x128xf32>, vector<1x128xf32>, vector<128x1xf32> -> vector<128x1xf32>
      %c0_84 = arith.constant 0 : index
      %c0_85 = arith.constant 0 : index
      %c0_86 = arith.constant 0 : index
      %122 = vector.load %arg9[%c0_84, %c0_85, %c0_86] : memref<2x128x1xf32, #tpu.memory_space<vmem>>, vector<1x128x1xf32>
      %123 = vector.shape_cast %122 : vector<1x128x1xf32> to vector<128x1xf32>
      %124 = vector.shape_cast %121 : vector<128x1xf32> to vector<1x128x1xf32>
      tpu.vector_store %arg9[%c0_84, %c0_85, %c0_86], %124 {strides = array<i32>} : memref<2x128x1xf32, #tpu.memory_space<vmem>>, vector<1x128x1xf32>,
      %125 = vector.extract_strided_slice %117 {offsets = [0, 128], sizes = [128, 128], strides = [1, 1]} : vector<128x256xbf16> to vector<128x128xbf16>
      %126 = arith.extf %125 : vector<128x128xbf16> to vector<128x128xf32>
      %c1_87 = arith.constant 1 : index
      %c0_88 = arith.constant 0 : index
      %127 = vector.load %arg5[%c1_87, %c0_88] : memref<2x128xf32, #tpu.memory_space<vmem>>, vector<1x128xf32>
      %cst_89 = arith.constant dense<0.000000e+00> : vector<128x1xf32>
      %128 = tpu.matmul %126, %127, %cst_89 {dimension_numbers = #tpu.dot_dimension_numbers<[1], [1], [0], [0], [0, 0, 1, 0], [], []>} : vector<128x128xf32>, vector<1x128xf32>, vector<128x1xf32> -> vector<128x1xf32>
      %c1_90 = arith.constant 1 : index
      %c0_91 = arith.constant 0 : index
      %c0_92 = arith.constant 0 : index
      %129 = vector.load %arg9[%c1_90, %c0_91, %c0_92] : memref<2x128x1xf32, #tpu.memory_space<vmem>>, vector<1x128x1xf32>
      %130 = vector.shape_cast %129 : vector<1x128x1xf32> to vector<128x1xf32>
      %131 = vector.shape_cast %128 : vector<128x1xf32> to vector<1x128x1xf32>
      tpu.vector_store %arg9[%c1_90, %c0_91, %c0_92], %131 {strides = array<i32>} : memref<2x128x1xf32, #tpu.memory_space<vmem>>, vector<1x128x1xf32>,
    } else {
    }
    %c0_2 = arith.constant 0 : index
    %c0_3 = arith.constant 0 : index
    %7 = vector.load %arg4[%c0_2, %c0_3] : memref<128x256xbf16, #tpu.memory_space<vmem>>, vector<128x256xbf16>
    %8 = vector.extract_strided_slice %7 {offsets = [0, 0], sizes = [128, 128], strides = [1, 1]} : vector<128x256xbf16> to vector<128x128xbf16>
    %c0_4 = arith.constant 0 : index
    %c0_5 = arith.constant 0 : index
    %9 = vector.load %arg6[%c0_4, %c0_5] : memref<2x128xf32, #tpu.memory_space<vmem>>, vector<1x128xf32>
    %10 = arith.extf %8 : vector<128x128xbf16> to vector<128x128xf32>
    %cst_6 = arith.constant dense<0.000000e+00> : vector<1x128xf32>
    %11 = tpu.matmul %9, %10, %cst_6 {dimension_numbers = #tpu.dot_dimension_numbers<[1], [1], [0], [0], [0, 0, 1, 0], [], []>} : vector<1x128xf32>, vector<128x128xf32>, vector<1x128xf32> -> vector<1x128xf32>
    %c0_7 = arith.constant 0 : index
    %c0_8 = arith.constant 0 : index
    %c0_9 = arith.constant 0 : index
    %12 = vector.load %arg9[%c0_7, %c0_8, %c0_9] : memref<2x128x1xf32, #tpu.memory_space<vmem>>, vector<1x128x1xf32>
    %13 = vector.shape_cast %12 : vector<1x128x1xf32> to vector<128x1xf32>
    %14 = vector.broadcast %13 : vector<128x1xf32> to vector<128x128xf32>
    %15 = vector.broadcast %11 : vector<1x128xf32> to vector<128x128xf32>
    %16 = arith.addf %14, %15 : vector<128x128xf32>
    %cst_10 = arith.constant 0.000000e+00 : f32
    %17 = vector.broadcast %cst_10 : f32 to vector<128x128xf32>
    %18 = arith.cmpf ogt, %16, %17 : vector<128x128xf32>
    %cst_11 = arith.constant 2.000000e-01 : f32
    %19 = vector.broadcast %cst_11 : f32 to vector<128x128xf32>
    %20 = arith.mulf %19, %16 : vector<128x128xf32>
    %21 = arith.select %18, %16, %20 : vector<128x128xi1>, vector<128x128xf32>
    %cst_12 = arith.constant 0.000000e+00 : f32
    %22 = vector.broadcast %cst_12 : f32 to vector<128x128xf32>
    %23 = arith.subf %22, %21 : vector<128x128xf32>
    %cst_13 = arith.constant -1.000000e+30 : f32
    %24 = vector.broadcast %cst_13 : f32 to vector<128x128xf32>
    %25 = arith.select %3, %23, %24 : vector<128x128xi1>, vector<128x128xf32>
    %c0_14 = arith.constant 0 : index
    %c0_15 = arith.constant 0 : index
    %c0_16 = arith.constant 0 : index
    %26 = vector.load %arg10[%c0_14, %c0_15, %c0_16] : memref<2x128x1xf32, #tpu.memory_space<vmem>>, vector<1x128x1xf32>
    %27 = vector.shape_cast %26 : vector<1x128x1xf32> to vector<128x1xf32>
    %cst_17 = arith.constant dense<0xFF800000> : vector<128xf32>
    %28 = vector.multi_reduction <maximumf>, %25, %cst_17 [1] : vector<128x128xf32> to vector<128xf32>
    %29 = vector.shape_cast %28 : vector<128xf32> to vector<128x1xf32>
    %30 = arith.maximumf %27, %29 : vector<128x1xf32>
    %31 = arith.subf %27, %30 : vector<128x1xf32>
    %32 = math.exp %31 : vector<128x1xf32>
    %33 = vector.broadcast %30 : vector<128x1xf32> to vector<128x128xf32>
    %34 = arith.subf %25, %33 : vector<128x128xf32>
    %35 = math.exp %34 : vector<128x128xf32>
    %c0_18 = arith.constant 0 : index
    %c0_19 = arith.constant 0 : index
    %c0_20 = arith.constant 0 : index
    %36 = vector.load %arg11[%c0_18, %c0_19, %c0_20] : memref<2x128x1xf32, #tpu.memory_space<vmem>>, vector<1x128x1xf32>
    %37 = vector.shape_cast %36 : vector<1x128x1xf32> to vector<128x1xf32>
    %38 = arith.mulf %32, %37 : vector<128x1xf32>
    %cst_21 = arith.constant dense<0.000000e+00> : vector<128xf32>
    %39 = vector.multi_reduction <add>, %35, %cst_21 [1] : vector<128x128xf32> to vector<128xf32>
    %40 = vector.shape_cast %39 : vector<128xf32> to vector<128x1xf32>
    %41 = arith.addf %38, %40 : vector<128x1xf32>
    %c0_22 = arith.constant 0 : index
    %c0_23 = arith.constant 0 : index
    %c0_24 = arith.constant 0 : index
    %42 = vector.load %arg11[%c0_22, %c0_23, %c0_24] : memref<2x128x1xf32, #tpu.memory_space<vmem>>, vector<1x128x1xf32>
    %43 = vector.shape_cast %42 : vector<1x128x1xf32> to vector<128x1xf32>
    %44 = vector.shape_cast %41 : vector<128x1xf32> to vector<1x128x1xf32>
    tpu.vector_store %arg11[%c0_22, %c0_23, %c0_24], %44 {strides = array<i32>} : memref<2x128x1xf32, #tpu.memory_space<vmem>>, vector<1x128x1xf32>,
    %c0_25 = arith.constant 0 : index
    %c0_26 = arith.constant 0 : index
    %c0_27 = arith.constant 0 : index
    %45 = vector.load %arg12[%c0_25, %c0_26, %c0_27] : memref<2x128x128xf32, #tpu.memory_space<vmem>>, vector<1x128x128xf32>
    %46 = vector.shape_cast %45 : vector<1x128x128xf32> to vector<128x128xf32>
    %47 = vector.broadcast %32 : vector<128x1xf32> to vector<128x128xf32>
    %48 = arith.mulf %47, %46 : vector<128x128xf32>
    %49 = arith.truncf %35 : vector<128x128xf32> to vector<128x128xbf16>
    %cst_28 = arith.constant dense<0.000000e+00> : vector<128x128xf32>
    %50 = tpu.matmul %49, %8, %cst_28 {dimension_numbers = #tpu.dot_dimension_numbers<[1], [0], [0], [1], [0, 0, 1, 1], [], []>} : vector<128x128xbf16>, vector<128x128xbf16>, vector<128x128xf32> -> vector<128x128xf32>
    %51 = arith.addf %48, %50 : vector<128x128xf32>
    %c0_29 = arith.constant 0 : index
    %c0_30 = arith.constant 0 : index
    %c0_31 = arith.constant 0 : index
    %52 = vector.load %arg12[%c0_29, %c0_30, %c0_31] : memref<2x128x128xf32, #tpu.memory_space<vmem>>, vector<1x128x128xf32>
    %53 = vector.shape_cast %52 : vector<1x128x128xf32> to vector<128x128xf32>
    %54 = vector.shape_cast %51 : vector<128x128xf32> to vector<1x128x128xf32>
    tpu.vector_store %arg12[%c0_29, %c0_30, %c0_31], %54 {strides = array<i32>} : memref<2x128x128xf32, #tpu.memory_space<vmem>>, vector<1x128x128xf32>,
    %c0_32 = arith.constant 0 : index
    %c0_33 = arith.constant 0 : index
    %c0_34 = arith.constant 0 : index
    %55 = vector.load %arg10[%c0_32, %c0_33, %c0_34] : memref<2x128x1xf32, #tpu.memory_space<vmem>>, vector<1x128x1xf32>
    %56 = vector.shape_cast %55 : vector<1x128x1xf32> to vector<128x1xf32>
    %57 = vector.shape_cast %30 : vector<128x1xf32> to vector<1x128x1xf32>
    tpu.vector_store %arg10[%c0_32, %c0_33, %c0_34], %57 {strides = array<i32>} : memref<2x128x1xf32, #tpu.memory_space<vmem>>, vector<1x128x1xf32>,
    %58 = vector.extract_strided_slice %7 {offsets = [0, 128], sizes = [128, 128], strides = [1, 1]} : vector<128x256xbf16> to vector<128x128xbf16>
    %c1 = arith.constant 1 : index
    %c0_35 = arith.constant 0 : index
    %59 = vector.load %arg6[%c1, %c0_35] : memref<2x128xf32, #tpu.memory_space<vmem>>, vector<1x128xf32>
    %60 = arith.extf %58 : vector<128x128xbf16> to vector<128x128xf32>
    %cst_36 = arith.constant dense<0.000000e+00> : vector<1x128xf32>
    %61 = tpu.matmul %59, %60, %cst_36 {dimension_numbers = #tpu.dot_dimension_numbers<[1], [1], [0], [0], [0, 0, 1, 0], [], []>} : vector<1x128xf32>, vector<128x128xf32>, vector<1x128xf32> -> vector<1x128xf32>
    %c1_37 = arith.constant 1 : index
    %c0_38 = arith.constant 0 : index
    %c0_39 = arith.constant 0 : index
    %62 = vector.load %arg9[%c1_37, %c0_38, %c0_39] : memref<2x128x1xf32, #tpu.memory_space<vmem>>, vector<1x128x1xf32>
    %63 = vector.shape_cast %62 : vector<1x128x1xf32> to vector<128x1xf32>
    %64 = vector.broadcast %63 : vector<128x1xf32> to vector<128x128xf32>
    %65 = vector.broadcast %61 : vector<1x128xf32> to vector<128x128xf32>
    %66 = arith.addf %64, %65 : vector<128x128xf32>
    %cst_40 = arith.constant 0.000000e+00 : f32
    %67 = vector.broadcast %cst_40 : f32 to vector<128x128xf32>
    %68 = arith.cmpf ogt, %66, %67 : vector<128x128xf32>
    %cst_41 = arith.constant 2.000000e-01 : f32
    %69 = vector.broadcast %cst_41 : f32 to vector<128x128xf32>
    %70 = arith.mulf %69, %66 : vector<128x128xf32>
    %71 = arith.select %68, %66, %70 : vector<128x128xi1>, vector<128x128xf32>
    %cst_42 = arith.constant 0.000000e+00 : f32
    %72 = vector.broadcast %cst_42 : f32 to vector<128x128xf32>
    %73 = arith.subf %72, %71 : vector<128x128xf32>
    %cst_43 = arith.constant -1.000000e+30 : f32
    %74 = vector.broadcast %cst_43 : f32 to vector<128x128xf32>
    %75 = arith.select %3, %73, %74 : vector<128x128xi1>, vector<128x128xf32>
    %c1_44 = arith.constant 1 : index
    %c0_45 = arith.constant 0 : index
    %c0_46 = arith.constant 0 : index
    %76 = vector.load %arg10[%c1_44, %c0_45, %c0_46] : memref<2x128x1xf32, #tpu.memory_space<vmem>>, vector<1x128x1xf32>
    %77 = vector.shape_cast %76 : vector<1x128x1xf32> to vector<128x1xf32>
    %cst_47 = arith.constant dense<0xFF800000> : vector<128xf32>
    %78 = vector.multi_reduction <maximumf>, %75, %cst_47 [1] : vector<128x128xf32> to vector<128xf32>
    %79 = vector.shape_cast %78 : vector<128xf32> to vector<128x1xf32>
    %80 = arith.maximumf %77, %79 : vector<128x1xf32>
    %81 = arith.subf %77, %80 : vector<128x1xf32>
    %82 = math.exp %81 : vector<128x1xf32>
    %83 = vector.broadcast %80 : vector<128x1xf32> to vector<128x128xf32>
    %84 = arith.subf %75, %83 : vector<128x128xf32>
    %85 = math.exp %84 : vector<128x128xf32>
    %c1_48 = arith.constant 1 : index
    %c0_49 = arith.constant 0 : index
    %c0_50 = arith.constant 0 : index
    %86 = vector.load %arg11[%c1_48, %c0_49, %c0_50] : memref<2x128x1xf32, #tpu.memory_space<vmem>>, vector<1x128x1xf32>
    %87 = vector.shape_cast %86 : vector<1x128x1xf32> to vector<128x1xf32>
    %88 = arith.mulf %82, %87 : vector<128x1xf32>
    %cst_51 = arith.constant dense<0.000000e+00> : vector<128xf32>
    %89 = vector.multi_reduction <add>, %85, %cst_51 [1] : vector<128x128xf32> to vector<128xf32>
    %90 = vector.shape_cast %89 : vector<128xf32> to vector<128x1xf32>
    %91 = arith.addf %88, %90 : vector<128x1xf32>
    %c1_52 = arith.constant 1 : index
    %c0_53 = arith.constant 0 : index
    %c0_54 = arith.constant 0 : index
    %92 = vector.load %arg11[%c1_52, %c0_53, %c0_54] : memref<2x128x1xf32, #tpu.memory_space<vmem>>, vector<1x128x1xf32>
    %93 = vector.shape_cast %92 : vector<1x128x1xf32> to vector<128x1xf32>
    %94 = vector.shape_cast %91 : vector<128x1xf32> to vector<1x128x1xf32>
    tpu.vector_store %arg11[%c1_52, %c0_53, %c0_54], %94 {strides = array<i32>} : memref<2x128x1xf32, #tpu.memory_space<vmem>>, vector<1x128x1xf32>,
    %c1_55 = arith.constant 1 : index
    %c0_56 = arith.constant 0 : index
    %c0_57 = arith.constant 0 : index
    %95 = vector.load %arg12[%c1_55, %c0_56, %c0_57] : memref<2x128x128xf32, #tpu.memory_space<vmem>>, vector<1x128x128xf32>
    %96 = vector.shape_cast %95 : vector<1x128x128xf32> to vector<128x128xf32>
    %97 = vector.broadcast %82 : vector<128x1xf32> to vector<128x128xf32>
    %98 = arith.mulf %97, %96 : vector<128x128xf32>
    %99 = arith.truncf %85 : vector<128x128xf32> to vector<128x128xbf16>
    %cst_58 = arith.constant dense<0.000000e+00> : vector<128x128xf32>
    %100 = tpu.matmul %99, %58, %cst_58 {dimension_numbers = #tpu.dot_dimension_numbers<[1], [0], [0], [1], [0, 0, 1, 1], [], []>} : vector<128x128xbf16>, vector<128x128xbf16>, vector<128x128xf32> -> vector<128x128xf32>
    %101 = arith.addf %98, %100 : vector<128x128xf32>
    %c1_59 = arith.constant 1 : index
    %c0_60 = arith.constant 0 : index
    %c0_61 = arith.constant 0 : index
    %102 = vector.load %arg12[%c1_59, %c0_60, %c0_61] : memref<2x128x128xf32, #tpu.memory_space<vmem>>, vector<1x128x128xf32>
    %103 = vector.shape_cast %102 : vector<1x128x128xf32> to vector<128x128xf32>
    %104 = vector.shape_cast %101 : vector<128x128xf32> to vector<1x128x128xf32>
    tpu.vector_store %arg12[%c1_59, %c0_60, %c0_61], %104 {strides = array<i32>} : memref<2x128x128xf32, #tpu.memory_space<vmem>>, vector<1x128x128xf32>,
    %c1_62 = arith.constant 1 : index
    %c0_63 = arith.constant 0 : index
    %c0_64 = arith.constant 0 : index
    %105 = vector.load %arg10[%c1_62, %c0_63, %c0_64] : memref<2x128x1xf32, #tpu.memory_space<vmem>>, vector<1x128x1xf32>
    %106 = vector.shape_cast %105 : vector<1x128x1xf32> to vector<128x1xf32>
    %107 = vector.shape_cast %80 : vector<128x1xf32> to vector<1x128x1xf32>
    tpu.vector_store %arg10[%c1_62, %c0_63, %c0_64], %107 {strides = array<i32>} : memref<2x128x1xf32, #tpu.memory_space<vmem>>, vector<1x128x1xf32>,
    %c0_i32_65 = arith.constant 0 : i32
    %108 = arith.cmpi eq, %arg1, %c0_i32_65 : i32
    %109 = arith.extui %108 : i1 to i32
    %c0_i32_66 = arith.constant 0 : i32
    %110 = arith.cmpi ne, %109, %c0_i32_66 : i32
    scf.if %110 {
      %cst_67 = arith.constant 0.000000e+00 : f32
      %111 = vector.broadcast %cst_67 : f32 to vector<128x128xf32>
      %c0_68 = arith.constant 0 : index
      %c0_69 = arith.constant 0 : index
      %c0_70 = arith.constant 0 : index
      %112 = vector.load %arg12[%c0_68, %c0_69, %c0_70] : memref<2x128x128xf32, #tpu.memory_space<vmem>>, vector<1x128x128xf32>
      %113 = vector.shape_cast %112 : vector<1x128x128xf32> to vector<128x128xf32>
      %c0_71 = arith.constant 0 : index
      %c0_72 = arith.constant 0 : index
      %c0_73 = arith.constant 0 : index
      %114 = vector.load %arg11[%c0_71, %c0_72, %c0_73] : memref<2x128x1xf32, #tpu.memory_space<vmem>>, vector<1x128x1xf32>
      %115 = vector.shape_cast %114 : vector<1x128x1xf32> to vector<128x1xf32>
      %116 = tpu.reciprocal %115 {approx = true} : vector<128x1xf32> -> vector<128x1xf32>
      %117 = vector.broadcast %116 : vector<128x1xf32> to vector<128x128xf32>
      %118 = arith.mulf %113, %117 : vector<128x128xf32>
      %cst_74 = arith.constant 0.000000e+00 : f32
      %119 = vector.broadcast %cst_74 : f32 to vector<128x128xf32>
      %120 = arith.cmpf ogt, %118, %119 : vector<128x128xf32>
      %cst_75 = arith.constant 0.000000e+00 : f32
      %121 = vector.broadcast %cst_75 : f32 to vector<128x128xf32>
      %122 = arith.minimumf %118, %121 : vector<128x128xf32>
      %123 = math.exp %122 : vector<128x128xf32>
      %cst_76 = arith.constant 1.000000e+00 : f32
      %124 = vector.broadcast %cst_76 : f32 to vector<128x128xf32>
      %125 = arith.subf %123, %124 : vector<128x128xf32>
      %126 = arith.select %120, %118, %125 : vector<128x128xi1>, vector<128x128xf32>
      %127 = arith.truncf %126 : vector<128x128xf32> to vector<128x128xbf16>
      %c0_77 = arith.constant 0 : index
      %c0_78 = arith.constant 0 : index
      %c0_79 = arith.constant 0 : index
      %128 = vector.load %arg7[%c0_77, %c0_78, %c0_79] : memref<2x128x128xbf16, #tpu.memory_space<vmem>>, vector<1x128x128xbf16>
      %129 = vector.shape_cast %128 : vector<1x128x128xbf16> to vector<128x128xbf16>
      %cst_80 = arith.constant dense<0.000000e+00> : vector<128x128xf32>
      %130 = tpu.matmul %127, %129, %cst_80 {dimension_numbers = #tpu.dot_dimension_numbers<[1], [0], [0], [1], [0, 0, 1, 1], [], []>} : vector<128x128xbf16>, vector<128x128xbf16>, vector<128x128xf32> -> vector<128x128xf32>
      %131 = arith.addf %111, %130 : vector<128x128xf32>
      %c1_81 = arith.constant 1 : index
      %c0_82 = arith.constant 0 : index
      %c0_83 = arith.constant 0 : index
      %132 = vector.load %arg12[%c1_81, %c0_82, %c0_83] : memref<2x128x128xf32, #tpu.memory_space<vmem>>, vector<1x128x128xf32>
      %133 = vector.shape_cast %132 : vector<1x128x128xf32> to vector<128x128xf32>
      %c1_84 = arith.constant 1 : index
      %c0_85 = arith.constant 0 : index
      %c0_86 = arith.constant 0 : index
      %134 = vector.load %arg11[%c1_84, %c0_85, %c0_86] : memref<2x128x1xf32, #tpu.memory_space<vmem>>, vector<1x128x1xf32>
      %135 = vector.shape_cast %134 : vector<1x128x1xf32> to vector<128x1xf32>
      %136 = tpu.reciprocal %135 {approx = true} : vector<128x1xf32> -> vector<128x1xf32>
      %137 = vector.broadcast %136 : vector<128x1xf32> to vector<128x128xf32>
      %138 = arith.mulf %133, %137 : vector<128x128xf32>
      %cst_87 = arith.constant 0.000000e+00 : f32
      %139 = vector.broadcast %cst_87 : f32 to vector<128x128xf32>
      %140 = arith.cmpf ogt, %138, %139 : vector<128x128xf32>
      %cst_88 = arith.constant 0.000000e+00 : f32
      %141 = vector.broadcast %cst_88 : f32 to vector<128x128xf32>
      %142 = arith.minimumf %138, %141 : vector<128x128xf32>
      %143 = math.exp %142 : vector<128x128xf32>
      %cst_89 = arith.constant 1.000000e+00 : f32
      %144 = vector.broadcast %cst_89 : f32 to vector<128x128xf32>
      %145 = arith.subf %143, %144 : vector<128x128xf32>
      %146 = arith.select %140, %138, %145 : vector<128x128xi1>, vector<128x128xf32>
      %147 = arith.truncf %146 : vector<128x128xf32> to vector<128x128xbf16>
      %c1_90 = arith.constant 1 : index
      %c0_91 = arith.constant 0 : index
      %c0_92 = arith.constant 0 : index
      %148 = vector.load %arg7[%c1_90, %c0_91, %c0_92] : memref<2x128x128xbf16, #tpu.memory_space<vmem>>, vector<1x128x128xbf16>
      %149 = vector.shape_cast %148 : vector<1x128x128xbf16> to vector<128x128xbf16>
      %cst_93 = arith.constant dense<0.000000e+00> : vector<128x128xf32>
      %150 = tpu.matmul %147, %149, %cst_93 {dimension_numbers = #tpu.dot_dimension_numbers<[1], [0], [0], [1], [0, 0, 1, 1], [], []>} : vector<128x128xbf16>, vector<128x128xbf16>, vector<128x128xf32> -> vector<128x128xf32>
      %151 = arith.addf %131, %150 : vector<128x128xf32>
      %152 = arith.truncf %151 : vector<128x128xf32> to vector<128x128xbf16>
      %c0_94 = arith.constant 0 : index
      %c0_95 = arith.constant 0 : index
      %153 = vector.load %arg8[%c0_94, %c0_95] : memref<128x128xbf16, #tpu.memory_space<vmem>>, vector<128x128xbf16>
      tpu.vector_store %arg8[%c0_94, %c0_95], %152 {strides = array<i32>} : memref<128x128xbf16, #tpu.memory_space<vmem>>, vector<128x128xbf16>,
    } else {
    }
    return
  }
  func.func @transform_0(%arg0: i32, %arg1: i32) -> (i32, i32) {
    %c0_i32 = arith.constant 0 : i32
    return %arg0, %arg1 : i32, i32
  }
  func.func @transform_1(%arg0: i32, %arg1: i32) -> (i32, i32) {
    %c0_i32 = arith.constant 0 : i32
    %c0_i32_0 = arith.constant 0 : i32
    return %arg0, %c0_i32 : i32, i32
  }
  func.func @transform_2(%arg0: i32, %arg1: i32) -> (i32, i32) {
    %c0_i32 = arith.constant 0 : i32
    %c0_i32_0 = arith.constant 0 : i32
    return %arg1, %c0_i32 : i32, i32
  }
  func.func @transform_3(%arg0: i32, %arg1: i32) -> (i32, i32) {
    %c0_i32 = arith.constant 0 : i32
    %c0_i32_0 = arith.constant 0 : i32
    %c0_i32_1 = arith.constant 0 : i32
    return %c0_i32, %c0_i32_0 : i32, i32
  }
  func.func @transform_4(%arg0: i32, %arg1: i32) -> (i32, i32) {
    %c0_i32 = arith.constant 0 : i32
    %c0_i32_0 = arith.constant 0 : i32
    %c0_i32_1 = arith.constant 0 : i32
    return %c0_i32, %c0_i32_0 : i32, i32
  }
  func.func @transform_5(%arg0: i32, %arg1: i32) -> (i32, i32, i32) {
    %c0_i32 = arith.constant 0 : i32
    %c0_i32_0 = arith.constant 0 : i32
    %c0_i32_1 = arith.constant 0 : i32
    %c0_i32_2 = arith.constant 0 : i32
    return %c0_i32, %c0_i32_0, %c0_i32_1 : i32, i32, i32
  }
  func.func @transform_6(%arg0: i32, %arg1: i32) -> (i32, i32) {
    %c0_i32 = arith.constant 0 : i32
    %c0_i32_0 = arith.constant 0 : i32
    return %arg0, %c0_i32 : i32, i32
  }
}

module attributes {stable_mosaic.version = 11 : i64} {
  func.func @_attn2_kernel(%arg0: i32, %arg1: i32, %arg2: memref<128x128xi8, #tpu.memory_space<vmem>>, %arg3: memref<128x128xbf16, #tpu.memory_space<vmem>>, %arg4: memref<128x128xbf16, #tpu.memory_space<vmem>>, %arg5: memref<1x128xf32, #tpu.memory_space<vmem>>, %arg6: memref<1x128xf32, #tpu.memory_space<vmem>>, %arg7: memref<128x128xf32, #tpu.memory_space<vmem>>, %arg8: memref<128x1xf32, #tpu.memory_space<vmem>>, %arg9: memref<128x1xf32, #tpu.memory_space<vmem>>, %arg10: memref<128x1xf32, #tpu.memory_space<vmem>>, %arg11: memref<128x128xf32, #tpu.memory_space<vmem>>) attributes {dimension_semantics = [#tpu.dimension_semantics<parallel>, #tpu.dimension_semantics<arbitrary>], iteration_bounds = array<i64: 1, 1>, scalar_prefetch = 0 : i64, scratch_operands = 4 : i64, tpu.core_type = #tpu.core_type<tc>, window_params = [{transform_indices = @transform_0, window_bounds = array<i64: 128, 128>}, {transform_indices = @transform_1, window_bounds = array<i64: 128, 128>}, {transform_indices = @transform_2, window_bounds = array<i64: 128, 128>}, {pipeline_mode = #tpu.pipeline_mode<synchronous>, transform_indices = @transform_3, window_bounds = array<i64: 1, 128>}, {pipeline_mode = #tpu.pipeline_mode<synchronous>, transform_indices = @transform_4, window_bounds = array<i64: 1, 128>}, {transform_indices = @transform_5, window_bounds = array<i64: 128, 128>}]} {
    %c0 = arith.constant 0 : index
    %c0_0 = arith.constant 0 : index
    %0 = vector.load %arg2[%c0, %c0_0] : memref<128x128xi8, #tpu.memory_space<vmem>>, vector<128x128xi8>
    %1 = arith.sitofp %0 : vector<128x128xi8> to vector<128x128xf32>
    %cst = arith.constant 0.000000e+00 : f32
    %2 = vector.broadcast %cst : f32 to vector<128x128xf32>
    %3 = arith.cmpf ogt, %1, %2 : vector<128x128xf32>
    %c0_i32 = arith.constant 0 : i32
    %4 = arith.cmpi eq, %arg1, %c0_i32 : i32
    %5 = arith.extui %4 : i1 to i32
    %c0_i32_1 = arith.constant 0 : i32
    %6 = arith.cmpi ne, %5, %c0_i32_1 : i32
    scf.if %6 {
      %cst_30 = arith.constant -1.000000e+30 : f32
      %50 = vector.broadcast %cst_30 : f32 to vector<128x1xf32>
      %c0_31 = arith.constant 0 : index
      %c0_32 = arith.constant 0 : index
      %51 = vector.load %arg9[%c0_31, %c0_32] : memref<128x1xf32, #tpu.memory_space<vmem>>, vector<128x1xf32>
      tpu.vector_store %arg9[%c0_31, %c0_32], %50 {strides = array<i32>} : memref<128x1xf32, #tpu.memory_space<vmem>>, vector<128x1xf32>,
      %cst_33 = arith.constant 0.000000e+00 : f32
      %52 = vector.broadcast %cst_33 : f32 to vector<128x1xf32>
      %c0_34 = arith.constant 0 : index
      %c0_35 = arith.constant 0 : index
      %53 = vector.load %arg10[%c0_34, %c0_35] : memref<128x1xf32, #tpu.memory_space<vmem>>, vector<128x1xf32>
      tpu.vector_store %arg10[%c0_34, %c0_35], %52 {strides = array<i32>} : memref<128x1xf32, #tpu.memory_space<vmem>>, vector<128x1xf32>,
      %cst_36 = arith.constant 0.000000e+00 : f32
      %54 = vector.broadcast %cst_36 : f32 to vector<128x128xf32>
      %c0_37 = arith.constant 0 : index
      %c0_38 = arith.constant 0 : index
      %55 = vector.load %arg11[%c0_37, %c0_38] : memref<128x128xf32, #tpu.memory_space<vmem>>, vector<128x128xf32>
      tpu.vector_store %arg11[%c0_37, %c0_38], %54 {strides = array<i32>} : memref<128x128xf32, #tpu.memory_space<vmem>>, vector<128x128xf32>,
      %c0_39 = arith.constant 0 : index
      %c0_40 = arith.constant 0 : index
      %56 = vector.load %arg3[%c0_39, %c0_40] : memref<128x128xbf16, #tpu.memory_space<vmem>>, vector<128x128xbf16>
      %57 = arith.extf %56 : vector<128x128xbf16> to vector<128x128xf32>
      %c0_41 = arith.constant 0 : index
      %c0_42 = arith.constant 0 : index
      %58 = vector.load %arg5[%c0_41, %c0_42] : memref<1x128xf32, #tpu.memory_space<vmem>>, vector<1x128xf32>
      %cst_43 = arith.constant dense<0.000000e+00> : vector<128x1xf32>
      %59 = tpu.matmul %57, %58, %cst_43 {dimension_numbers = #tpu.dot_dimension_numbers<[1], [1], [0], [0], [0, 0, 1, 0], [], []>} : vector<128x128xf32>, vector<1x128xf32>, vector<128x1xf32> -> vector<128x1xf32>
      %c0_44 = arith.constant 0 : index
      %c0_45 = arith.constant 0 : index
      %60 = vector.load %arg8[%c0_44, %c0_45] : memref<128x1xf32, #tpu.memory_space<vmem>>, vector<128x1xf32>
      tpu.vector_store %arg8[%c0_44, %c0_45], %59 {strides = array<i32>} : memref<128x1xf32, #tpu.memory_space<vmem>>, vector<128x1xf32>,
    } else {
    }
    %c0_2 = arith.constant 0 : index
    %c0_3 = arith.constant 0 : index
    %7 = vector.load %arg4[%c0_2, %c0_3] : memref<128x128xbf16, #tpu.memory_space<vmem>>, vector<128x128xbf16>
    %c0_4 = arith.constant 0 : index
    %c0_5 = arith.constant 0 : index
    %8 = vector.load %arg6[%c0_4, %c0_5] : memref<1x128xf32, #tpu.memory_space<vmem>>, vector<1x128xf32>
    %9 = arith.extf %7 : vector<128x128xbf16> to vector<128x128xf32>
    %cst_6 = arith.constant dense<0.000000e+00> : vector<1x128xf32>
    %10 = tpu.matmul %8, %9, %cst_6 {dimension_numbers = #tpu.dot_dimension_numbers<[1], [1], [0], [0], [0, 0, 1, 0], [], []>} : vector<1x128xf32>, vector<128x128xf32>, vector<1x128xf32> -> vector<1x128xf32>
    %c0_7 = arith.constant 0 : index
    %c0_8 = arith.constant 0 : index
    %11 = vector.load %arg8[%c0_7, %c0_8] : memref<128x1xf32, #tpu.memory_space<vmem>>, vector<128x1xf32>
    %12 = vector.broadcast %11 : vector<128x1xf32> to vector<128x128xf32>
    %13 = vector.broadcast %10 : vector<1x128xf32> to vector<128x128xf32>
    %14 = arith.addf %12, %13 : vector<128x128xf32>
    %cst_9 = arith.constant 0.000000e+00 : f32
    %15 = vector.broadcast %cst_9 : f32 to vector<128x128xf32>
    %16 = arith.cmpf ogt, %14, %15 : vector<128x128xf32>
    %cst_10 = arith.constant 2.000000e-01 : f32
    %17 = vector.broadcast %cst_10 : f32 to vector<128x128xf32>
    %18 = arith.mulf %17, %14 : vector<128x128xf32>
    %19 = arith.select %16, %14, %18 : vector<128x128xi1>, vector<128x128xf32>
    %cst_11 = arith.constant 0.000000e+00 : f32
    %20 = vector.broadcast %cst_11 : f32 to vector<128x128xf32>
    %21 = arith.subf %20, %19 : vector<128x128xf32>
    %cst_12 = arith.constant -1.000000e+30 : f32
    %22 = vector.broadcast %cst_12 : f32 to vector<128x128xf32>
    %23 = arith.select %3, %21, %22 : vector<128x128xi1>, vector<128x128xf32>
    %c0_13 = arith.constant 0 : index
    %c0_14 = arith.constant 0 : index
    %24 = vector.load %arg9[%c0_13, %c0_14] : memref<128x1xf32, #tpu.memory_space<vmem>>, vector<128x1xf32>
    %cst_15 = arith.constant dense<0xFF800000> : vector<128xf32>
    %25 = vector.multi_reduction <maximumf>, %23, %cst_15 [1] : vector<128x128xf32> to vector<128xf32>
    %26 = vector.shape_cast %25 : vector<128xf32> to vector<128x1xf32>
    %27 = arith.maximumf %24, %26 : vector<128x1xf32>
    %28 = arith.subf %24, %27 : vector<128x1xf32>
    %29 = math.exp %28 : vector<128x1xf32>
    %30 = vector.broadcast %27 : vector<128x1xf32> to vector<128x128xf32>
    %31 = arith.subf %23, %30 : vector<128x128xf32>
    %32 = math.exp %31 : vector<128x128xf32>
    %c0_16 = arith.constant 0 : index
    %c0_17 = arith.constant 0 : index
    %33 = vector.load %arg10[%c0_16, %c0_17] : memref<128x1xf32, #tpu.memory_space<vmem>>, vector<128x1xf32>
    %34 = arith.mulf %29, %33 : vector<128x1xf32>
    %cst_18 = arith.constant dense<0.000000e+00> : vector<128xf32>
    %35 = vector.multi_reduction <add>, %32, %cst_18 [1] : vector<128x128xf32> to vector<128xf32>
    %36 = vector.shape_cast %35 : vector<128xf32> to vector<128x1xf32>
    %37 = arith.addf %34, %36 : vector<128x1xf32>
    %c0_19 = arith.constant 0 : index
    %c0_20 = arith.constant 0 : index
    %38 = vector.load %arg10[%c0_19, %c0_20] : memref<128x1xf32, #tpu.memory_space<vmem>>, vector<128x1xf32>
    tpu.vector_store %arg10[%c0_19, %c0_20], %37 {strides = array<i32>} : memref<128x1xf32, #tpu.memory_space<vmem>>, vector<128x1xf32>,
    %c0_21 = arith.constant 0 : index
    %c0_22 = arith.constant 0 : index
    %39 = vector.load %arg11[%c0_21, %c0_22] : memref<128x128xf32, #tpu.memory_space<vmem>>, vector<128x128xf32>
    %40 = vector.broadcast %29 : vector<128x1xf32> to vector<128x128xf32>
    %41 = arith.mulf %40, %39 : vector<128x128xf32>
    %42 = arith.truncf %32 : vector<128x128xf32> to vector<128x128xbf16>
    %cst_23 = arith.constant dense<0.000000e+00> : vector<128x128xf32>
    %43 = tpu.matmul %42, %7, %cst_23 {dimension_numbers = #tpu.dot_dimension_numbers<[1], [0], [0], [1], [0, 0, 1, 1], [], []>} : vector<128x128xbf16>, vector<128x128xbf16>, vector<128x128xf32> -> vector<128x128xf32>
    %44 = arith.addf %41, %43 : vector<128x128xf32>
    %c0_24 = arith.constant 0 : index
    %c0_25 = arith.constant 0 : index
    %45 = vector.load %arg11[%c0_24, %c0_25] : memref<128x128xf32, #tpu.memory_space<vmem>>, vector<128x128xf32>
    tpu.vector_store %arg11[%c0_24, %c0_25], %44 {strides = array<i32>} : memref<128x128xf32, #tpu.memory_space<vmem>>, vector<128x128xf32>,
    %c0_26 = arith.constant 0 : index
    %c0_27 = arith.constant 0 : index
    %46 = vector.load %arg9[%c0_26, %c0_27] : memref<128x1xf32, #tpu.memory_space<vmem>>, vector<128x1xf32>
    tpu.vector_store %arg9[%c0_26, %c0_27], %27 {strides = array<i32>} : memref<128x1xf32, #tpu.memory_space<vmem>>, vector<128x1xf32>,
    %c0_i32_28 = arith.constant 0 : i32
    %47 = arith.cmpi eq, %arg1, %c0_i32_28 : i32
    %48 = arith.extui %47 : i1 to i32
    %c0_i32_29 = arith.constant 0 : i32
    %49 = arith.cmpi ne, %48, %c0_i32_29 : i32
    scf.if %49 {
      %c0_30 = arith.constant 0 : index
      %c0_31 = arith.constant 0 : index
      %50 = vector.load %arg11[%c0_30, %c0_31] : memref<128x128xf32, #tpu.memory_space<vmem>>, vector<128x128xf32>
      %c0_32 = arith.constant 0 : index
      %c0_33 = arith.constant 0 : index
      %51 = vector.load %arg10[%c0_32, %c0_33] : memref<128x1xf32, #tpu.memory_space<vmem>>, vector<128x1xf32>
      %52 = tpu.reciprocal %51 {approx = true} : vector<128x1xf32> -> vector<128x1xf32>
      %53 = vector.broadcast %52 : vector<128x1xf32> to vector<128x128xf32>
      %54 = arith.mulf %50, %53 : vector<128x128xf32>
      %cst_34 = arith.constant 0.000000e+00 : f32
      %55 = vector.broadcast %cst_34 : f32 to vector<128x128xf32>
      %56 = arith.cmpf ogt, %54, %55 : vector<128x128xf32>
      %cst_35 = arith.constant 0.000000e+00 : f32
      %57 = vector.broadcast %cst_35 : f32 to vector<128x128xf32>
      %58 = arith.minimumf %54, %57 : vector<128x128xf32>
      %59 = math.exp %58 : vector<128x128xf32>
      %cst_36 = arith.constant 1.000000e+00 : f32
      %60 = vector.broadcast %cst_36 : f32 to vector<128x128xf32>
      %61 = arith.subf %59, %60 : vector<128x128xf32>
      %62 = arith.select %56, %54, %61 : vector<128x128xi1>, vector<128x128xf32>
      %63 = tpu.iota {dimensions = array<i32: 1>} : vector<128x128xi32>
      %c8_i32 = arith.constant 8 : i32
      %64 = vector.broadcast %c8_i32 : i32 to vector<128x128xi32>
      %65 = arith.cmpi slt, %63, %64 : vector<128x128xi32>
      %cst_37 = arith.constant -1.000000e+30 : f32
      %66 = vector.broadcast %cst_37 : f32 to vector<128x128xf32>
      %67 = arith.select %65, %62, %66 : vector<128x128xi1>, vector<128x128xf32>
      %cst_38 = arith.constant dense<0xFF800000> : vector<128xf32>
      %68 = vector.multi_reduction <maximumf>, %67, %cst_38 [1] : vector<128x128xf32> to vector<128xf32>
      %69 = vector.shape_cast %68 : vector<128xf32> to vector<128x1xf32>
      %70 = vector.broadcast %69 : vector<128x1xf32> to vector<128x128xf32>
      %71 = arith.subf %67, %70 : vector<128x128xf32>
      %72 = math.exp %71 : vector<128x128xf32>
      %cst_39 = arith.constant 0.000000e+00 : f32
      %73 = vector.broadcast %cst_39 : f32 to vector<128x128xf32>
      %74 = arith.select %65, %72, %73 : vector<128x128xi1>, vector<128x128xf32>
      %cst_40 = arith.constant dense<0.000000e+00> : vector<128xf32>
      %75 = vector.multi_reduction <add>, %74, %cst_40 [1] : vector<128x128xf32> to vector<128xf32>
      %76 = vector.shape_cast %75 : vector<128xf32> to vector<128x1xf32>
      %77 = math.log %76 : vector<128x1xf32>
      %78 = vector.broadcast %69 : vector<128x1xf32> to vector<128x128xf32>
      %79 = arith.subf %67, %78 : vector<128x128xf32>
      %80 = vector.broadcast %77 : vector<128x1xf32> to vector<128x128xf32>
      %81 = arith.subf %79, %80 : vector<128x128xf32>
      %c0_41 = arith.constant 0 : index
      %c0_42 = arith.constant 0 : index
      %82 = vector.load %arg7[%c0_41, %c0_42] : memref<128x128xf32, #tpu.memory_space<vmem>>, vector<128x128xf32>
      tpu.vector_store %arg7[%c0_41, %c0_42], %81 {strides = array<i32>} : memref<128x128xf32, #tpu.memory_space<vmem>>, vector<128x128xf32>,
    } else {
    }
    return
  }
  func.func @transform_0(%arg0: i32, %arg1: i32) -> (i32, i32) {
    %c0_i32 = arith.constant 0 : i32
    return %arg0, %arg1 : i32, i32
  }
  func.func @transform_1(%arg0: i32, %arg1: i32) -> (i32, i32) {
    %c0_i32 = arith.constant 0 : i32
    %c0_i32_0 = arith.constant 0 : i32
    return %arg0, %c0_i32 : i32, i32
  }
  func.func @transform_2(%arg0: i32, %arg1: i32) -> (i32, i32) {
    %c0_i32 = arith.constant 0 : i32
    %c0_i32_0 = arith.constant 0 : i32
    return %arg1, %c0_i32 : i32, i32
  }
  func.func @transform_3(%arg0: i32, %arg1: i32) -> (i32, i32) {
    %c0_i32 = arith.constant 0 : i32
    %c0_i32_0 = arith.constant 0 : i32
    %c0_i32_1 = arith.constant 0 : i32
    return %c0_i32, %c0_i32_0 : i32, i32
  }
  func.func @transform_4(%arg0: i32, %arg1: i32) -> (i32, i32) {
    %c0_i32 = arith.constant 0 : i32
    %c0_i32_0 = arith.constant 0 : i32
    %c0_i32_1 = arith.constant 0 : i32
    return %c0_i32, %c0_i32_0 : i32, i32
  }
  func.func @transform_5(%arg0: i32, %arg1: i32) -> (i32, i32) {
    %c0_i32 = arith.constant 0 : i32
    %c0_i32_0 = arith.constant 0 : i32
    return %arg0, %c0_i32 : i32, i32
  }
}

</mosaic_0001>

<llo_original>
// kernel: spgat_forward.3
$region0: #{spgat_forward.3}
  #allocation0 [shape = 'u32[]', space=smem, size = 0x4, offset = 0x4, fixed_abs, tag = 'smem constant byte address 0x4 - core index']
  #allocation1 [shape = 'u32[72,128]{1,0:T(1,128)}', space=vmem, size = 0x9000, scoped, tag = 'internal scratch']
  %s0 = inlined_call_operand.vmem [shape: f32[128,128], index: 0, kind: input, shape index: {}]
  %s1 = inlined_call_operand.vmem [shape: bf16[128,256], index: 1, kind: input, shape index: {}]
  %s2 = inlined_call_operand.vmem [shape: bf16[128,256], index: 2, kind: output, shape index: {}]
  %s3 = sld [smem:[#allocation0]]
  $region18: #{spgat_forward.3} parent=0
    _
  %s5 = ssub.s32 1, %s3
  %s6 = scalar_select 0, %s5, %s3
  // Predicated region
  $region2: #{spgat_forward.3} parent=0 // pred_check
    _
  $region3: #{spgat_forward.3} parent=0 // pred_check_branch
    %8 = sbr.rel (0) target = $region5
  $region4: #{spgat_forward.3} parent=0 // pred_region
    _
  $region5: #{spgat_forward.3} parent=0 // pred_fallthru
    _
  // Predicated region
  $region6: #{spgat_forward.3} parent=0 // pred_check
    _
  $region7: #{spgat_forward.3} parent=0 // pred_check_branch
    %10 = sbr.rel (0) target = $region9
  $region8: #{spgat_forward.3} parent=0 // pred_region
    _
  $region9: #{spgat_forward.3} parent=0 // pred_fallthru
    _
  %v11 = vld [vmem:[%s0] sm:$0xff]
  %v12 = vld [vmem:[%s0 + $0x8] sm:$0xff]
  %v13 = vld [vmem:[%s0 + $0x10] sm:$0xff]
  %v14 = vld [vmem:[%s0 + $0x18] sm:$0xff]
  %v15 = vld [vmem:[%s0 + $0x20] sm:$0xff]
  %v16 = vld [vmem:[%s0 + $0x28] sm:$0xff]
  %v17 = vld [vmem:[%s0 + $0x30] sm:$0xff]
  %v18 = vld [vmem:[%s0 + $0x38] sm:$0xff]
  %v19 = vld [vmem:[%s0 + $0x40] sm:$0xff]
  %v20 = vld [vmem:[%s0 + $0x48] sm:$0xff]
  %v21 = vld [vmem:[%s0 + $0x50] sm:$0xff]
  %v22 = vld [vmem:[%s0 + $0x58] sm:$0xff]
  %v23 = vld [vmem:[%s0 + $0x60] sm:$0xff]
  %v24 = vld [vmem:[%s0 + $0x68] sm:$0xff]
  %v25 = vld [vmem:[%s0 + $0x70] sm:$0xff]
  %v26 = vld [vmem:[%s0 + $0x78] sm:$0xff]
  %v27 = vpack.c.bf16 %v12, %v11
  %v28 = vpack.c.bf16 %v14, %v13
  %v29 = vpack.c.bf16 %v16, %v15
  %v30 = vpack.c.bf16 %v18, %v17
  %v31 = vpack.c.bf16 %v20, %v19
  %v32 = vpack.c.bf16 %v22, %v21
  %v33 = vpack.c.bf16 %v24, %v23
  %v34 = vpack.c.bf16 %v26, %v25
  %v35 = vld [vmem:[%s1] sm:$0xff]
  %v36 = vld [vmem:[%s1 + $0x8] sm:$0xff]
  %v37 = vld [vmem:[%s1 + $0x10] sm:$0xff]
  %v38 = vld [vmem:[%s1 + $0x18] sm:$0xff]
  %v39 = vld [vmem:[%s1 + $0x20] sm:$0xff]
  %v40 = vld [vmem:[%s1 + $0x28] sm:$0xff]
  %v41 = vld [vmem:[%s1 + $0x30] sm:$0xff]
  %v42 = vld [vmem:[%s1 + $0x38] sm:$0xff]
  %v43 = vld [vmem:[%s1 + $0x40] sm:$0xff]
  %v44 = vld [vmem:[%s1 + $0x48] sm:$0xff]
  %v45 = vld [vmem:[%s1 + $0x50] sm:$0xff]
  %v46 = vld [vmem:[%s1 + $0x58] sm:$0xff]
  %v47 = vld [vmem:[%s1 + $0x60] sm:$0xff]
  %v48 = vld [vmem:[%s1 + $0x68] sm:$0xff]
  %v49 = vld [vmem:[%s1 + $0x70] sm:$0xff]
  %v50 = vld [vmem:[%s1 + $0x78] sm:$0xff]
  %v67 = vunpack.c.l.b16 %v35
  %v68 = vunpack.c.h.b16 %v35
  %v69 = vunpack.c.l.b16 %v36
  %v70 = vunpack.c.h.b16 %v36
  %v71 = vunpack.c.l.b16 %v37
  %v72 = vunpack.c.h.b16 %v37
  %v73 = vunpack.c.l.b16 %v38
  %v74 = vunpack.c.h.b16 %v38
  %v75 = vunpack.c.l.b16 %v39
  %v76 = vunpack.c.h.b16 %v39
  %v77 = vunpack.c.l.b16 %v40
  %v78 = vunpack.c.h.b16 %v40
  %v79 = vunpack.c.l.b16 %v41
  %v80 = vunpack.c.h.b16 %v41
  %v81 = vunpack.c.l.b16 %v42
  %v82 = vunpack.c.h.b16 %v42
  %v83 = vunpack.c.l.b16 %v43
  %v84 = vunpack.c.h.b16 %v43
  %v85 = vunpack.c.l.b16 %v44
  %v86 = vunpack.c.h.b16 %v44
  %v87 = vunpack.c.l.b16 %v45
  %v88 = vunpack.c.h.b16 %v45
  %v89 = vunpack.c.l.b16 %v46
  %v90 = vunpack.c.h.b16 %v46
  %v91 = vunpack.c.l.b16 %v47
  %v92 = vunpack.c.h.b16 %v47
  %v93 = vunpack.c.l.b16 %v48
  %v94 = vunpack.c.h.b16 %v48
  %v95 = vunpack.c.l.b16 %v49
  %v96 = vunpack.c.h.b16 %v49
  %v97 = vunpack.c.l.b16 %v50
  %v98 = vunpack.c.h.b16 %v50
  %v99 = vpack.c.b16 %v69, %v67
  %v100 = vpack.c.b16 %v70, %v68
  %v101 = vpack.c.b16 %v73, %v71
  %v102 = vpack.c.b16 %v74, %v72
  %v103 = vpack.c.b16 %v77, %v75
  %v104 = vpack.c.b16 %v78, %v76
  %v105 = vpack.c.b16 %v81, %v79
  %v106 = vpack.c.b16 %v82, %v80
  %v107 = vpack.c.b16 %v85, %v83
  %v108 = vpack.c.b16 %v86, %v84
  %v109 = vpack.c.b16 %v89, %v87
  %v110 = vpack.c.b16 %v90, %v88
  %v111 = vpack.c.b16 %v93, %v91
  %v112 = vpack.c.b16 %v94, %v92
  %v113 = vpack.c.b16 %v97, %v95
  %v114 = vpack.c.b16 %v98, %v96
  %131 = vmatpush.bf16.msra.mxu0 %v113
  %132 = vmatpush.bf16.msra.mxu0 %v111
  %133 = vmatpush.bf16.msra.mxu0 %v109
  %134 = vmatpush.bf16.msra.mxu0 %v107
  %135 = vmatpush.bf16.msra.mxu0 %v105
  %136 = vmatpush.bf16.msra.mxu0 %v103
  %137 = vmatpush.bf16.msra.mxu0 %v101
  %138 = vmatpush.bf16.msra.mxu0 %v99
  %139 = vmatmul.bf16.gmra.mxu0 %v27
  %v140 = vpop.f32.mrf.mxu0
  %v141 = vadd.f32 0.0, %v140
  %v142 = vpop.f32.mrf.mxu0
  %v143 = vadd.f32 0.0, %v142
  %144 = vmatmul.bf16.gmra.mxu0 %v28
  %v145 = vpop.f32.mrf.mxu0
  %v146 = vadd.f32 0.0, %v145
  %v147 = vpop.f32.mrf.mxu0
  %v148 = vadd.f32 0.0, %v147
  %149 = vmatmul.bf16.gmra.mxu0 %v29
  %v150 = vpop.f32.mrf.mxu0
  %v151 = vadd.f32 0.0, %v150
  %v152 = vpop.f32.mrf.mxu0
  %v153 = vadd.f32 0.0, %v152
  %154 = vmatmul.bf16.gmra.mxu0 %v30
  %v155 = vpop.f32.mrf.mxu0
  %v156 = vadd.f32 0.0, %v155
  %v157 = vpop.f32.mrf.mxu0
  %v158 = vadd.f32 0.0, %v157
  %159 = vmatmul.bf16.gmra.mxu0 %v31
  %v160 = vpop.f32.mrf.mxu0
  %v161 = vadd.f32 0.0, %v160
  %v162 = vpop.f32.mrf.mxu0
  %v163 = vadd.f32 0.0, %v162
  %164 = vmatmul.bf16.gmra.mxu0 %v32
  %v165 = vpop.f32.mrf.mxu0
  %v166 = vadd.f32 0.0, %v165
  %v167 = vpop.f32.mrf.mxu0
  %v168 = vadd.f32 0.0, %v167
  %169 = vmatmul.bf16.gmra.mxu0 %v33
  %v170 = vpop.f32.mrf.mxu0
  %v171 = vadd.f32 0.0, %v170
  %v172 = vpop.f32.mrf.mxu0
  %v173 = vadd.f32 0.0, %v172
  %174 = vmatmul.bf16.gmra.mxu0 %v34
  %v175 = vpop.f32.mrf.mxu0
  %v176 = vadd.f32 0.0, %v175
  %v177 = vpop.f32.mrf.mxu0
  %v178 = vadd.f32 0.0, %v177
  %179 = vdwg.mxu0
  %180 = vmatpush.bf16.msra.mxu0 %v114
  %181 = vmatpush.bf16.msra.mxu0 %v112
  %182 = vmatpush.bf16.msra.mxu0 %v110
  %183 = vmatpush.bf16.msra.mxu0 %v108
  %184 = vmatpush.bf16.msra.mxu0 %v106
  %185 = vmatpush.bf16.msra.mxu0 %v104
  %186 = vmatpush.bf16.msra.mxu0 %v102
  %187 = vmatpush.bf16.msra.mxu0 %v100
  %188 = vmatmul.bf16.gmra.mxu0 %v27
  %v189 = vpop.f32.mrf.mxu0
  %v190 = vadd.f32 0.0, %v189
  %v191 = vpop.f32.mrf.mxu0
  %v192 = vadd.f32 0.0, %v191
  %193 = vmatmul.bf16.gmra.mxu0 %v28
  %v194 = vpop.f32.mrf.mxu0
  %v195 = vadd.f32 0.0, %v194
  %v196 = vpop.f32.mrf.mxu0
  %v197 = vadd.f32 0.0, %v196
  %198 = vmatmul.bf16.gmra.mxu0 %v29
  %v199 = vpop.f32.mrf.mxu0
  %v200 = vadd.f32 0.0, %v199
  %v201 = vpop.f32.mrf.mxu0
  %v202 = vadd.f32 0.0, %v201
  %203 = vmatmul.bf16.gmra.mxu0 %v30
  %v204 = vpop.f32.mrf.mxu0
  %v205 = vadd.f32 0.0, %v204
  %v206 = vpop.f32.mrf.mxu0
  %v207 = vadd.f32 0.0, %v206
  %208 = vmatmul.bf16.gmra.mxu0 %v31
  %v209 = vpop.f32.mrf.mxu0
  %v210 = vadd.f32 0.0, %v209
  %v211 = vpop.f32.mrf.mxu0
  %v212 = vadd.f32 0.0, %v211
  %213 = vmatmul.bf16.gmra.mxu0 %v32
  %v214 = vpop.f32.mrf.mxu0
  %v215 = vadd.f32 0.0, %v214
  %v216 = vpop.f32.mrf.mxu0
  %v217 = vadd.f32 0.0, %v216
  %218 = vmatmul.bf16.gmra.mxu0 %v33
  %v219 = vpop.f32.mrf.mxu0
  %v220 = vadd.f32 0.0, %v219
  %v221 = vpop.f32.mrf.mxu0
  %v222 = vadd.f32 0.0, %v221
  %223 = vmatmul.bf16.gmra.mxu0 %v34
  %v224 = vpop.f32.mrf.mxu0
  %v225 = vadd.f32 0.0, %v224
  %v226 = vpop.f32.mrf.mxu0
  %v227 = vadd.f32 0.0, %v226
  %228 = vdwg.mxu0
  %v229 = vpack.c.bf16 %v190, %v141
  %v230 = vpack.c.bf16 %v192, %v143
  %v231 = vpack.c.bf16 %v195, %v146
  %v232 = vpack.c.bf16 %v197, %v148
  %v233 = vpack.c.bf16 %v200, %v151
  %v234 = vpack.c.bf16 %v202, %v153
  %v235 = vpack.c.bf16 %v205, %v156
  %v236 = vpack.c.bf16 %v207, %v158
  %v237 = vpack.c.bf16 %v210, %v161
  %v238 = vpack.c.bf16 %v212, %v163
  %v239 = vpack.c.bf16 %v215, %v166
  %v240 = vpack.c.bf16 %v217, %v168
  %v241 = vpack.c.bf16 %v220, %v171
  %v242 = vpack.c.bf16 %v222, %v173
  %v243 = vpack.c.bf16 %v225, %v176
  %v244 = vpack.c.bf16 %v227, %v178
  %245 = vst [vmem:[%s2] sm:$0xff] %v229
  %246 = vst [vmem:[%s2 + $0x8] sm:$0xff] %v230
  %247 = vst [vmem:[%s2 + $0x10] sm:$0xff] %v231
  %248 = vst [vmem:[%s2 + $0x18] sm:$0xff] %v232
  %249 = vst [vmem:[%s2 + $0x20] sm:$0xff] %v233
  %250 = vst [vmem:[%s2 + $0x28] sm:$0xff] %v234
  %251 = vst [vmem:[%s2 + $0x30] sm:$0xff] %v235
  %252 = vst [vmem:[%s2 + $0x38] sm:$0xff] %v236
  %253 = vst [vmem:[%s2 + $0x40] sm:$0xff] %v237
  %254 = vst [vmem:[%s2 + $0x48] sm:$0xff] %v238
  %255 = vst [vmem:[%s2 + $0x50] sm:$0xff] %v239
  %256 = vst [vmem:[%s2 + $0x58] sm:$0xff] %v240
  %257 = vst [vmem:[%s2 + $0x60] sm:$0xff] %v241
  %258 = vst [vmem:[%s2 + $0x68] sm:$0xff] %v242
  %259 = vst [vmem:[%s2 + $0x70] sm:$0xff] %v243
  %260 = vst [vmem:[%s2 + $0x78] sm:$0xff] %v244
  // Predicated region
  $region10: #{spgat_forward.3} parent=0 // pred_check
    _
  $region11: #{spgat_forward.3} parent=0 // pred_check_branch
    %262 = sbr.rel (0) target = $region13
  $region12: #{spgat_forward.3} parent=0 // pred_region
    _
  $region13: #{spgat_forward.3} parent=0 // pred_fallthru
    _
  // Predicated region
  $region14: #{spgat_forward.3} parent=0 // pred_check
    _
  $region15: #{spgat_forward.3} parent=0 // pred_check_branch
    %264 = sbr.rel (0) target = $region17
  $region16: #{spgat_forward.3} parent=0 // pred_region
    _
  $region17: #{spgat_forward.3} parent=0 // pred_fallthru
    _

// kernel: spgat_forward.5
$region0: #{spgat_forward.5}
  #allocation0 [shape = 'u32[]', space=smem, size = 0x4, offset = 0x4, fixed_abs, tag = 'smem constant byte address 0x4 - core index']
  #allocation1 [shape = 'u32[72,128]{1,0:T(1,128)}', space=vmem, size = 0x9000, scoped, tag = 'internal scratch']
  #allocation2 [shape = 'f32[128,1]{1,0:T(8,128)}', space=vmem, size = 0x10000, scoped, tag = 'scratch operand']
  #allocation3 [shape = 'f32[128,1]{1,0:T(8,128)}', space=vmem, size = 0x10000, scoped, tag = 'scratch operand']
  #allocation4 [shape = 'f32[128,1]{1,0:T(8,128)}', space=vmem, size = 0x10000, scoped, tag = 'scratch operand']
  #allocation5 [shape = 'f32[128,128]{1,0:T(8,128)}', space=vmem, size = 0x10000, scoped, tag = 'scratch operand']
  %s0 = inlined_call_operand.vmem [shape: s8[128,128], index: 0, kind: input, shape index: {}]
  %s1 = inlined_call_operand.vmem [shape: bf16[128,128], index: 1, kind: input, shape index: {}, may-alias: {1,2}]
  %s2 = inlined_call_operand.vmem [shape: bf16[128,128], index: 2, kind: input, shape index: {}, may-alias: {1,2}]
  %s3 = inlined_call_operand.vmem [shape: f32[1,128], index: 3, kind: input, shape index: {}]
  %s4 = inlined_call_operand.vmem [shape: f32[1,128], index: 4, kind: input, shape index: {}]
  %s5 = inlined_call_operand.vmem [shape: f32[128,128], index: 5, kind: output, shape index: {}]
  %s6 = sld [smem:[#allocation0]]
  $region38: #{spgat_forward.5} parent=0
    _
  %s8 = ssub.s32 1, %s6
  %s9 = scalar_select 0, %s8, %s6
  // Predicated region
  $region2: #{spgat_forward.5} parent=0 // pred_check
    _
  $region3: #{spgat_forward.5} parent=0 // pred_check_branch
    %11 = sbr.rel (0) target = $region5
  $region4: #{spgat_forward.5} parent=0 // pred_region
    _
  $region5: #{spgat_forward.5} parent=0 // pred_fallthru
    _
  // Predicated region
  $region6: #{spgat_forward.5} parent=0 // pred_check
    _
  $region7: #{spgat_forward.5} parent=0 // pred_check_branch
    %13 = sbr.rel (0) target = $region9
  $region8: #{spgat_forward.5} parent=0 // pred_region
    _
  $region9: #{spgat_forward.5} parent=0 // pred_fallthru
    _
  // Predicated region
  $region10: #{spgat_forward.5} parent=0 // pred_check
    _
  $region11: #{spgat_forward.5} parent=0 // pred_check_branch
    %15 = sbr.rel (0) target = $region13
  $region12: #{spgat_forward.5} parent=0 // pred_region
    _
  $region13: #{spgat_forward.5} parent=0 // pred_fallthru
    _
  // Predicated region
  $region14: #{spgat_forward.5} parent=0 // pred_check
    _
  $region15: #{spgat_forward.5} parent=0 // pred_check_branch
    %17 = sbr.rel (0) target = $region17
  $region16: #{spgat_forward.5} parent=0 // pred_region
    _
  $region17: #{spgat_forward.5} parent=0 // pred_fallthru
    _
  // Predicated region
  $region18: #{spgat_forward.5} parent=0 // pred_check
    _
  $region19: #{spgat_forward.5} parent=0 // pred_check_branch
    %19 = sbr.rel (0) target = $region21
  $region20: #{spgat_forward.5} parent=0 // pred_region
    _
  $region21: #{spgat_forward.5} parent=0 // pred_fallthru
    _
  %v20 = vld [vmem:[%s0] sm:$0xff]
  %v21 = vld [vmem:[%s0 + $0x8] sm:$0xff]
  %v22 = vld [vmem:[%s0 + $0x10] sm:$0xff]
  %v23 = vld [vmem:[%s0 + $0x18] sm:$0xff]
  %v24 = vunpack.c.0.s8 %v20
  %v25 = vunpack.c.1.s8 %v20
  %v26 = vunpack.c.2.s8 %v20
  %v27 = vunpack.c.3.s8 %v20
  %v28 = vunpack.c.0.s8 %v21
  %v29 = vunpack.c.1.s8 %v21
  %v30 = vunpack.c.2.s8 %v21
  %v31 = vunpack.c.3.s8 %v21
  %v32 = vunpack.c.0.s8 %v22
  %v33 = vunpack.c.1.s8 %v22
  %v34 = vunpack.c.2.s8 %v22
  %v35 = vunpack.c.3.s8 %v22
  %v36 = vunpack.c.0.s8 %v23
  %v37 = vunpack.c.1.s8 %v23
  %v38 = vunpack.c.2.s8 %v23
  %v39 = vunpack.c.3.s8 %v23
  %v40 = vcvt.s32.f32 %v24
  %v41 = vcvt.s32.f32 %v25
  %v42 = vcvt.s32.f32 %v26
  %v43 = vcvt.s32.f32 %v27
  %v44 = vcvt.s32.f32 %v28
  %v45 = vcvt.s32.f32 %v29
  %v46 = vcvt.s32.f32 %v30
  %v47 = vcvt.s32.f32 %v31
  %v48 = vcvt.s32.f32 %v32
  %v49 = vcvt.s32.f32 %v33
  %v50 = vcvt.s32.f32 %v34
  %v51 = vcvt.s32.f32 %v35
  %v52 = vcvt.s32.f32 %v36
  %v53 = vcvt.s32.f32 %v37
  %v54 = vcvt.s32.f32 %v38
  %v55 = vcvt.s32.f32 %v39
  %vm56 = vcmp.gt.f32.partialorder %v40, 0.0
  %vm57 = vcmp.gt.f32.partialorder %v41, 0.0
  %vm58 = vcmp.gt.f32.partialorder %v42, 0.0
  %vm59 = vcmp.gt.f32.partialorder %v43, 0.0
  %vm60 = vcmp.gt.f32.partialorder %v44, 0.0
  %vm61 = vcmp.gt.f32.partialorder %v45, 0.0
  %vm62 = vcmp.gt.f32.partialorder %v46, 0.0
  %vm63 = vcmp.gt.f32.partialorder %v47, 0.0
  %vm64 = vcmp.gt.f32.partialorder %v48, 0.0
  %vm65 = vcmp.gt.f32.partialorder %v49, 0.0
  %vm66 = vcmp.gt.f32.partialorder %v50, 0.0
  %vm67 = vcmp.gt.f32.partialorder %v51, 0.0
  %vm68 = vcmp.gt.f32.partialorder %v52, 0.0
  %vm69 = vcmp.gt.f32.partialorder %v53, 0.0
  %vm70 = vcmp.gt.f32.partialorder %v54, 0.0
  %vm71 = vcmp.gt.f32.partialorder %v55, 0.0
  %p72 = scmp.eq.s32.totalorder 0, 0
  // Predicated region
  $region22: #{spgat_forward.5} parent=0 // pred_check
    %p73 = pneg %p72
  $region23: #{spgat_forward.5} parent=0 // pred_check_branch
    %75 = sbr.rel (%p73) target = $region25
  $region24: #{spgat_forward.5} parent=0 // pred_region
    %vm76 = vcmask 7168
    %77 = vst.msk [vmem:[#allocation3] sm:$0xff] %vm76, -1e+30
    %78 = vst.msk [vmem:[#allocation3 + $0x8] sm:$0xff] %vm76, -1e+30
    %79 = vst.msk [vmem:[#allocation3 + $0x10] sm:$0xff] %vm76, -1e+30
    %80 = vst.msk [vmem:[#allocation3 + $0x18] sm:$0xff] %vm76, -1e+30
    %81 = vst.msk [vmem:[#allocation3 + $0x20] sm:$0xff] %vm76, -1e+30
    %82 = vst.msk [vmem:[#allocation3 + $0x28] sm:$0xff] %vm76, -1e+30
    %83 = vst.msk [vmem:[#allocation3 + $0x30] sm:$0xff] %vm76, -1e+30
    %84 = vst.msk [vmem:[#allocation3 + $0x38] sm:$0xff] %vm76, -1e+30
    %85 = vst.msk [vmem:[#allocation3 + $0x40] sm:$0xff] %vm76, -1e+30
    %86 = vst.msk [vmem:[#allocation3 + $0x48] sm:$0xff] %vm76, -1e+30
    %87 = vst.msk [vmem:[#allocation3 + $0x50] sm:$0xff] %vm76, -1e+30
    %88 = vst.msk [vmem:[#allocation3 + $0x58] sm:$0xff] %vm76, -1e+30
    %89 = vst.msk [vmem:[#allocation3 + $0x60] sm:$0xff] %vm76, -1e+30
    %90 = vst.msk [vmem:[#allocation3 + $0x68] sm:$0xff] %vm76, -1e+30
    %91 = vst.msk [vmem:[#allocation3 + $0x70] sm:$0xff] %vm76, -1e+30
    %92 = vst.msk [vmem:[#allocation3 + $0x78] sm:$0xff] %vm76, -1e+30
    %93 = vst.msk [vmem:[#allocation4] sm:$0xff] %vm76, 0.0
    %94 = vst.msk [vmem:[#allocation4 + $0x8] sm:$0xff] %vm76, 0.0
    %95 = vst.msk [vmem:[#allocation4 + $0x10] sm:$0xff] %vm76, 0.0
    %96 = vst.msk [vmem:[#allocation4 + $0x18] sm:$0xff] %vm76, 0.0
    %97 = vst.msk [vmem:[#allocation4 + $0x20] sm:$0xff] %vm76, 0.0
    %98 = vst.msk [vmem:[#allocation4 + $0x28] sm:$0xff] %vm76, 0.0
    %99 = vst.msk [vmem:[#allocation4 + $0x30] sm:$0xff] %vm76, 0.0
    %100 = vst.msk [vmem:[#allocation4 + $0x38] sm:$0xff] %vm76, 0.0
    %101 = vst.msk [vmem:[#allocation4 + $0x40] sm:$0xff] %vm76, 0.0
    %102 = vst.msk [vmem:[#allocation4 + $0x48] sm:$0xff] %vm76, 0.0
    %103 = vst.msk [vmem:[#allocation4 + $0x50] sm:$0xff] %vm76, 0.0
    %104 = vst.msk [vmem:[#allocation4 + $0x58] sm:$0xff] %vm76, 0.0
    %105 = vst.msk [vmem:[#allocation4 + $0x60] sm:$0xff] %vm76, 0.0
    %106 = vst.msk [vmem:[#allocation4 + $0x68] sm:$0xff] %vm76, 0.0
    %107 = vst.msk [vmem:[#allocation4 + $0x70] sm:$0xff] %vm76, 0.0
    %108 = vst.msk [vmem:[#allocation4 + $0x78] sm:$0xff] %vm76, 0.0
    %109 = vst [vmem:[#allocation5] sm:$0xff] 0.0
    %110 = vst [vmem:[#allocation5 + $0x8] sm:$0xff] 0.0
    %111 = vst [vmem:[#allocation5 + $0x10] sm:$0xff] 0.0
    %112 = vst [vmem:[#allocation5 + $0x18] sm:$0xff] 0.0
    %113 = vst [vmem:[#allocation5 + $0x20] sm:$0xff] 0.0
    %114 = vst [vmem:[#allocation5 + $0x28] sm:$0xff] 0.0
    %115 = vst [vmem:[#allocation5 + $0x30] sm:$0xff] 0.0
    %116 = vst [vmem:[#allocation5 + $0x38] sm:$0xff] 0.0
    %117 = vst [vmem:[#allocation5 + $0x40] sm:$0xff] 0.0
    %118 = vst [vmem:[#allocation5 + $0x48] sm:$0xff] 0.0
    %119 = vst [vmem:[#allocation5 + $0x50] sm:$0xff] 0.0
    %120 = vst [vmem:[#allocation5 + $0x58] sm:$0xff] 0.0
    %121 = vst [vmem:[#allocation5 + $0x60] sm:$0xff] 0.0
    %122 = vst [vmem:[#allocation5 + $0x68] sm:$0xff] 0.0
    %123 = vst [vmem:[#allocation5 + $0x70] sm:$0xff] 0.0
    %124 = vst [vmem:[#allocation5 + $0x78] sm:$0xff] 0.0
    %v125 = vld [vmem:[%s1] sm:$0xf]
    %v126 = vld [vmem:[%s1 + $0x4] sm:$0xf]
    %v127 = vld [vmem:[%s1 + $0x8] sm:$0xf]
    %v128 = vld [vmem:[%s1 + $0xc] sm:$0xf]
    %v129 = vld [vmem:[%s1 + $0x10] sm:$0xf]
    %v130 = vld [vmem:[%s1 + $0x14] sm:$0xf]
    %v131 = vld [vmem:[%s1 + $0x18] sm:$0xf]
    %v132 = vld [vmem:[%s1 + $0x1c] sm:$0xf]
    %v133 = vld [vmem:[%s1 + $0x20] sm:$0xf]
    %v134 = vld [vmem:[%s1 + $0x24] sm:$0xf]
    %v135 = vld [vmem:[%s1 + $0x28] sm:$0xf]
    %v136 = vld [vmem:[%s1 + $0x2c] sm:$0xf]
    %v137 = vld [vmem:[%s1 + $0x30] sm:$0xf]
    %v138 = vld [vmem:[%s1 + $0x34] sm:$0xf]
    %v139 = vld [vmem:[%s1 + $0x38] sm:$0xf]
    %v140 = vld [vmem:[%s1 + $0x3c] sm:$0xf]
    %v141 = vunpack.c.l.bf16 %v125
    %v142 = vunpack.c.l.bf16 %v126
    %v143 = vunpack.c.l.bf16 %v127
    %v144 = vunpack.c.l.bf16 %v128
    %v145 = vunpack.c.l.bf16 %v129
    %v146 = vunpack.c.l.bf16 %v130
    %v147 = vunpack.c.l.bf16 %v131
    %v148 = vunpack.c.l.bf16 %v132
    %v149 = vunpack.c.l.bf16 %v133
    %v150 = vunpack.c.l.bf16 %v134
    %v151 = vunpack.c.l.bf16 %v135
    %v152 = vunpack.c.l.bf16 %v136
    %v153 = vunpack.c.l.bf16 %v137
    %v154 = vunpack.c.l.bf16 %v138
    %v155 = vunpack.c.l.bf16 %v139
    %v156 = vunpack.c.l.bf16 %v140
    %v157 = vld [vmem:[%s3] sm:$0x1]
    %v159 = vperm.slane %v157, 0
    %v161 = vmul.f32 %v141, %v159
    %v162 = vmul.f32 %v142, %v159
    %v163 = vmul.f32 %v143, %v159
    %v164 = vmul.f32 %v144, %v159
    %v165 = vmul.f32 %v145, %v159
    %v166 = vmul.f32 %v146, %v159
    %v167 = vmul.f32 %v147, %v159
    %v168 = vmul.f32 %v148, %v159
    %v169 = vmul.f32 %v149, %v159
    %v170 = vmul.f32 %v150, %v159
    %v171 = vmul.f32 %v151, %v159
    %v172 = vmul.f32 %v152, %v159
    %v173 = vmul.f32 %v153, %v159
    %v174 = vmul.f32 %v154, %v159
    %v175 = vmul.f32 %v155, %v159
    %v176 = vmul.f32 %v156, %v159
    %177 = vadd.xlane.f32.xlu0 %v161
    %v178 = vpop.xlane.xlu0 %177
    %179 = vadd.xlane.f32.xlu0 %v162
    %v180 = vpop.xlane.xlu0 %179
    %181 = vadd.xlane.f32.xlu0 %v163
    %v182 = vpop.xlane.xlu0 %181
    %183 = vadd.xlane.f32.xlu0 %v164
    %v184 = vpop.xlane.xlu0 %183
    %185 = vadd.xlane.f32.xlu0 %v165
    %v186 = vpop.xlane.xlu0 %185
    %187 = vadd.xlane.f32.xlu0 %v166
    %v188 = vpop.xlane.xlu0 %187
    %189 = vadd.xlane.f32.xlu0 %v167
    %v190 = vpop.xlane.xlu0 %189
    %191 = vadd.xlane.f32.xlu0 %v168
    %v192 = vpop.xlane.xlu0 %191
    %193 = vadd.xlane.f32.xlu0 %v169
    %v194 = vpop.xlane.xlu0 %193
    %195 = vadd.xlane.f32.xlu0 %v170
    %v196 = vpop.xlane.xlu0 %195
    %197 = vadd.xlane.f32.xlu0 %v171
    %v198 = vpop.xlane.xlu0 %197
    %199 = vadd.xlane.f32.xlu0 %v172
    %v200 = vpop.xlane.xlu0 %199
    %201 = vadd.xlane.f32.xlu0 %v173
    %v202 = vpop.xlane.xlu0 %201
    %203 = vadd.xlane.f32.xlu0 %v174
    %v204 = vpop.xlane.xlu0 %203
    %205 = vadd.xlane.f32.xlu0 %v175
    %v206 = vpop.xlane.xlu0 %205
    %207 = vadd.xlane.f32.xlu0 %v176
    %v208 = vpop.xlane.xlu0 %207
    %209 = vst.msk [vmem:[#allocation2] sm:$0xff] %vm76, %v178
    %210 = vst.msk [vmem:[#allocation2 + $0x8] sm:$0xff] %vm76, %v180
    %211 = vst.msk [vmem:[#allocation2 + $0x10] sm:$0xff] %vm76, %v182
    %212 = vst.msk [vmem:[#allocation2 + $0x18] sm:$0xff] %vm76, %v184
    %213 = vst.msk [vmem:[#allocation2 + $0x20] sm:$0xff] %vm76, %v186
    %214 = vst.msk [vmem:[#allocation2 + $0x28] sm:$0xff] %vm76, %v188
    %215 = vst.msk [vmem:[#allocation2 + $0x30] sm:$0xff] %vm76, %v190
    %216 = vst.msk [vmem:[#allocation2 + $0x38] sm:$0xff] %vm76, %v192
    %217 = vst.msk [vmem:[#allocation2 + $0x40] sm:$0xff] %vm76, %v194
    %218 = vst.msk [vmem:[#allocation2 + $0x48] sm:$0xff] %vm76, %v196
    %219 = vst.msk [vmem:[#allocation2 + $0x50] sm:$0xff] %vm76, %v198
    %220 = vst.msk [vmem:[#allocation2 + $0x58] sm:$0xff] %vm76, %v200
    %221 = vst.msk [vmem:[#allocation2 + $0x60] sm:$0xff] %vm76, %v202
    %222 = vst.msk [vmem:[#allocation2 + $0x68] sm:$0xff] %vm76, %v204
    %223 = vst.msk [vmem:[#allocation2 + $0x70] sm:$0xff] %vm76, %v206
    %224 = vst.msk [vmem:[#allocation2 + $0x78] sm:$0xff] %vm76, %v208
  $region25: #{spgat_forward.5} parent=0 // pred_fallthru
    _
  %v225 = vld [vmem:[%s2] sm:$0xf]
  %v226 = vld [vmem:[%s2 + $0x4] sm:$0xf]
  %v227 = vld [vmem:[%s2 + $0x8] sm:$0xf]
  %v228 = vld [vmem:[%s2 + $0xc] sm:$0xf]
  %v229 = vld [vmem:[%s2 + $0x10] sm:$0xf]
  %v230 = vld [vmem:[%s2 + $0x14] sm:$0xf]
  %v231 = vld [vmem:[%s2 + $0x18] sm:$0xf]
  %v232 = vld [vmem:[%s2 + $0x1c] sm:$0xf]
  %v233 = vld [vmem:[%s2 + $0x20] sm:$0xf]
  %v234 = vld [vmem:[%s2 + $0x24] sm:$0xf]
  %v235 = vld [vmem:[%s2 + $0x28] sm:$0xf]
  %v236 = vld [vmem:[%s2 + $0x2c] sm:$0xf]
  %v237 = vld [vmem:[%s2 + $0x30] sm:$0xf]
  %v238 = vld [vmem:[%s2 + $0x34] sm:$0xf]
  %v239 = vld [vmem:[%s2 + $0x38] sm:$0xf]
  %v240 = vld [vmem:[%s2 + $0x3c] sm:$0xf]
  %v241 = vld [vmem:[%s4] sm:$0x1]
  %v242 = vunpack.c.l.bf16 %v225
  %v243 = vunpack.c.l.bf16 %v226
  %v244 = vunpack.c.l.bf16 %v227
  %v245 = vunpack.c.l.bf16 %v228
  %v246 = vunpack.c.l.bf16 %v229
  %v247 = vunpack.c.l.bf16 %v230
  %v248 = vunpack.c.l.bf16 %v231
  %v249 = vunpack.c.l.bf16 %v232
  %v250 = vunpack.c.l.bf16 %v233
  %v251 = vunpack.c.l.bf16 %v234
  %v252 = vunpack.c.l.bf16 %v235
  %v253 = vunpack.c.l.bf16 %v236
  %v254 = vunpack.c.l.bf16 %v237
  %v255 = vunpack.c.l.bf16 %v238
  %v256 = vunpack.c.l.bf16 %v239
  %v257 = vunpack.c.l.bf16 %v240
  %258 = vmatpush.xpose.msra.mxu0 %v257
  %259 = vmatpush.xpose.msra.mxu0 %v256
  %260 = vmatpush.xpose.msra.mxu0 %v255
  %261 = vmatpush.xpose.msra.mxu0 %v254
  %262 = vmatpush.xpose.msra.mxu0 %v253
  %263 = vmatpush.xpose.msra.mxu0 %v252
  %264 = vmatpush.xpose.msra.mxu0 %v251
  %265 = vmatpush.xpose.msra.mxu0 %v250
  %266 = vmatpush.xpose.msra.mxu0 %v249
  %267 = vmatpush.xpose.msra.mxu0 %v248
  %268 = vmatpush.xpose.msra.mxu0 %v247
  %269 = vmatpush.xpose.msra.mxu0 %v246
  %270 = vmatpush.xpose.msra.mxu0 %v245
  %271 = vmatpush.xpose.msra.mxu0 %v244
  %272 = vmatpush.xpose.msra.mxu0 %v243
  %273 = vmatpush.xpose.msra.mxu0 %v242
  %274 = vmatmul.f32.gmra.mxu0 %v241
  %v275 = vpop.f32.mrf.mxu0
  %v276 = vadd.f32 0.0, %v275
  %277 = vdwg.mxu0
  %v278 = vld [vmem:[#allocation2] sm:$0xff]
  %v279 = vld [vmem:[#allocation2 + $0x8] sm:$0xff]
  %v280 = vld [vmem:[#allocation2 + $0x10] sm:$0xff]
  %v281 = vld [vmem:[#allocation2 + $0x18] sm:$0xff]
  %v282 = vld [vmem:[#allocation2 + $0x20] sm:$0xff]
  %v283 = vld [vmem:[#allocation2 + $0x28] sm:$0xff]
  %v284 = vld [vmem:[#allocation2 + $0x30] sm:$0xff]
  %v285 = vld [vmem:[#allocation2 + $0x38] sm:$0xff]
  %v286 = vld [vmem:[#allocation2 + $0x40] sm:$0xff]
  %v287 = vld [vmem:[#allocation2 + $0x48] sm:$0xff]
  %v288 = vld [vmem:[#allocation2 + $0x50] sm:$0xff]
  %v289 = vld [vmem:[#allocation2 + $0x58] sm:$0xff]
  %v290 = vld [vmem:[#allocation2 + $0x60] sm:$0xff]
  %v291 = vld [vmem:[#allocation2 + $0x68] sm:$0xff]
  %v292 = vld [vmem:[#allocation2 + $0x70] sm:$0xff]
  %v293 = vld [vmem:[#allocation2 + $0x78] sm:$0xff]
  %295 = vset.pattern.permute.xlu0 0
  %296 = vperm.xlu0 %295, %v278
  %v297 = vpop.permute.xlu0 %296
  %300 = vset.pattern.permute.xlu0 0
  %301 = vperm.xlu0 %300, %v279
  %v302 = vpop.permute.xlu0 %301
  %305 = vset.pattern.permute.xlu0 0
  %306 = vperm.xlu0 %305, %v280
  %v307 = vpop.permute.xlu0 %306
  %310 = vset.pattern.permute.xlu0 0
  %311 = vperm.xlu0 %310, %v281
  %v312 = vpop.permute.xlu0 %311
  %315 = vset.pattern.permute.xlu0 0
  %316 = vperm.xlu0 %315, %v282
  %v317 = vpop.permute.xlu0 %316
  %320 = vset.pattern.permute.xlu0 0
  %321 = vperm.xlu0 %320, %v283
  %v322 = vpop.permute.xlu0 %321
  %325 = vset.pattern.permute.xlu0 0
  %326 = vperm.xlu0 %325, %v284
  %v327 = vpop.permute.xlu0 %326
  %330 = vset.pattern.permute.xlu0 0
  %331 = vperm.xlu0 %330, %v285
  %v332 = vpop.permute.xlu0 %331
  %335 = vset.pattern.permute.xlu0 0
  %336 = vperm.xlu0 %335, %v286
  %v337 = vpop.permute.xlu0 %336
  %340 = vset.pattern.permute.xlu0 0
  %341 = vperm.xlu0 %340, %v287
  %v342 = vpop.permute.xlu0 %341
  %345 = vset.pattern.permute.xlu0 0
  %346 = vperm.xlu0 %345, %v288
  %v347 = vpop.permute.xlu0 %346
  %350 = vset.pattern.permute.xlu0 0
  %351 = vperm.xlu0 %350, %v289
  %v352 = vpop.permute.xlu0 %351
  %355 = vset.pattern.permute.xlu0 0
  %356 = vperm.xlu0 %355, %v290
  %v357 = vpop.permute.xlu0 %356
  %360 = vset.pattern.permute.xlu0 0
  %361 = vperm.xlu0 %360, %v291
  %v362 = vpop.permute.xlu0 %361
  %365 = vset.pattern.permute.xlu0 0
  %366 = vperm.xlu0 %365, %v292
  %v367 = vpop.permute.xlu0 %366
  %370 = vset.pattern.permute.xlu0 0
  %371 = vperm.xlu0 %370, %v293
  %v372 = vpop.permute.xlu0 %371
  %v374 = vperm.slane %v276, 0
  %v375 = vadd.f32 %v297, %v374
  %v376 = vadd.f32 %v302, %v374
  %v377 = vadd.f32 %v307, %v374
  %v378 = vadd.f32 %v312, %v374
  %v379 = vadd.f32 %v317, %v374
  %v380 = vadd.f32 %v322, %v374
  %v381 = vadd.f32 %v327, %v374
  %v382 = vadd.f32 %v332, %v374
  %v383 = vadd.f32 %v337, %v374
  %v384 = vadd.f32 %v342, %v374
  %v385 = vadd.f32 %v347, %v374
  %v386 = vadd.f32 %v352, %v374
  %v387 = vadd.f32 %v357, %v374
  %v388 = vadd.f32 %v362, %v374
  %v389 = vadd.f32 %v367, %v374
  %v390 = vadd.f32 %v372, %v374
  %vm391 = vcmp.gt.f32.partialorder %v375, 0.0
  %vm392 = vcmp.gt.f32.partialorder %v376, 0.0
  %vm393 = vcmp.gt.f32.partialorder %v377, 0.0
  %vm394 = vcmp.gt.f32.partialorder %v378, 0.0
  %vm395 = vcmp.gt.f32.partialorder %v379, 0.0
  %vm396 = vcmp.gt.f32.partialorder %v380, 0.0
  %vm397 = vcmp.gt.f32.partialorder %v381, 0.0
  %vm398 = vcmp.gt.f32.partialorder %v382, 0.0
  %vm399 = vcmp.gt.f32.partialorder %v383, 0.0
  %vm400 = vcmp.gt.f32.partialorder %v384, 0.0
  %vm401 = vcmp.gt.f32.partialorder %v385, 0.0
  %vm402 = vcmp.gt.f32.partialorder %v386, 0.0
  %vm403 = vcmp.gt.f32.partialorder %v387, 0.0
  %vm404 = vcmp.gt.f32.partialorder %v388, 0.0
  %vm405 = vcmp.gt.f32.partialorder %v389, 0.0
  %vm406 = vcmp.gt.f32.partialorder %v390, 0.0
  %v407 = vmul.f32 %v375, 0.2
  %v408 = vmul.f32 %v376, 0.2
  %v409 = vmul.f32 %v377, 0.2
  %v410 = vmul.f32 %v378, 0.2
  %v411 = vmul.f32 %v379, 0.2
  %v412 = vmul.f32 %v380, 0.2
  %v413 = vmul.f32 %v381, 0.2
  %v414 = vmul.f32 %v382, 0.2
  %v415 = vmul.f32 %v383, 0.2
  %v416 = vmul.f32 %v384, 0.2
  %v417 = vmul.f32 %v385, 0.2
  %v418 = vmul.f32 %v386, 0.2
  %v419 = vmul.f32 %v387, 0.2
  %v420 = vmul.f32 %v388, 0.2
  %v421 = vmul.f32 %v389, 0.2
  %v422 = vmul.f32 %v390, 0.2
  %v423 = vsel %vm391, %v375, %v407
  %v424 = vsel %vm392, %v376, %v408
  %v425 = vsel %vm393, %v377, %v409
  %v426 = vsel %vm394, %v378, %v410
  %v427 = vsel %vm395, %v379, %v411
  %v428 = vsel %vm396, %v380, %v412
  %v429 = vsel %vm397, %v381, %v413
  %v430 = vsel %vm398, %v382, %v414
  %v431 = vsel %vm399, %v383, %v415
  %v432 = vsel %vm400, %v384, %v416
  %v433 = vsel %vm401, %v385, %v417
  %v434 = vsel %vm402, %v386, %v418
  %v435 = vsel %vm403, %v387, %v419
  %v436 = vsel %vm404, %v388, %v420
  %v437 = vsel %vm405, %v389, %v421
  %v438 = vsel %vm406, %v390, %v422
  %v439 = vsub.f32 0.0, %v423
  %v440 = vsub.f32 0.0, %v424
  %v441 = vsub.f32 0.0, %v425
  %v442 = vsub.f32 0.0, %v426
  %v443 = vsub.f32 0.0, %v427
  %v444 = vsub.f32 0.0, %v428
  %v445 = vsub.f32 0.0, %v429
  %v446 = vsub.f32 0.0, %v430
  %v447 = vsub.f32 0.0, %v431
  %v448 = vsub.f32 0.0, %v432
  %v449 = vsub.f32 0.0, %v433
  %v450 = vsub.f32 0.0, %v434
  %v451 = vsub.f32 0.0, %v435
  %v452 = vsub.f32 0.0, %v436
  %v453 = vsub.f32 0.0, %v437
  %v454 = vsub.f32 0.0, %v438
  %v455 = vsel %vm56, %v439, -1e+30
  %v456 = vsel %vm57, %v440, -1e+30
  %v457 = vsel %vm58, %v441, -1e+30
  %v458 = vsel %vm59, %v442, -1e+30
  %v459 = vsel %vm60, %v443, -1e+30
  %v460 = vsel %vm61, %v444, -1e+30
  %v461 = vsel %vm62, %v445, -1e+30
  %v462 = vsel %vm63, %v446, -1e+30
  %v463 = vsel %vm64, %v447, -1e+30
  %v464 = vsel %vm65, %v448, -1e+30
  %v465 = vsel %vm66, %v449, -1e+30
  %v466 = vsel %vm67, %v450, -1e+30
  %v467 = vsel %vm68, %v451, -1e+30
  %v468 = vsel %vm69, %v452, -1e+30
  %v469 = vsel %vm70, %v453, -1e+30
  %v470 = vsel %vm71, %v454, -1e+30
  %v471 = vld [vmem:[#allocation3] sm:$0xff]
  %v472 = vld [vmem:[#allocation3 + $0x8] sm:$0xff]
  %v473 = vld [vmem:[#allocation3 + $0x10] sm:$0xff]
  %v474 = vld [vmem:[#allocation3 + $0x18] sm:$0xff]
  %v475 = vld [vmem:[#allocation3 + $0x20] sm:$0xff]
  %v476 = vld [vmem:[#allocation3 + $0x28] sm:$0xff]
  %v477 = vld [vmem:[#allocation3 + $0x30] sm:$0xff]
  %v478 = vld [vmem:[#allocation3 + $0x38] sm:$0xff]
  %v479 = vld [vmem:[#allocation3 + $0x40] sm:$0xff]
  %v480 = vld [vmem:[#allocation3 + $0x48] sm:$0xff]
  %v481 = vld [vmem:[#allocation3 + $0x50] sm:$0xff]
  %v482 = vld [vmem:[#allocation3 + $0x58] sm:$0xff]
  %v483 = vld [vmem:[#allocation3 + $0x60] sm:$0xff]
  %v484 = vld [vmem:[#allocation3 + $0x68] sm:$0xff]
  %v485 = vld [vmem:[#allocation3 + $0x70] sm:$0xff]
  %v486 = vld [vmem:[#allocation3 + $0x78] sm:$0xff]
  %487 = vmax.xlane.f32.xlu0 %v455
  %v488 = vpop.xlane.xlu0 %487
  %489 = vmax.xlane.f32.xlu0 %v456
  %v490 = vpop.xlane.xlu0 %489
  %491 = vmax.xlane.f32.xlu0 %v457
  %v492 = vpop.xlane.xlu0 %491
  %493 = vmax.xlane.f32.xlu0 %v458
  %v494 = vpop.xlane.xlu0 %493
  %495 = vmax.xlane.f32.xlu0 %v459
  %v496 = vpop.xlane.xlu0 %495
  %497 = vmax.xlane.f32.xlu0 %v460
  %v498 = vpop.xlane.xlu0 %497
  %499 = vmax.xlane.f32.xlu0 %v461
  %v500 = vpop.xlane.xlu0 %499
  %501 = vmax.xlane.f32.xlu0 %v462
  %v502 = vpop.xlane.xlu0 %501
  %503 = vmax.xlane.f32.xlu0 %v463
  %v504 = vpop.xlane.xlu0 %503
  %505 = vmax.xlane.f32.xlu0 %v464
  %v506 = vpop.xlane.xlu0 %505
  %507 = vmax.xlane.f32.xlu0 %v465
  %v508 = vpop.xlane.xlu0 %507
  %509 = vmax.xlane.f32.xlu0 %v466
  %v510 = vpop.xlane.xlu0 %509
  %511 = vmax.xlane.f32.xlu0 %v467
  %v512 = vpop.xlane.xlu0 %511
  %513 = vmax.xlane.f32.xlu0 %v468
  %v514 = vpop.xlane.xlu0 %513
  %515 = vmax.xlane.f32.xlu0 %v469
  %v516 = vpop.xlane.xlu0 %515
  %517 = vmax.xlane.f32.xlu0 %v470
  %v518 = vpop.xlane.xlu0 %517
  %v519 = vmax.f32 %v471, %v488
  %v520 = vmax.f32 %v472, %v490
  %v521 = vmax.f32 %v473, %v492
  %v522 = vmax.f32 %v474, %v494
  %v523 = vmax.f32 %v475, %v496
  %v524 = vmax.f32 %v476, %v498
  %v525 = vmax.f32 %v477, %v500
  %v526 = vmax.f32 %v478, %v502
  %v527 = vmax.f32 %v479, %v504
  %v528 = vmax.f32 %v480, %v506
  %v529 = vmax.f32 %v481, %v508
  %v530 = vmax.f32 %v482, %v510
  %v531 = vmax.f32 %v483, %v512
  %v532 = vmax.f32 %v484, %v514
  %v533 = vmax.f32 %v485, %v516
  %v534 = vmax.f32 %v486, %v518
  %v535 = vsub.f32 %v471, %v519
  %v536 = vsub.f32 %v472, %v520
  %v537 = vsub.f32 %v473, %v521
  %v538 = vsub.f32 %v474, %v522
  %v539 = vsub.f32 %v475, %v523
  %v540 = vsub.f32 %v476, %v524
  %v541 = vsub.f32 %v477, %v525
  %v542 = vsub.f32 %v478, %v526
  %v543 = vsub.f32 %v479, %v527
  %v544 = vsub.f32 %v480, %v528
  %v545 = vsub.f32 %v481, %v529
  %v546 = vsub.f32 %v482, %v530
  %v547 = vsub.f32 %v483, %v531
  %v548 = vsub.f32 %v484, %v532
  %v549 = vsub.f32 %v485, %v533
  %v550 = vsub.f32 %v486, %v534
  %v551 = vmul.f32 %v535, 1.442695
  %v552 = vpow.pop %v551
  %v553 = vmul.f32 %v536, 1.442695
  %v554 = vpow.pop %v553
  %v555 = vmul.f32 %v537, 1.442695
  %v556 = vpow.pop %v555
  %v557 = vmul.f32 %v538, 1.442695
  %v558 = vpow.pop %v557
  %v559 = vmul.f32 %v539, 1.442695
  %v560 = vpow.pop %v559
  %v561 = vmul.f32 %v540, 1.442695
  %v562 = vpow.pop %v561
  %v563 = vmul.f32 %v541, 1.442695
  %v564 = vpow.pop %v563
  %v565 = vmul.f32 %v542, 1.442695
  %v566 = vpow.pop %v565
  %v567 = vmul.f32 %v543, 1.442695
  %v568 = vpow.pop %v567
  %v569 = vmul.f32 %v544, 1.442695
  %v570 = vpow.pop %v569
  %v571 = vmul.f32 %v545, 1.442695
  %v572 = vpow.pop %v571
  %v573 = vmul.f32 %v546, 1.442695
  %v574 = vpow.pop %v573
  %v575 = vmul.f32 %v547, 1.442695
  %v576 = vpow.pop %v575
  %v577 = vmul.f32 %v548, 1.442695
  %v578 = vpow.pop %v577
  %v579 = vmul.f32 %v549, 1.442695
  %v580 = vpow.pop %v579
  %v581 = vmul.f32 %v550, 1.442695
  %v582 = vpow.pop %v581
  %584 = vset.pattern.permute.xlu0 0
  %585 = vperm.xlu0 %584, %v519
  %v586 = vpop.permute.xlu0 %585
  %589 = vset.pattern.permute.xlu0 0
  %590 = vperm.xlu0 %589, %v520
  %v591 = vpop.permute.xlu0 %590
  %594 = vset.pattern.permute.xlu0 0
  %595 = vperm.xlu0 %594, %v521
  %v596 = vpop.permute.xlu0 %595
  %599 = vset.pattern.permute.xlu0 0
  %600 = vperm.xlu0 %599, %v522
  %v601 = vpop.permute.xlu0 %600
  %604 = vset.pattern.permute.xlu0 0
  %605 = vperm.xlu0 %604, %v523
  %v606 = vpop.permute.xlu0 %605
  %609 = vset.pattern.permute.xlu0 0
  %610 = vperm.xlu0 %609, %v524
  %v611 = vpop.permute.xlu0 %610
  %614 = vset.pattern.permute.xlu0 0
  %615 = vperm.xlu0 %614, %v525
  %v616 = vpop.permute.xlu0 %615
  %619 = vset.pattern.permute.xlu0 0
  %620 = vperm.xlu0 %619, %v526
  %v621 = vpop.permute.xlu0 %620
  %624 = vset.pattern.permute.xlu0 0
  %625 = vperm.xlu0 %624, %v527
  %v626 = vpop.permute.xlu0 %625
  %629 = vset.pattern.permute.xlu0 0
  %630 = vperm.xlu0 %629, %v528
  %v631 = vpop.permute.xlu0 %630
  %634 = vset.pattern.permute.xlu0 0
  %635 = vperm.xlu0 %634, %v529
  %v636 = vpop.permute.xlu0 %635
  %639 = vset.pattern.permute.xlu0 0
  %640 = vperm.xlu0 %639, %v530
  %v641 = vpop.permute.xlu0 %640
  %644 = vset.pattern.permute.xlu0 0
  %645 = vperm.xlu0 %644, %v531
  %v646 = vpop.permute.xlu0 %645
  %649 = vset.pattern.permute.xlu0 0
  %650 = vperm.xlu0 %649, %v532
  %v651 = vpop.permute.xlu0 %650
  %654 = vset.pattern.permute.xlu0 0
  %655 = vperm.xlu0 %654, %v533
  %v656 = vpop.permute.xlu0 %655
  %659 = vset.pattern.permute.xlu0 0
  %660 = vperm.xlu0 %659, %v534
  %v661 = vpop.permute.xlu0 %660
  %v663 = vsub.f32 %v455, %v586
  %v664 = vsub.f32 %v456, %v591
  %v665 = vsub.f32 %v457, %v596
  %v666 = vsub.f32 %v458, %v601
  %v667 = vsub.f32 %v459, %v606
  %v668 = vsub.f32 %v460, %v611
  %v669 = vsub.f32 %v461, %v616
  %v670 = vsub.f32 %v462, %v621
  %v671 = vsub.f32 %v463, %v626
  %v672 = vsub.f32 %v464, %v631
  %v673 = vsub.f32 %v465, %v636
  %v674 = vsub.f32 %v466, %v641
  %v675 = vsub.f32 %v467, %v646
  %v676 = vsub.f32 %v468, %v651
  %v677 = vsub.f32 %v469, %v656
  %v678 = vsub.f32 %v470, %v661
  %v679 = vmul.f32 %v663, 1.442695
  %v680 = vpow.pop %v679
  %v681 = vmul.f32 %v664, 1.442695
  %v682 = vpow.pop %v681
  %v683 = vmul.f32 %v665, 1.442695
  %v684 = vpow.pop %v683
  %v685 = vmul.f32 %v666, 1.442695
  %v686 = vpow.pop %v685
  %v687 = vmul.f32 %v667, 1.442695
  %v688 = vpow.pop %v687
  %v689 = vmul.f32 %v668, 1.442695
  %v690 = vpow.pop %v689
  %v691 = vmul.f32 %v669, 1.442695
  %v692 = vpow.pop %v691
  %v693 = vmul.f32 %v670, 1.442695
  %v694 = vpow.pop %v693
  %v695 = vmul.f32 %v671, 1.442695
  %v696 = vpow.pop %v695
  %v697 = vmul.f32 %v672, 1.442695
  %v698 = vpow.pop %v697
  %v699 = vmul.f32 %v673, 1.442695
  %v700 = vpow.pop %v699
  %v701 = vmul.f32 %v674, 1.442695
  %v702 = vpow.pop %v701
  %v703 = vmul.f32 %v675, 1.442695
  %v704 = vpow.pop %v703
  %v705 = vmul.f32 %v676, 1.442695
  %v706 = vpow.pop %v705
  %v707 = vmul.f32 %v677, 1.442695
  %v708 = vpow.pop %v707
  %v709 = vmul.f32 %v678, 1.442695
  %v710 = vpow.pop %v709
  %v711 = vld [vmem:[#allocation4] sm:$0xff]
  %v712 = vld [vmem:[#allocation4 + $0x8] sm:$0xff]
  %v713 = vld [vmem:[#allocation4 + $0x10] sm:$0xff]
  %v714 = vld [vmem:[#allocation4 + $0x18] sm:$0xff]
  %v715 = vld [vmem:[#allocation4 + $0x20] sm:$0xff]
  %v716 = vld [vmem:[#allocation4 + $0x28] sm:$0xff]
  %v717 = vld [vmem:[#allocation4 + $0x30] sm:$0xff]
  %v718 = vld [vmem:[#allocation4 + $0x38] sm:$0xff]
  %v719 = vld [vmem:[#allocation4 + $0x40] sm:$0xff]
  %v720 = vld [vmem:[#allocation4 + $0x48] sm:$0xff]
  %v721 = vld [vmem:[#allocation4 + $0x50] sm:$0xff]
  %v722 = vld [vmem:[#allocation4 + $0x58] sm:$0xff]
  %v723 = vld [vmem:[#allocation4 + $0x60] sm:$0xff]
  %v724 = vld [vmem:[#allocation4 + $0x68] sm:$0xff]
  %v725 = vld [vmem:[#allocation4 + $0x70] sm:$0xff]
  %v726 = vld [vmem:[#allocation4 + $0x78] sm:$0xff]
  %v727 = vmul.f32 %v552, %v711
  %v728 = vmul.f32 %v554, %v712
  %v729 = vmul.f32 %v556, %v713
  %v730 = vmul.f32 %v558, %v714
  %v731 = vmul.f32 %v560, %v715
  %v732 = vmul.f32 %v562, %v716
  %v733 = vmul.f32 %v564, %v717
  %v734 = vmul.f32 %v566, %v718
  %v735 = vmul.f32 %v568, %v719
  %v736 = vmul.f32 %v570, %v720
  %v737 = vmul.f32 %v572, %v721
  %v738 = vmul.f32 %v574, %v722
  %v739 = vmul.f32 %v576, %v723
  %v740 = vmul.f32 %v578, %v724
  %v741 = vmul.f32 %v580, %v725
  %v742 = vmul.f32 %v582, %v726
  %743 = vadd.xlane.f32.xlu0 %v680
  %v744 = vpop.xlane.xlu0 %743
  %745 = vadd.xlane.f32.xlu0 %v682
  %v746 = vpop.xlane.xlu0 %745
  %747 = vadd.xlane.f32.xlu0 %v684
  %v748 = vpop.xlane.xlu0 %747
  %749 = vadd.xlane.f32.xlu0 %v686
  %v750 = vpop.xlane.xlu0 %749
  %751 = vadd.xlane.f32.xlu0 %v688
  %v752 = vpop.xlane.xlu0 %751
  %753 = vadd.xlane.f32.xlu0 %v690
  %v754 = vpop.xlane.xlu0 %753
  %755 = vadd.xlane.f32.xlu0 %v692
  %v756 = vpop.xlane.xlu0 %755
  %757 = vadd.xlane.f32.xlu0 %v694
  %v758 = vpop.xlane.xlu0 %757
  %759 = vadd.xlane.f32.xlu0 %v696
  %v760 = vpop.xlane.xlu0 %759
  %761 = vadd.xlane.f32.xlu0 %v698
  %v762 = vpop.xlane.xlu0 %761
  %763 = vadd.xlane.f32.xlu0 %v700
  %v764 = vpop.xlane.xlu0 %763
  %765 = vadd.xlane.f32.xlu0 %v702
  %v766 = vpop.xlane.xlu0 %765
  %767 = vadd.xlane.f32.xlu0 %v704
  %v768 = vpop.xlane.xlu0 %767
  %769 = vadd.xlane.f32.xlu0 %v706
  %v770 = vpop.xlane.xlu0 %769
  %771 = vadd.xlane.f32.xlu0 %v708
  %v772 = vpop.xlane.xlu0 %771
  %773 = vadd.xlane.f32.xlu0 %v710
  %v774 = vpop.xlane.xlu0 %773
  %v775 = vadd.f32 %v727, %v744
  %v776 = vadd.f32 %v728, %v746
  %v777 = vadd.f32 %v729, %v748
  %v778 = vadd.f32 %v730, %v750
  %v779 = vadd.f32 %v731, %v752
  %v780 = vadd.f32 %v732, %v754
  %v781 = vadd.f32 %v733, %v756
  %v782 = vadd.f32 %v734, %v758
  %v783 = vadd.f32 %v735, %v760
  %v784 = vadd.f32 %v736, %v762
  %v785 = vadd.f32 %v737, %v764
  %v786 = vadd.f32 %v738, %v766
  %v787 = vadd.f32 %v739, %v768
  %v788 = vadd.f32 %v740, %v770
  %v789 = vadd.f32 %v741, %v772
  %v790 = vadd.f32 %v742, %v774
  %vm791 = vcmask 7168
  %792 = vst.msk [vmem:[#allocation4] sm:$0xff] %vm791, %v775
  %793 = vst.msk [vmem:[#allocation4 + $0x8] sm:$0xff] %vm791, %v776
  %794 = vst.msk [vmem:[#allocation4 + $0x10] sm:$0xff] %vm791, %v777
  %795 = vst.msk [vmem:[#allocation4 + $0x18] sm:$0xff] %vm791, %v778
  %796 = vst.msk [vmem:[#allocation4 + $0x20] sm:$0xff] %vm791, %v779
  %797 = vst.msk [vmem:[#allocation4 + $0x28] sm:$0xff] %vm791, %v780
  %798 = vst.msk [vmem:[#allocation4 + $0x30] sm:$0xff] %vm791, %v781
  %799 = vst.msk [vmem:[#allocation4 + $0x38] sm:$0xff] %vm791, %v782
  %800 = vst.msk [vmem:[#allocation4 + $0x40] sm:$0xff] %vm791, %v783
  %801 = vst.msk [vmem:[#allocation4 + $0x48] sm:$0xff] %vm791, %v784
  %802 = vst.msk [vmem:[#allocation4 + $0x50] sm:$0xff] %vm791, %v785
  %803 = vst.msk [vmem:[#allocation4 + $0x58] sm:$0xff] %vm791, %v786
  %804 = vst.msk [vmem:[#allocation4 + $0x60] sm:$0xff] %vm791, %v787
  %805 = vst.msk [vmem:[#allocation4 + $0x68] sm:$0xff] %vm791, %v788
  %806 = vst.msk [vmem:[#allocation4 + $0x70] sm:$0xff] %vm791, %v789
  %807 = vst.msk [vmem:[#allocation4 + $0x78] sm:$0xff] %vm791, %v790
  %v808 = vld [vmem:[#allocation5] sm:$0xff]
  %v809 = vld [vmem:[#allocation5 + $0x8] sm:$0xff]
  %v810 = vld [vmem:[#allocation5 + $0x10] sm:$0xff]
  %v811 = vld [vmem:[#allocation5 + $0x18] sm:$0xff]
  %v812 = vld [vmem:[#allocation5 + $0x20] sm:$0xff]
  %v813 = vld [vmem:[#allocation5 + $0x28] sm:$0xff]
  %v814 = vld [vmem:[#allocation5 + $0x30] sm:$0xff]
  %v815 = vld [vmem:[#allocation5 + $0x38] sm:$0xff]
  %v816 = vld [vmem:[#allocation5 + $0x40] sm:$0xff]
  %v817 = vld [vmem:[#allocation5 + $0x48] sm:$0xff]
  %v818 = vld [vmem:[#allocation5 + $0x50] sm:$0xff]
  %v819 = vld [vmem:[#allocation5 + $0x58] sm:$0xff]
  %v820 = vld [vmem:[#allocation5 + $0x60] sm:$0xff]
  %v821 = vld [vmem:[#allocation5 + $0x68] sm:$0xff]
  %v822 = vld [vmem:[#allocation5 + $0x70] sm:$0xff]
  %v823 = vld [vmem:[#allocation5 + $0x78] sm:$0xff]
  %825 = vset.pattern.permute.xlu0 0
  %826 = vperm.xlu0 %825, %v552
  %v827 = vpop.permute.xlu0 %826
  %830 = vset.pattern.permute.xlu0 0
  %831 = vperm.xlu0 %830, %v554
  %v832 = vpop.permute.xlu0 %831
  %835 = vset.pattern.permute.xlu0 0
  %836 = vperm.xlu0 %835, %v556
  %v837 = vpop.permute.xlu0 %836
  %840 = vset.pattern.permute.xlu0 0
  %841 = vperm.xlu0 %840, %v558
  %v842 = vpop.permute.xlu0 %841
  %845 = vset.pattern.permute.xlu0 0
  %846 = vperm.xlu0 %845, %v560
  %v847 = vpop.permute.xlu0 %846
  %850 = vset.pattern.permute.xlu0 0
  %851 = vperm.xlu0 %850, %v562
  %v852 = vpop.permute.xlu0 %851
  %855 = vset.pattern.permute.xlu0 0
  %856 = vperm.xlu0 %855, %v564
  %v857 = vpop.permute.xlu0 %856
  %860 = vset.pattern.permute.xlu0 0
  %861 = vperm.xlu0 %860, %v566
  %v862 = vpop.permute.xlu0 %861
  %865 = vset.pattern.permute.xlu0 0
  %866 = vperm.xlu0 %865, %v568
  %v867 = vpop.permute.xlu0 %866
  %870 = vset.pattern.permute.xlu0 0
  %871 = vperm.xlu0 %870, %v570
  %v872 = vpop.permute.xlu0 %871
  %875 = vset.pattern.permute.xlu0 0
  %876 = vperm.xlu0 %875, %v572
  %v877 = vpop.permute.xlu0 %876
  %880 = vset.pattern.permute.xlu0 0
  %881 = vperm.xlu0 %880, %v574
  %v882 = vpop.permute.xlu0 %881
  %885 = vset.pattern.permute.xlu0 0
  %886 = vperm.xlu0 %885, %v576
  %v887 = vpop.permute.xlu0 %886
  %890 = vset.pattern.permute.xlu0 0
  %891 = vperm.xlu0 %890, %v578
  %v892 = vpop.permute.xlu0 %891
  %895 = vset.pattern.permute.xlu0 0
  %896 = vperm.xlu0 %895, %v580
  %v897 = vpop.permute.xlu0 %896
  %900 = vset.pattern.permute.xlu0 0
  %901 = vperm.xlu0 %900, %v582
  %v902 = vpop.permute.xlu0 %901
  %v904 = vmul.f32 %v827, %v808
  %v905 = vmul.f32 %v832, %v809
  %v906 = vmul.f32 %v837, %v810
  %v907 = vmul.f32 %v842, %v811
  %v908 = vmul.f32 %v847, %v812
  %v909 = vmul.f32 %v852, %v813
  %v910 = vmul.f32 %v857, %v814
  %v911 = vmul.f32 %v862, %v815
  %v912 = vmul.f32 %v867, %v816
  %v913 = vmul.f32 %v872, %v817
  %v914 = vmul.f32 %v877, %v818
  %v915 = vmul.f32 %v882, %v819
  %v916 = vmul.f32 %v887, %v820
  %v917 = vmul.f32 %v892, %v821
  %v918 = vmul.f32 %v897, %v822
  %v919 = vmul.f32 %v902, %v823
  %v920 = vpack.c.bf16 %v682, %v680
  %v921 = vpack.c.bf16 %v686, %v684
  %v922 = vpack.c.bf16 %v690, %v688
  %v923 = vpack.c.bf16 %v694, %v692
  %v924 = vpack.c.bf16 %v698, %v696
  %v925 = vpack.c.bf16 %v702, %v700
  %v926 = vpack.c.bf16 %v706, %v704
  %v927 = vpack.c.bf16 %v710, %v708
  %v944 = vunpack.c.l.b16 %v225
  %v945 = vunpack.c.l.b16 %v226
  %v946 = vunpack.c.l.b16 %v227
  %v947 = vunpack.c.l.b16 %v228
  %v948 = vunpack.c.l.b16 %v229
  %v949 = vunpack.c.l.b16 %v230
  %v950 = vunpack.c.l.b16 %v231
  %v951 = vunpack.c.l.b16 %v232
  %v952 = vunpack.c.l.b16 %v233
  %v953 = vunpack.c.l.b16 %v234
  %v954 = vunpack.c.l.b16 %v235
  %v955 = vunpack.c.l.b16 %v236
  %v956 = vunpack.c.l.b16 %v237
  %v957 = vunpack.c.l.b16 %v238
  %v958 = vunpack.c.l.b16 %v239
  %v959 = vunpack.c.l.b16 %v240
  %v960 = vpack.c.b16 %v945, %v944
  %v961 = vpack.c.b16 %v947, %v946
  %v962 = vpack.c.b16 %v949, %v948
  %v963 = vpack.c.b16 %v951, %v950
  %v964 = vpack.c.b16 %v953, %v952
  %v965 = vpack.c.b16 %v955, %v954
  %v966 = vpack.c.b16 %v957, %v956
  %v967 = vpack.c.b16 %v959, %v958
  %976 = vmatpush.bf16.msra.mxu0 %v967
  %977 = vmatpush.bf16.msra.mxu0 %v966
  %978 = vmatpush.bf16.msra.mxu0 %v965
  %979 = vmatpush.bf16.msra.mxu0 %v964
  %980 = vmatpush.bf16.msra.mxu0 %v963
  %981 = vmatpush.bf16.msra.mxu0 %v962
  %982 = vmatpush.bf16.msra.mxu0 %v961
  %983 = vmatpush.bf16.msra.mxu0 %v960
  %984 = vmatmul.bf16.gmra.mxu0 %v920
  %v985 = vpop.f32.mrf.mxu0
  %v986 = vadd.f32 0.0, %v985
  %v987 = vpop.f32.mrf.mxu0
  %v988 = vadd.f32 0.0, %v987
  %989 = vmatmul.bf16.gmra.mxu0 %v921
  %v990 = vpop.f32.mrf.mxu0
  %v991 = vadd.f32 0.0, %v990
  %v992 = vpop.f32.mrf.mxu0
  %v993 = vadd.f32 0.0, %v992
  %994 = vmatmul.bf16.gmra.mxu0 %v922
  %v995 = vpop.f32.mrf.mxu0
  %v996 = vadd.f32 0.0, %v995
  %v997 = vpop.f32.mrf.mxu0
  %v998 = vadd.f32 0.0, %v997
  %999 = vmatmul.bf16.gmra.mxu0 %v923
  %v1000 = vpop.f32.mrf.mxu0
  %v1001 = vadd.f32 0.0, %v1000
  %v1002 = vpop.f32.mrf.mxu0
  %v1003 = vadd.f32 0.0, %v1002
  %1004 = vmatmul.bf16.gmra.mxu0 %v924
  %v1005 = vpop.f32.mrf.mxu0
  %v1006 = vadd.f32 0.0, %v1005
  %v1007 = vpop.f32.mrf.mxu0
  %v1008 = vadd.f32 0.0, %v1007
  %1009 = vmatmul.bf16.gmra.mxu0 %v925
  %v1010 = vpop.f32.mrf.mxu0
  %v1011 = vadd.f32 0.0, %v1010
  %v1012 = vpop.f32.mrf.mxu0
  %v1013 = vadd.f32 0.0, %v1012
  %1014 = vmatmul.bf16.gmra.mxu0 %v926
  %v1015 = vpop.f32.mrf.mxu0
  %v1016 = vadd.f32 0.0, %v1015
  %v1017 = vpop.f32.mrf.mxu0
  %v1018 = vadd.f32 0.0, %v1017
  %1019 = vmatmul.bf16.gmra.mxu0 %v927
  %v1020 = vpop.f32.mrf.mxu0
  %v1021 = vadd.f32 0.0, %v1020
  %v1022 = vpop.f32.mrf.mxu0
  %v1023 = vadd.f32 0.0, %v1022
  %1024 = vdwg.mxu0
  %v1025 = vadd.f32 %v904, %v986
  %v1026 = vadd.f32 %v905, %v988
  %v1027 = vadd.f32 %v906, %v991
  %v1028 = vadd.f32 %v907, %v993
  %v1029 = vadd.f32 %v908, %v996
  %v1030 = vadd.f32 %v909, %v998
  %v1031 = vadd.f32 %v910, %v1001
  %v1032 = vadd.f32 %v911, %v1003
  %v1033 = vadd.f32 %v912, %v1006
  %v1034 = vadd.f32 %v913, %v1008
  %v1035 = vadd.f32 %v914, %v1011
  %v1036 = vadd.f32 %v915, %v1013
  %v1037 = vadd.f32 %v916, %v1016
  %v1038 = vadd.f32 %v917, %v1018
  %v1039 = vadd.f32 %v918, %v1021
  %v1040 = vadd.f32 %v919, %v1023
  %1041 = vst [vmem:[#allocation5] sm:$0xff] %v1025
  %1042 = vst [vmem:[#allocation5 + $0x8] sm:$0xff] %v1026
  %1043 = vst [vmem:[#allocation5 + $0x10] sm:$0xff] %v1027
  %1044 = vst [vmem:[#allocation5 + $0x18] sm:$0xff] %v1028
  %1045 = vst [vmem:[#allocation5 + $0x20] sm:$0xff] %v1029
  %1046 = vst [vmem:[#allocation5 + $0x28] sm:$0xff] %v1030
  %1047 = vst [vmem:[#allocation5 + $0x30] sm:$0xff] %v1031
  %1048 = vst [vmem:[#allocation5 + $0x38] sm:$0xff] %v1032
  %1049 = vst [vmem:[#allocation5 + $0x40] sm:$0xff] %v1033
  %1050 = vst [vmem:[#allocation5 + $0x48] sm:$0xff] %v1034
  %1051 = vst [vmem:[#allocation5 + $0x50] sm:$0xff] %v1035
  %1052 = vst [vmem:[#allocation5 + $0x58] sm:$0xff] %v1036
  %1053 = vst [vmem:[#allocation5 + $0x60] sm:$0xff] %v1037
  %1054 = vst [vmem:[#allocation5 + $0x68] sm:$0xff] %v1038
  %1055 = vst [vmem:[#allocation5 + $0x70] sm:$0xff] %v1039
  %1056 = vst [vmem:[#allocation5 + $0x78] sm:$0xff] %v1040
  %1057 = vst.msk [vmem:[#allocation3] sm:$0xff] %vm791, %v519
  %1058 = vst.msk [vmem:[#allocation3 + $0x8] sm:$0xff] %vm791, %v520
  %1059 = vst.msk [vmem:[#allocation3 + $0x10] sm:$0xff] %vm791, %v521
  %1060 = vst.msk [vmem:[#allocation3 + $0x18] sm:$0xff] %vm791, %v522
  %1061 = vst.msk [vmem:[#allocation3 + $0x20] sm:$0xff] %vm791, %v523
  %1062 = vst.msk [vmem:[#allocation3 + $0x28] sm:$0xff] %vm791, %v524
  %1063 = vst.msk [vmem:[#allocation3 + $0x30] sm:$0xff] %vm791, %v525
  %1064 = vst.msk [vmem:[#allocation3 + $0x38] sm:$0xff] %vm791, %v526
  %1065 = vst.msk [vmem:[#allocation3 + $0x40] sm:$0xff] %vm791, %v527
  %1066 = vst.msk [vmem:[#allocation3 + $0x48] sm:$0xff] %vm791, %v528
  %1067 = vst.msk [vmem:[#allocation3 + $0x50] sm:$0xff] %vm791, %v529
  %1068 = vst.msk [vmem:[#allocation3 + $0x58] sm:$0xff] %vm791, %v530
  %1069 = vst.msk [vmem:[#allocation3 + $0x60] sm:$0xff] %vm791, %v531
  %1070 = vst.msk [vmem:[#allocation3 + $0x68] sm:$0xff] %vm791, %v532
  %1071 = vst.msk [vmem:[#allocation3 + $0x70] sm:$0xff] %vm791, %v533
  %1072 = vst.msk [vmem:[#allocation3 + $0x78] sm:$0xff] %vm791, %v534
  // Predicated region
  $region26: #{spgat_forward.5} parent=0 // pred_check
    %p1073 = pneg %p72
  $region27: #{spgat_forward.5} parent=0 // pred_check_branch
    %1075 = sbr.rel (%p1073) target = $region29
  $region28: #{spgat_forward.5} parent=0 // pred_region
    %v1076 = vld [vmem:[#allocation5] sm:$0xff]
    %v1077 = vld [vmem:[#allocation5 + $0x8] sm:$0xff]
    %v1078 = vld [vmem:[#allocation5 + $0x10] sm:$0xff]
    %v1079 = vld [vmem:[#allocation5 + $0x18] sm:$0xff]
    %v1080 = vld [vmem:[#allocation5 + $0x20] sm:$0xff]
    %v1081 = vld [vmem:[#allocation5 + $0x28] sm:$0xff]
    %v1082 = vld [vmem:[#allocation5 + $0x30] sm:$0xff]
    %v1083 = vld [vmem:[#allocation5 + $0x38] sm:$0xff]
    %v1084 = vld [vmem:[#allocation5 + $0x40] sm:$0xff]
    %v1085 = vld [vmem:[#allocation5 + $0x48] sm:$0xff]
    %v1086 = vld [vmem:[#allocation5 + $0x50] sm:$0xff]
    %v1087 = vld [vmem:[#allocation5 + $0x58] sm:$0xff]
    %v1088 = vld [vmem:[#allocation5 + $0x60] sm:$0xff]
    %v1089 = vld [vmem:[#allocation5 + $0x68] sm:$0xff]
    %v1090 = vld [vmem:[#allocation5 + $0x70] sm:$0xff]
    %v1091 = vld [vmem:[#allocation5 + $0x78] sm:$0xff]
    %v1092 = vld [vmem:[#allocation4] sm:$0xff]
    %v1093 = vld [vmem:[#allocation4 + $0x8] sm:$0xff]
    %v1094 = vld [vmem:[#allocation4 + $0x10] sm:$0xff]
    %v1095 = vld [vmem:[#allocation4 + $0x18] sm:$0xff]
    %v1096 = vld [vmem:[#allocation4 + $0x20] sm:$0xff]
    %v1097 = vld [vmem:[#allocation4 + $0x28] sm:$0xff]
    %v1098 = vld [vmem:[#allocation4 + $0x30] sm:$0xff]
    %v1099 = vld [vmem:[#allocation4 + $0x38] sm:$0xff]
    %v1100 = vld [vmem:[#allocation4 + $0x40] sm:$0xff]
    %v1101 = vld [vmem:[#allocation4 + $0x48] sm:$0xff]
    %v1102 = vld [vmem:[#allocation4 + $0x50] sm:$0xff]
    %v1103 = vld [vmem:[#allocation4 + $0x58] sm:$0xff]
    %v1104 = vld [vmem:[#allocation4 + $0x60] sm:$0xff]
    %v1105 = vld [vmem:[#allocation4 + $0x68] sm:$0xff]
    %v1106 = vld [vmem:[#allocation4 + $0x70] sm:$0xff]
    %v1107 = vld [vmem:[#allocation4 + $0x78] sm:$0xff]
    %v1108 = vrcp.pop %v1092
    %v1109 = vrcp.pop %v1093
    %v1110 = vrcp.pop %v1094
    %v1111 = vrcp.pop %v1095
    %v1112 = vrcp.pop %v1096
    %v1113 = vrcp.pop %v1097
    %v1114 = vrcp.pop %v1098
    %v1115 = vrcp.pop %v1099
    %v1116 = vrcp.pop %v1100
    %v1117 = vrcp.pop %v1101
    %v1118 = vrcp.pop %v1102
    %v1119 = vrcp.pop %v1103
    %v1120 = vrcp.pop %v1104
    %v1121 = vrcp.pop %v1105
    %v1122 = vrcp.pop %v1106
    %v1123 = vrcp.pop %v1107
    %1125 = vset.pattern.permute.xlu0 0
    %1126 = vperm.xlu0 %1125, %v1108
    %v1127 = vpop.permute.xlu0 %1126
    %1130 = vset.pattern.permute.xlu0 0
    %1131 = vperm.xlu0 %1130, %v1109
    %v1132 = vpop.permute.xlu0 %1131
    %1135 = vset.pattern.permute.xlu0 0
    %1136 = vperm.xlu0 %1135, %v1110
    %v1137 = vpop.permute.xlu0 %1136
    %1140 = vset.pattern.permute.xlu0 0
    %1141 = vperm.xlu0 %1140, %v1111
    %v1142 = vpop.permute.xlu0 %1141
    %1145 = vset.pattern.permute.xlu0 0
    %1146 = vperm.xlu0 %1145, %v1112
    %v1147 = vpop.permute.xlu0 %1146
    %1150 = vset.pattern.permute.xlu0 0
    %1151 = vperm.xlu0 %1150, %v1113
    %v1152 = vpop.permute.xlu0 %1151
    %1155 = vset.pattern.permute.xlu0 0
    %1156 = vperm.xlu0 %1155, %v1114
    %v1157 = vpop.permute.xlu0 %1156
    %1160 = vset.pattern.permute.xlu0 0
    %1161 = vperm.xlu0 %1160, %v1115
    %v1162 = vpop.permute.xlu0 %1161
    %1165 = vset.pattern.permute.xlu0 0
    %1166 = vperm.xlu0 %1165, %v1116
    %v1167 = vpop.permute.xlu0 %1166
    %1170 = vset.pattern.permute.xlu0 0
    %1171 = vperm.xlu0 %1170, %v1117
    %v1172 = vpop.permute.xlu0 %1171
    %1175 = vset.pattern.permute.xlu0 0
    %1176 = vperm.xlu0 %1175, %v1118
    %v1177 = vpop.permute.xlu0 %1176
    %1180 = vset.pattern.permute.xlu0 0
    %1181 = vperm.xlu0 %1180, %v1119
    %v1182 = vpop.permute.xlu0 %1181
    %1185 = vset.pattern.permute.xlu0 0
    %1186 = vperm.xlu0 %1185, %v1120
    %v1187 = vpop.permute.xlu0 %1186
    %1190 = vset.pattern.permute.xlu0 0
    %1191 = vperm.xlu0 %1190, %v1121
    %v1192 = vpop.permute.xlu0 %1191
    %1195 = vset.pattern.permute.xlu0 0
    %1196 = vperm.xlu0 %1195, %v1122
    %v1197 = vpop.permute.xlu0 %1196
    %1200 = vset.pattern.permute.xlu0 0
    %1201 = vperm.xlu0 %1200, %v1123
    %v1202 = vpop.permute.xlu0 %1201
    %v1204 = vmul.f32 %v1076, %v1127
    %v1205 = vmul.f32 %v1077, %v1132
    %v1206 = vmul.f32 %v1078, %v1137
    %v1207 = vmul.f32 %v1079, %v1142
    %v1208 = vmul.f32 %v1080, %v1147
    %v1209 = vmul.f32 %v1081, %v1152
    %v1210 = vmul.f32 %v1082, %v1157
    %v1211 = vmul.f32 %v1083, %v1162
    %v1212 = vmul.f32 %v1084, %v1167
    %v1213 = vmul.f32 %v1085, %v1172
    %v1214 = vmul.f32 %v1086, %v1177
    %v1215 = vmul.f32 %v1087, %v1182
    %v1216 = vmul.f32 %v1088, %v1187
    %v1217 = vmul.f32 %v1089, %v1192
    %v1218 = vmul.f32 %v1090, %v1197
    %v1219 = vmul.f32 %v1091, %v1202
    %vm1220 = vcmp.gt.f32.partialorder %v1204, 0.0
    %vm1221 = vcmp.gt.f32.partialorder %v1205, 0.0
    %vm1222 = vcmp.gt.f32.partialorder %v1206, 0.0
    %vm1223 = vcmp.gt.f32.partialorder %v1207, 0.0
    %vm1224 = vcmp.gt.f32.partialorder %v1208, 0.0
    %vm1225 = vcmp.gt.f32.partialorder %v1209, 0.0
    %vm1226 = vcmp.gt.f32.partialorder %v1210, 0.0
    %vm1227 = vcmp.gt.f32.partialorder %v1211, 0.0
    %vm1228 = vcmp.gt.f32.partialorder %v1212, 0.0
    %vm1229 = vcmp.gt.f32.partialorder %v1213, 0.0
    %vm1230 = vcmp.gt.f32.partialorder %v1214, 0.0
    %vm1231 = vcmp.gt.f32.partialorder %v1215, 0.0
    %vm1232 = vcmp.gt.f32.partialorder %v1216, 0.0
    %vm1233 = vcmp.gt.f32.partialorder %v1217, 0.0
    %vm1234 = vcmp.gt.f32.partialorder %v1218, 0.0
    %vm1235 = vcmp.gt.f32.partialorder %v1219, 0.0
    %v1236 = vmin.f32 %v1204, 0.0
    %v1237 = vmin.f32 %v1205, 0.0
    %v1238 = vmin.f32 %v1206, 0.0
    %v1239 = vmin.f32 %v1207, 0.0
    %v1240 = vmin.f32 %v1208, 0.0
    %v1241 = vmin.f32 %v1209, 0.0
    %v1242 = vmin.f32 %v1210, 0.0
    %v1243 = vmin.f32 %v1211, 0.0
    %v1244 = vmin.f32 %v1212, 0.0
    %v1245 = vmin.f32 %v1213, 0.0
    %v1246 = vmin.f32 %v1214, 0.0
    %v1247 = vmin.f32 %v1215, 0.0
    %v1248 = vmin.f32 %v1216, 0.0
    %v1249 = vmin.f32 %v1217, 0.0
    %v1250 = vmin.f32 %v1218, 0.0
    %v1251 = vmin.f32 %v1219, 0.0
    %v1252 = vmul.f32 %v1236, 1.442695
    %v1253 = vpow.pop %v1252
    %v1254 = vmul.f32 %v1237, 1.442695
    %v1255 = vpow.pop %v1254
    %v1256 = vmul.f32 %v1238, 1.442695
    %v1257 = vpow.pop %v1256
    %v1258 = vmul.f32 %v1239, 1.442695
    %v1259 = vpow.pop %v1258
    %v1260 = vmul.f32 %v1240, 1.442695
    %v1261 = vpow.pop %v1260
    %v1262 = vmul.f32 %v1241, 1.442695
    %v1263 = vpow.pop %v1262
    %v1264 = vmul.f32 %v1242, 1.442695
    %v1265 = vpow.pop %v1264
    %v1266 = vmul.f32 %v1243, 1.442695
    %v1267 = vpow.pop %v1266
    %v1268 = vmul.f32 %v1244, 1.442695
    %v1269 = vpow.pop %v1268
    %v1270 = vmul.f32 %v1245, 1.442695
    %v1271 = vpow.pop %v1270
    %v1272 = vmul.f32 %v1246, 1.442695
    %v1273 = vpow.pop %v1272
    %v1274 = vmul.f32 %v1247, 1.442695
    %v1275 = vpow.pop %v1274
    %v1276 = vmul.f32 %v1248, 1.442695
    %v1277 = vpow.pop %v1276
    %v1278 = vmul.f32 %v1249, 1.442695
    %v1279 = vpow.pop %v1278
    %v1280 = vmul.f32 %v1250, 1.442695
    %v1281 = vpow.pop %v1280
    %v1282 = vmul.f32 %v1251, 1.442695
    %v1283 = vpow.pop %v1282
    %v1284 = vsub.f32 %v1253, 1.0
    %v1285 = vsub.f32 %v1255, 1.0
    %v1286 = vsub.f32 %v1257, 1.0
    %v1287 = vsub.f32 %v1259, 1.0
    %v1288 = vsub.f32 %v1261, 1.0
    %v1289 = vsub.f32 %v1263, 1.0
    %v1290 = vsub.f32 %v1265, 1.0
    %v1291 = vsub.f32 %v1267, 1.0
    %v1292 = vsub.f32 %v1269, 1.0
    %v1293 = vsub.f32 %v1271, 1.0
    %v1294 = vsub.f32 %v1273, 1.0
    %v1295 = vsub.f32 %v1275, 1.0
    %v1296 = vsub.f32 %v1277, 1.0
    %v1297 = vsub.f32 %v1279, 1.0
    %v1298 = vsub.f32 %v1281, 1.0
    %v1299 = vsub.f32 %v1283, 1.0
    %v1300 = vsel %vm1220, %v1204, %v1284
    %v1301 = vsel %vm1221, %v1205, %v1285
    %v1302 = vsel %vm1222, %v1206, %v1286
    %v1303 = vsel %vm1223, %v1207, %v1287
    %v1304 = vsel %vm1224, %v1208, %v1288
    %v1305 = vsel %vm1225, %v1209, %v1289
    %v1306 = vsel %vm1226, %v1210, %v1290
    %v1307 = vsel %vm1227, %v1211, %v1291
    %v1308 = vsel %vm1228, %v1212, %v1292
    %v1309 = vsel %vm1229, %v1213, %v1293
    %v1310 = vsel %vm1230, %v1214, %v1294
    %v1311 = vsel %vm1231, %v1215, %v1295
    %v1312 = vsel %vm1232, %v1216, %v1296
    %v1313 = vsel %vm1233, %v1217, %v1297
    %v1314 = vsel %vm1234, %v1218, %v1298
    %v1315 = vsel %vm1235, %v1219, %v1299
    %v1316 = vlaneseq
    %v1317 = vand.u32 %v1316, 127
    %vm1318 = vcmp.lt.s32.totalorder %v1317, 8
    %v1319 = vsel %vm1318, %v1300, -1e+30
    %v1320 = vsel %vm1318, %v1301, -1e+30
    %v1321 = vsel %vm1318, %v1302, -1e+30
    %v1322 = vsel %vm1318, %v1303, -1e+30
    %v1323 = vsel %vm1318, %v1304, -1e+30
    %v1324 = vsel %vm1318, %v1305, -1e+30
    %v1325 = vsel %vm1318, %v1306, -1e+30
    %v1326 = vsel %vm1318, %v1307, -1e+30
    %v1327 = vsel %vm1318, %v1308, -1e+30
    %v1328 = vsel %vm1318, %v1309, -1e+30
    %v1329 = vsel %vm1318, %v1310, -1e+30
    %v1330 = vsel %vm1318, %v1311, -1e+30
    %v1331 = vsel %vm1318, %v1312, -1e+30
    %v1332 = vsel %vm1318, %v1313, -1e+30
    %v1333 = vsel %vm1318, %v1314, -1e+30
    %v1334 = vsel %vm1318, %v1315, -1e+30
    %1335 = vmax.xlane.f32.xlu0 %v1319
    %v1336 = vpop.xlane.xlu0 %1335
    %1337 = vmax.xlane.f32.xlu0 %v1320
    %v1338 = vpop.xlane.xlu0 %1337
    %1339 = vmax.xlane.f32.xlu0 %v1321
    %v1340 = vpop.xlane.xlu0 %1339
    %1341 = vmax.xlane.f32.xlu0 %v1322
    %v1342 = vpop.xlane.xlu0 %1341
    %1343 = vmax.xlane.f32.xlu0 %v1323
    %v1344 = vpop.xlane.xlu0 %1343
    %1345 = vmax.xlane.f32.xlu0 %v1324
    %v1346 = vpop.xlane.xlu0 %1345
    %1347 = vmax.xlane.f32.xlu0 %v1325
    %v1348 = vpop.xlane.xlu0 %1347
    %1349 = vmax.xlane.f32.xlu0 %v1326
    %v1350 = vpop.xlane.xlu0 %1349
    %1351 = vmax.xlane.f32.xlu0 %v1327
    %v1352 = vpop.xlane.xlu0 %1351
    %1353 = vmax.xlane.f32.xlu0 %v1328
    %v1354 = vpop.xlane.xlu0 %1353
    %1355 = vmax.xlane.f32.xlu0 %v1329
    %v1356 = vpop.xlane.xlu0 %1355
    %1357 = vmax.xlane.f32.xlu0 %v1330
    %v1358 = vpop.xlane.xlu0 %1357
    %1359 = vmax.xlane.f32.xlu0 %v1331
    %v1360 = vpop.xlane.xlu0 %1359
    %1361 = vmax.xlane.f32.xlu0 %v1332
    %v1362 = vpop.xlane.xlu0 %1361
    %1363 = vmax.xlane.f32.xlu0 %v1333
    %v1364 = vpop.xlane.xlu0 %1363
    %1365 = vmax.xlane.f32.xlu0 %v1334
    %v1366 = vpop.xlane.xlu0 %1365
    %v1367 = vsub.f32 %v1319, %v1336
    %v1368 = vsub.f32 %v1320, %v1338
    %v1369 = vsub.f32 %v1321, %v1340
    %v1370 = vsub.f32 %v1322, %v1342
    %v1371 = vsub.f32 %v1323, %v1344
    %v1372 = vsub.f32 %v1324, %v1346
    %v1373 = vsub.f32 %v1325, %v1348
    %v1374 = vsub.f32 %v1326, %v1350
    %v1375 = vsub.f32 %v1327, %v1352
    %v1376 = vsub.f32 %v1328, %v1354
    %v1377 = vsub.f32 %v1329, %v1356
    %v1378 = vsub.f32 %v1330, %v1358
    %v1379 = vsub.f32 %v1331, %v1360
    %v1380 = vsub.f32 %v1332, %v1362
    %v1381 = vsub.f32 %v1333, %v1364
    %v1382 = vsub.f32 %v1334, %v1366
    %v1383 = vmul.f32 %v1367, 1.442695
    %v1384 = vpow.pop %v1383
    %v1385 = vmul.f32 %v1368, 1.442695
    %v1386 = vpow.pop %v1385
    %v1387 = vmul.f32 %v1369, 1.442695
    %v1388 = vpow.pop %v1387
    %v1389 = vmul.f32 %v1370, 1.442695
    %v1390 = vpow.pop %v1389
    %v1391 = vmul.f32 %v1371, 1.442695
    %v1392 = vpow.pop %v1391
    %v1393 = vmul.f32 %v1372, 1.442695
    %v1394 = vpow.pop %v1393
    %v1395 = vmul.f32 %v1373, 1.442695
    %v1396 = vpow.pop %v1395
    %v1397 = vmul.f32 %v1374, 1.442695
    %v1398 = vpow.pop %v1397
    %v1399 = vmul.f32 %v1375, 1.442695
    %v1400 = vpow.pop %v1399
    %v1401 = vmul.f32 %v1376, 1.442695
    %v1402 = vpow.pop %v1401
    %v1403 = vmul.f32 %v1377, 1.442695
    %v1404 = vpow.pop %v1403
    %v1405 = vmul.f32 %v1378, 1.442695
    %v1406 = vpow.pop %v1405
    %v1407 = vmul.f32 %v1379, 1.442695
    %v1408 = vpow.pop %v1407
    %v1409 = vmul.f32 %v1380, 1.442695
    %v1410 = vpow.pop %v1409
    %v1411 = vmul.f32 %v1381, 1.442695
    %v1412 = vpow.pop %v1411
    %v1413 = vmul.f32 %v1382, 1.442695
    %v1414 = vpow.pop %v1413
    %v1415 = vsel %vm1318, %v1384, 0.0
    %v1416 = vsel %vm1318, %v1386, 0.0
    %v1417 = vsel %vm1318, %v1388, 0.0
    %v1418 = vsel %vm1318, %v1390, 0.0
    %v1419 = vsel %vm1318, %v1392, 0.0
    %v1420 = vsel %vm1318, %v1394, 0.0
    %v1421 = vsel %vm1318, %v1396, 0.0
    %v1422 = vsel %vm1318, %v1398, 0.0
    %v1423 = vsel %vm1318, %v1400, 0.0
    %v1424 = vsel %vm1318, %v1402, 0.0
    %v1425 = vsel %vm1318, %v1404, 0.0
    %v1426 = vsel %vm1318, %v1406, 0.0
    %v1427 = vsel %vm1318, %v1408, 0.0
    %v1428 = vsel %vm1318, %v1410, 0.0
    %v1429 = vsel %vm1318, %v1412, 0.0
    %v1430 = vsel %vm1318, %v1414, 0.0
    %1431 = vadd.xlane.f32.xlu0 %v1415
    %v1432 = vpop.xlane.xlu0 %1431
    %1433 = vadd.xlane.f32.xlu0 %v1416
    %v1434 = vpop.xlane.xlu0 %1433
    %1435 = vadd.xlane.f32.xlu0 %v1417
    %v1436 = vpop.xlane.xlu0 %1435
    %1437 = vadd.xlane.f32.xlu0 %v1418
    %v1438 = vpop.xlane.xlu0 %1437
    %1439 = vadd.xlane.f32.xlu0 %v1419
    %v1440 = vpop.xlane.xlu0 %1439
    %1441 = vadd.xlane.f32.xlu0 %v1420
    %v1442 = vpop.xlane.xlu0 %1441
    %1443 = vadd.xlane.f32.xlu0 %v1421
    %v1444 = vpop.xlane.xlu0 %1443
    %1445 = vadd.xlane.f32.xlu0 %v1422
    %v1446 = vpop.xlane.xlu0 %1445
    %1447 = vadd.xlane.f32.xlu0 %v1423
    %v1448 = vpop.xlane.xlu0 %1447
    %1449 = vadd.xlane.f32.xlu0 %v1424
    %v1450 = vpop.xlane.xlu0 %1449
    %1451 = vadd.xlane.f32.xlu0 %v1425
    %v1452 = vpop.xlane.xlu0 %1451
    %1453 = vadd.xlane.f32.xlu0 %v1426
    %v1454 = vpop.xlane.xlu0 %1453
    %1455 = vadd.xlane.f32.xlu0 %v1427
    %v1456 = vpop.xlane.xlu0 %1455
    %1457 = vadd.xlane.f32.xlu0 %v1428
    %v1458 = vpop.xlane.xlu0 %1457
    %1459 = vadd.xlane.f32.xlu0 %v1429
    %v1460 = vpop.xlane.xlu0 %1459
    %1461 = vadd.xlane.f32.xlu0 %v1430
    %v1462 = vpop.xlane.xlu0 %1461
    %v1463 = vlog2.pop %v1432
    %v1464 = vmul.f32 %v1463, 0.6931472
    %v1465 = vlog2.pop %v1434
    %v1466 = vmul.f32 %v1465, 0.6931472
    %v1467 = vlog2.pop %v1436
    %v1468 = vmul.f32 %v1467, 0.6931472
    %v1469 = vlog2.pop %v1438
    %v1470 = vmul.f32 %v1469, 0.6931472
    %v1471 = vlog2.pop %v1440
    %v1472 = vmul.f32 %v1471, 0.6931472
    %v1473 = vlog2.pop %v1442
    %v1474 = vmul.f32 %v1473, 0.6931472
    %v1475 = vlog2.pop %v1444
    %v1476 = vmul.f32 %v1475, 0.6931472
    %v1477 = vlog2.pop %v1446
    %v1478 = vmul.f32 %v1477, 0.6931472
    %v1479 = vlog2.pop %v1448
    %v1480 = vmul.f32 %v1479, 0.6931472
    %v1481 = vlog2.pop %v1450
    %v1482 = vmul.f32 %v1481, 0.6931472
    %v1483 = vlog2.pop %v1452
    %v1484 = vmul.f32 %v1483, 0.6931472
    %v1485 = vlog2.pop %v1454
    %v1486 = vmul.f32 %v1485, 0.6931472
    %v1487 = vlog2.pop %v1456
    %v1488 = vmul.f32 %v1487, 0.6931472
    %v1489 = vlog2.pop %v1458
    %v1490 = vmul.f32 %v1489, 0.6931472
    %v1491 = vlog2.pop %v1460
    %v1492 = vmul.f32 %v1491, 0.6931472
    %v1493 = vlog2.pop %v1462
    %v1494 = vmul.f32 %v1493, 0.6931472
    %v1495 = vsub.f32 %v1367, %v1464
    %v1496 = vsub.f32 %v1368, %v1466
    %v1497 = vsub.f32 %v1369, %v1468
    %v1498 = vsub.f32 %v1370, %v1470
    %v1499 = vsub.f32 %v1371, %v1472
    %v1500 = vsub.f32 %v1372, %v1474
    %v1501 = vsub.f32 %v1373, %v1476
    %v1502 = vsub.f32 %v1374, %v1478
    %v1503 = vsub.f32 %v1375, %v1480
    %v1504 = vsub.f32 %v1376, %v1482
    %v1505 = vsub.f32 %v1377, %v1484
    %v1506 = vsub.f32 %v1378, %v1486
    %v1507 = vsub.f32 %v1379, %v1488
    %v1508 = vsub.f32 %v1380, %v1490
    %v1509 = vsub.f32 %v1381, %v1492
    %v1510 = vsub.f32 %v1382, %v1494
    %1511 = vst [vmem:[%s5] sm:$0xff] %v1495
    %1512 = vst [vmem:[%s5 + $0x8] sm:$0xff] %v1496
    %1513 = vst [vmem:[%s5 + $0x10] sm:$0xff] %v1497
    %1514 = vst [vmem:[%s5 + $0x18] sm:$0xff] %v1498
    %1515 = vst [vmem:[%s5 + $0x20] sm:$0xff] %v1499
    %1516 = vst [vmem:[%s5 + $0x28] sm:$0xff] %v1500
    %1517 = vst [vmem:[%s5 + $0x30] sm:$0xff] %v1501
    %1518 = vst [vmem:[%s5 + $0x38] sm:$0xff] %v1502
    %1519 = vst [vmem:[%s5 + $0x40] sm:$0xff] %v1503
    %1520 = vst [vmem:[%s5 + $0x48] sm:$0xff] %v1504
    %1521 = vst [vmem:[%s5 + $0x50] sm:$0xff] %v1505
    %1522 = vst [vmem:[%s5 + $0x58] sm:$0xff] %v1506
    %1523 = vst [vmem:[%s5 + $0x60] sm:$0xff] %v1507
    %1524 = vst [vmem:[%s5 + $0x68] sm:$0xff] %v1508
    %1525 = vst [vmem:[%s5 + $0x70] sm:$0xff] %v1509
    %1526 = vst [vmem:[%s5 + $0x78] sm:$0xff] %v1510
  $region29: #{spgat_forward.5} parent=0 // pred_fallthru
    _
  // Predicated region
  $region30: #{spgat_forward.5} parent=0 // pred_check
    _
  $region31: #{spgat_forward.5} parent=0 // pred_check_branch
    %1528 = sbr.rel (0) target = $region33
  $region32: #{spgat_forward.5} parent=0 // pred_region
    _
  $region33: #{spgat_forward.5} parent=0 // pred_fallthru
    _
  // Predicated region
  $region34: #{spgat_forward.5} parent=0 // pred_check
    _
  $region35: #{spgat_forward.5} parent=0 // pred_check_branch
    %1530 = sbr.rel (0) target = $region37
  $region36: #{spgat_forward.5} parent=0 // pred_region
    _
  $region37: #{spgat_forward.5} parent=0 // pred_fallthru
    _

// kernel: spgat_forward.4
$region0: #{spgat_forward.4}
  #allocation0 [shape = 'u32[]', space=smem, size = 0x4, offset = 0x4, fixed_abs, tag = 'smem constant byte address 0x4 - core index']
  #allocation1 [shape = 'u32[72,128]{1,0:T(1,128)}', space=vmem, size = 0x9000, scoped, tag = 'internal scratch']
  #allocation2 [shape = 'f32[2,128,1]{2,1,0:T(8,128)}', space=vmem, size = 0x20000, scoped, tag = 'scratch operand']
  #allocation3 [shape = 'f32[2,128,1]{2,1,0:T(8,128)}', space=vmem, size = 0x20000, scoped, tag = 'scratch operand']
  #allocation4 [shape = 'f32[2,128,1]{2,1,0:T(8,128)}', space=vmem, size = 0x20000, scoped, tag = 'scratch operand']
  #allocation5 [shape = 'f32[2,128,128]{2,1,0:T(8,128)}', space=vmem, size = 0x20000, scoped, tag = 'scratch operand']
  %s0 = inlined_call_operand.vmem [shape: s8[128,128], index: 0, kind: input, shape index: {}]
  %s1 = inlined_call_operand.vmem [shape: bf16[128,256], index: 1, kind: input, shape index: {}, may-alias: {1,2}]
  %s2 = inlined_call_operand.vmem [shape: bf16[128,256], index: 2, kind: input, shape index: {}, may-alias: {1,2}]
  %s3 = inlined_call_operand.vmem [shape: f32[2,128], index: 3, kind: input, shape index: {}]
  %s4 = inlined_call_operand.vmem [shape: f32[2,128], index: 4, kind: input, shape index: {}]
  %s5 = inlined_call_operand.vmem [shape: bf16[2,128,128], index: 5, kind: input, shape index: {}]
  %s6 = inlined_call_operand.vmem [shape: bf16[128,128], index: 6, kind: output, shape index: {}]
  %s7 = sld [smem:[#allocation0]]
  $region42: #{spgat_forward.4} parent=0
    _
  %s9 = ssub.s32 1, %s7
  %s10 = scalar_select 0, %s9, %s7
  // Predicated region
  $region2: #{spgat_forward.4} parent=0 // pred_check
    _
  $region3: #{spgat_forward.4} parent=0 // pred_check_branch
    %12 = sbr.rel (0) target = $region5
  $region4: #{spgat_forward.4} parent=0 // pred_region
    _
  $region5: #{spgat_forward.4} parent=0 // pred_fallthru
    _
  // Predicated region
  $region6: #{spgat_forward.4} parent=0 // pred_check
    _
  $region7: #{spgat_forward.4} parent=0 // pred_check_branch
    %14 = sbr.rel (0) target = $region9
  $region8: #{spgat_forward.4} parent=0 // pred_region
    _
  $region9: #{spgat_forward.4} parent=0 // pred_fallthru
    _
  // Predicated region
  $region10: #{spgat_forward.4} parent=0 // pred_check
    _
  $region11: #{spgat_forward.4} parent=0 // pred_check_branch
    %16 = sbr.rel (0) target = $region13
  $region12: #{spgat_forward.4} parent=0 // pred_region
    _
  $region13: #{spgat_forward.4} parent=0 // pred_fallthru
    _
  // Predicated region
  $region14: #{spgat_forward.4} parent=0 // pred_check
    _
  $region15: #{spgat_forward.4} parent=0 // pred_check_branch
    %18 = sbr.rel (0) target = $region17
  $region16: #{spgat_forward.4} parent=0 // pred_region
    _
  $region17: #{spgat_forward.4} parent=0 // pred_fallthru
    _
  // Predicated region
  $region18: #{spgat_forward.4} parent=0 // pred_check
    _
  $region19: #{spgat_forward.4} parent=0 // pred_check_branch
    %20 = sbr.rel (0) target = $region21
  $region20: #{spgat_forward.4} parent=0 // pred_region
    _
  $region21: #{spgat_forward.4} parent=0 // pred_fallthru
    _
  // Predicated region
  $region22: #{spgat_forward.4} parent=0 // pred_check
    _
  $region23: #{spgat_forward.4} parent=0 // pred_check_branch
    %22 = sbr.rel (0) target = $region25
  $region24: #{spgat_forward.4} parent=0 // pred_region
    _
  $region25: #{spgat_forward.4} parent=0 // pred_fallthru
    _
  %v23 = vld [vmem:[%s0] sm:$0xff]
  %v24 = vld [vmem:[%s0 + $0x8] sm:$0xff]
  %v25 = vld [vmem:[%s0 + $0x10] sm:$0xff]
  %v26 = vld [vmem:[%s0 + $0x18] sm:$0xff]
  %v27 = vunpack.c.0.s8 %v23
  %v28 = vunpack.c.1.s8 %v23
  %v29 = vunpack.c.2.s8 %v23
  %v30 = vunpack.c.3.s8 %v23
  %v31 = vunpack.c.0.s8 %v24
  %v32 = vunpack.c.1.s8 %v24
  %v33 = vunpack.c.2.s8 %v24
  %v34 = vunpack.c.3.s8 %v24
  %v35 = vunpack.c.0.s8 %v25
  %v36 = vunpack.c.1.s8 %v25
  %v37 = vunpack.c.2.s8 %v25
  %v38 = vunpack.c.3.s8 %v25
  %v39 = vunpack.c.0.s8 %v26
  %v40 = vunpack.c.1.s8 %v26
  %v41 = vunpack.c.2.s8 %v26
  %v42 = vunpack.c.3.s8 %v26
  %v43 = vcvt.s32.f32 %v27
  %v44 = vcvt.s32.f32 %v28
  %v45 = vcvt.s32.f32 %v29
  %v46 = vcvt.s32.f32 %v30
  %v47 = vcvt.s32.f32 %v31
  %v48 = vcvt.s32.f32 %v32
  %v49 = vcvt.s32.f32 %v33
  %v50 = vcvt.s32.f32 %v34
  %v51 = vcvt.s32.f32 %v35
  %v52 = vcvt.s32.f32 %v36
  %v53 = vcvt.s32.f32 %v37
  %v54 = vcvt.s32.f32 %v38
  %v55 = vcvt.s32.f32 %v39
  %v56 = vcvt.s32.f32 %v40
  %v57 = vcvt.s32.f32 %v41
  %v58 = vcvt.s32.f32 %v42
  %vm59 = vcmp.gt.f32.partialorder %v43, 0.0
  %vm60 = vcmp.gt.f32.partialorder %v44, 0.0
  %vm61 = vcmp.gt.f32.partialorder %v45, 0.0
  %vm62 = vcmp.gt.f32.partialorder %v46, 0.0
  %vm63 = vcmp.gt.f32.partialorder %v47, 0.0
  %vm64 = vcmp.gt.f32.partialorder %v48, 0.0
  %vm65 = vcmp.gt.f32.partialorder %v49, 0.0
  %vm66 = vcmp.gt.f32.partialorder %v50, 0.0
  %vm67 = vcmp.gt.f32.partialorder %v51, 0.0
  %vm68 = vcmp.gt.f32.partialorder %v52, 0.0
  %vm69 = vcmp.gt.f32.partialorder %v53, 0.0
  %vm70 = vcmp.gt.f32.partialorder %v54, 0.0
  %vm71 = vcmp.gt.f32.partialorder %v55, 0.0
  %vm72 = vcmp.gt.f32.partialorder %v56, 0.0
  %vm73 = vcmp.gt.f32.partialorder %v57, 0.0
  %vm74 = vcmp.gt.f32.partialorder %v58, 0.0
  %p75 = scmp.eq.s32.totalorder 0, 0
  // Predicated region
  $region26: #{spgat_forward.4} parent=0 // pred_check
    %p76 = pneg %p75
  $region27: #{spgat_forward.4} parent=0 // pred_check_branch
    %78 = sbr.rel (%p76) target = $region29
  $region28: #{spgat_forward.4} parent=0 // pred_region
    %vm79 = vcmask 7168
    %80 = vst.msk [vmem:[#allocation3] sm:$0xff] %vm79, -1e+30
    %81 = vst.msk [vmem:[#allocation3 + $0x8] sm:$0xff] %vm79, -1e+30
    %82 = vst.msk [vmem:[#allocation3 + $0x10] sm:$0xff] %vm79, -1e+30
    %83 = vst.msk [vmem:[#allocation3 + $0x18] sm:$0xff] %vm79, -1e+30
    %84 = vst.msk [vmem:[#allocation3 + $0x20] sm:$0xff] %vm79, -1e+30
    %85 = vst.msk [vmem:[#allocation3 + $0x28] sm:$0xff] %vm79, -1e+30
    %86 = vst.msk [vmem:[#allocation3 + $0x30] sm:$0xff] %vm79, -1e+30
    %87 = vst.msk [vmem:[#allocation3 + $0x38] sm:$0xff] %vm79, -1e+30
    %88 = vst.msk [vmem:[#allocation3 + $0x40] sm:$0xff] %vm79, -1e+30
    %89 = vst.msk [vmem:[#allocation3 + $0x48] sm:$0xff] %vm79, -1e+30
    %90 = vst.msk [vmem:[#allocation3 + $0x50] sm:$0xff] %vm79, -1e+30
    %91 = vst.msk [vmem:[#allocation3 + $0x58] sm:$0xff] %vm79, -1e+30
    %92 = vst.msk [vmem:[#allocation3 + $0x60] sm:$0xff] %vm79, -1e+30
    %93 = vst.msk [vmem:[#allocation3 + $0x68] sm:$0xff] %vm79, -1e+30
    %94 = vst.msk [vmem:[#allocation3 + $0x70] sm:$0xff] %vm79, -1e+30
    %95 = vst.msk [vmem:[#allocation3 + $0x78] sm:$0xff] %vm79, -1e+30
    %96 = vst.msk [vmem:[#allocation3 + $0x80] sm:$0xff] %vm79, -1e+30
    %97 = vst.msk [vmem:[#allocation3 + $0x88] sm:$0xff] %vm79, -1e+30
    %98 = vst.msk [vmem:[#allocation3 + $0x90] sm:$0xff] %vm79, -1e+30
    %99 = vst.msk [vmem:[#allocation3 + $0x98] sm:$0xff] %vm79, -1e+30
    %100 = vst.msk [vmem:[#allocation3 + $0xa0] sm:$0xff] %vm79, -1e+30
    %101 = vst.msk [vmem:[#allocation3 + $0xa8] sm:$0xff] %vm79, -1e+30
    %102 = vst.msk [vmem:[#allocation3 + $0xb0] sm:$0xff] %vm79, -1e+30
    %103 = vst.msk [vmem:[#allocation3 + $0xb8] sm:$0xff] %vm79, -1e+30
    %104 = vst.msk [vmem:[#allocation3 + $0xc0] sm:$0xff] %vm79, -1e+30
    %105 = vst.msk [vmem:[#allocation3 + $0xc8] sm:$0xff] %vm79, -1e+30
    %106 = vst.msk [vmem:[#allocation3 + $0xd0] sm:$0xff] %vm79, -1e+30
    %107 = vst.msk [vmem:[#allocation3 + $0xd8] sm:$0xff] %vm79, -1e+30
    %108 = vst.msk [vmem:[#allocation3 + $0xe0] sm:$0xff] %vm79, -1e+30
    %109 = vst.msk [vmem:[#allocation3 + $0xe8] sm:$0xff] %vm79, -1e+30
    %110 = vst.msk [vmem:[#allocation3 + $0xf0] sm:$0xff] %vm79, -1e+30
    %111 = vst.msk [vmem:[#allocation3 + $0xf8] sm:$0xff] %vm79, -1e+30
    %112 = vst.msk [vmem:[#allocation4] sm:$0xff] %vm79, 0.0
    %113 = vst.msk [vmem:[#allocation4 + $0x8] sm:$0xff] %vm79, 0.0
    %114 = vst.msk [vmem:[#allocation4 + $0x10] sm:$0xff] %vm79, 0.0
    %115 = vst.msk [vmem:[#allocation4 + $0x18] sm:$0xff] %vm79, 0.0
    %116 = vst.msk [vmem:[#allocation4 + $0x20] sm:$0xff] %vm79, 0.0
    %117 = vst.msk [vmem:[#allocation4 + $0x28] sm:$0xff] %vm79, 0.0
    %118 = vst.msk [vmem:[#allocation4 + $0x30] sm:$0xff] %vm79, 0.0
    %119 = vst.msk [vmem:[#allocation4 + $0x38] sm:$0xff] %vm79, 0.0
    %120 = vst.msk [vmem:[#allocation4 + $0x40] sm:$0xff] %vm79, 0.0
    %121 = vst.msk [vmem:[#allocation4 + $0x48] sm:$0xff] %vm79, 0.0
    %122 = vst.msk [vmem:[#allocation4 + $0x50] sm:$0xff] %vm79, 0.0
    %123 = vst.msk [vmem:[#allocation4 + $0x58] sm:$0xff] %vm79, 0.0
    %124 = vst.msk [vmem:[#allocation4 + $0x60] sm:$0xff] %vm79, 0.0
    %125 = vst.msk [vmem:[#allocation4 + $0x68] sm:$0xff] %vm79, 0.0
    %126 = vst.msk [vmem:[#allocation4 + $0x70] sm:$0xff] %vm79, 0.0
    %127 = vst.msk [vmem:[#allocation4 + $0x78] sm:$0xff] %vm79, 0.0
    %128 = vst.msk [vmem:[#allocation4 + $0x80] sm:$0xff] %vm79, 0.0
    %129 = vst.msk [vmem:[#allocation4 + $0x88] sm:$0xff] %vm79, 0.0
    %130 = vst.msk [vmem:[#allocation4 + $0x90] sm:$0xff] %vm79, 0.0
    %131 = vst.msk [vmem:[#allocation4 + $0x98] sm:$0xff] %vm79, 0.0
    %132 = vst.msk [vmem:[#allocation4 + $0xa0] sm:$0xff] %vm79, 0.0
    %133 = vst.msk [vmem:[#allocation4 + $0xa8] sm:$0xff] %vm79, 0.0
    %134 = vst.msk [vmem:[#allocation4 + $0xb0] sm:$0xff] %vm79, 0.0
    %135 = vst.msk [vmem:[#allocation4 + $0xb8] sm:$0xff] %vm79, 0.0
    %136 = vst.msk [vmem:[#allocation4 + $0xc0] sm:$0xff] %vm79, 0.0
    %137 = vst.msk [vmem:[#allocation4 + $0xc8] sm:$0xff] %vm79, 0.0
    %138 = vst.msk [vmem:[#allocation4 + $0xd0] sm:$0xff] %vm79, 0.0
    %139 = vst.msk [vmem:[#allocation4 + $0xd8] sm:$0xff] %vm79, 0.0
    %140 = vst.msk [vmem:[#allocation4 + $0xe0] sm:$0xff] %vm79, 0.0
    %141 = vst.msk [vmem:[#allocation4 + $0xe8] sm:$0xff] %vm79, 0.0
    %142 = vst.msk [vmem:[#allocation4 + $0xf0] sm:$0xff] %vm79, 0.0
    %143 = vst.msk [vmem:[#allocation4 + $0xf8] sm:$0xff] %vm79, 0.0
    %144 = vst [vmem:[#allocation5] sm:$0xff] 0.0
    %145 = vst [vmem:[#allocation5 + $0x8] sm:$0xff] 0.0
    %146 = vst [vmem:[#allocation5 + $0x10] sm:$0xff] 0.0
    %147 = vst [vmem:[#allocation5 + $0x18] sm:$0xff] 0.0
    %148 = vst [vmem:[#allocation5 + $0x20] sm:$0xff] 0.0
    %149 = vst [vmem:[#allocation5 + $0x28] sm:$0xff] 0.0
    %150 = vst [vmem:[#allocation5 + $0x30] sm:$0xff] 0.0
    %151 = vst [vmem:[#allocation5 + $0x38] sm:$0xff] 0.0
    %152 = vst [vmem:[#allocation5 + $0x40] sm:$0xff] 0.0
    %153 = vst [vmem:[#allocation5 + $0x48] sm:$0xff] 0.0
    %154 = vst [vmem:[#allocation5 + $0x50] sm:$0xff] 0.0
    %155 = vst [vmem:[#allocation5 + $0x58] sm:$0xff] 0.0
    %156 = vst [vmem:[#allocation5 + $0x60] sm:$0xff] 0.0
    %157 = vst [vmem:[#allocation5 + $0x68] sm:$0xff] 0.0
    %158 = vst [vmem:[#allocation5 + $0x70] sm:$0xff] 0.0
    %159 = vst [vmem:[#allocation5 + $0x78] sm:$0xff] 0.0
    %160 = vst [vmem:[#allocation5 + $0x80] sm:$0xff] 0.0
    %161 = vst [vmem:[#allocation5 + $0x88] sm:$0xff] 0.0
    %162 = vst [vmem:[#allocation5 + $0x90] sm:$0xff] 0.0
    %163 = vst [vmem:[#allocation5 + $0x98] sm:$0xff] 0.0
    %164 = vst [vmem:[#allocation5 + $0xa0] sm:$0xff] 0.0
    %165 = vst [vmem:[#allocation5 + $0xa8] sm:$0xff] 0.0
    %166 = vst [vmem:[#allocation5 + $0xb0] sm:$0xff] 0.0
    %167 = vst [vmem:[#allocation5 + $0xb8] sm:$0xff] 0.0
    %168 = vst [vmem:[#allocation5 + $0xc0] sm:$0xff] 0.0
    %169 = vst [vmem:[#allocation5 + $0xc8] sm:$0xff] 0.0
    %170 = vst [vmem:[#allocation5 + $0xd0] sm:$0xff] 0.0
    %171 = vst [vmem:[#allocation5 + $0xd8] sm:$0xff] 0.0
    %172 = vst [vmem:[#allocation5 + $0xe0] sm:$0xff] 0.0
    %173 = vst [vmem:[#allocation5 + $0xe8] sm:$0xff] 0.0
    %174 = vst [vmem:[#allocation5 + $0xf0] sm:$0xff] 0.0
    %175 = vst [vmem:[#allocation5 + $0xf8] sm:$0xff] 0.0
    %v176 = vld [vmem:[%s1] sm:$0xff]
    %v177 = vld [vmem:[%s1 + $0x8] sm:$0xff]
    %v178 = vld [vmem:[%s1 + $0x10] sm:$0xff]
    %v179 = vld [vmem:[%s1 + $0x18] sm:$0xff]
    %v180 = vld [vmem:[%s1 + $0x20] sm:$0xff]
    %v181 = vld [vmem:[%s1 + $0x28] sm:$0xff]
    %v182 = vld [vmem:[%s1 + $0x30] sm:$0xff]
    %v183 = vld [vmem:[%s1 + $0x38] sm:$0xff]
    %v184 = vld [vmem:[%s1 + $0x40] sm:$0xff]
    %v185 = vld [vmem:[%s1 + $0x48] sm:$0xff]
    %v186 = vld [vmem:[%s1 + $0x50] sm:$0xff]
    %v187 = vld [vmem:[%s1 + $0x58] sm:$0xff]
    %v188 = vld [vmem:[%s1 + $0x60] sm:$0xff]
    %v189 = vld [vmem:[%s1 + $0x68] sm:$0xff]
    %v190 = vld [vmem:[%s1 + $0x70] sm:$0xff]
    %v191 = vld [vmem:[%s1 + $0x78] sm:$0xff]
    %v192 = vunpack.c.l.bf16 %v176
    %v193 = vunpack.c.l.bf16 %v177
    %v194 = vunpack.c.l.bf16 %v178
    %v195 = vunpack.c.l.bf16 %v179
    %v196 = vunpack.c.l.bf16 %v180
    %v197 = vunpack.c.l.bf16 %v181
    %v198 = vunpack.c.l.bf16 %v182
    %v199 = vunpack.c.l.bf16 %v183
    %v200 = vunpack.c.l.bf16 %v184
    %v201 = vunpack.c.l.bf16 %v185
    %v202 = vunpack.c.l.bf16 %v186
    %v203 = vunpack.c.l.bf16 %v187
    %v204 = vunpack.c.l.bf16 %v188
    %v205 = vunpack.c.l.bf16 %v189
    %v206 = vunpack.c.l.bf16 %v190
    %v207 = vunpack.c.l.bf16 %v191
    %v208 = vld [vmem:[%s3] sm:$0x1]
    %v209 = vperm.slane %v208, 0
    %v210 = vmul.f32 %v192, %v209
    %v211 = vmul.f32 %v193, %v209
    %v212 = vmul.f32 %v194, %v209
    %v213 = vmul.f32 %v195, %v209
    %v214 = vmul.f32 %v196, %v209
    %v215 = vmul.f32 %v197, %v209
    %v216 = vmul.f32 %v198, %v209
    %v217 = vmul.f32 %v199, %v209
    %v218 = vmul.f32 %v200, %v209
    %v219 = vmul.f32 %v201, %v209
    %v220 = vmul.f32 %v202, %v209
    %v221 = vmul.f32 %v203, %v209
    %v222 = vmul.f32 %v204, %v209
    %v223 = vmul.f32 %v205, %v209
    %v224 = vmul.f32 %v206, %v209
    %v225 = vmul.f32 %v207, %v209
    %226 = vadd.xlane.f32.xlu0 %v210
    %v227 = vpop.xlane.xlu0 %226
    %228 = vadd.xlane.f32.xlu0 %v211
    %v229 = vpop.xlane.xlu0 %228
    %230 = vadd.xlane.f32.xlu0 %v212
    %v231 = vpop.xlane.xlu0 %230
    %232 = vadd.xlane.f32.xlu0 %v213
    %v233 = vpop.xlane.xlu0 %232
    %234 = vadd.xlane.f32.xlu0 %v214
    %v235 = vpop.xlane.xlu0 %234
    %236 = vadd.xlane.f32.xlu0 %v215
    %v237 = vpop.xlane.xlu0 %236
    %238 = vadd.xlane.f32.xlu0 %v216
    %v239 = vpop.xlane.xlu0 %238
    %240 = vadd.xlane.f32.xlu0 %v217
    %v241 = vpop.xlane.xlu0 %240
    %242 = vadd.xlane.f32.xlu0 %v218
    %v243 = vpop.xlane.xlu0 %242
    %244 = vadd.xlane.f32.xlu0 %v219
    %v245 = vpop.xlane.xlu0 %244
    %246 = vadd.xlane.f32.xlu0 %v220
    %v247 = vpop.xlane.xlu0 %246
    %248 = vadd.xlane.f32.xlu0 %v221
    %v249 = vpop.xlane.xlu0 %248
    %250 = vadd.xlane.f32.xlu0 %v222
    %v251 = vpop.xlane.xlu0 %250
    %252 = vadd.xlane.f32.xlu0 %v223
    %v253 = vpop.xlane.xlu0 %252
    %254 = vadd.xlane.f32.xlu0 %v224
    %v255 = vpop.xlane.xlu0 %254
    %256 = vadd.xlane.f32.xlu0 %v225
    %v257 = vpop.xlane.xlu0 %256
    %258 = vst.msk [vmem:[#allocation2] sm:$0xff] %vm79, %v227
    %259 = vst.msk [vmem:[#allocation2 + $0x8] sm:$0xff] %vm79, %v229
    %260 = vst.msk [vmem:[#allocation2 + $0x10] sm:$0xff] %vm79, %v231
    %261 = vst.msk [vmem:[#allocation2 + $0x18] sm:$0xff] %vm79, %v233
    %262 = vst.msk [vmem:[#allocation2 + $0x20] sm:$0xff] %vm79, %v235
    %263 = vst.msk [vmem:[#allocation2 + $0x28] sm:$0xff] %vm79, %v237
    %264 = vst.msk [vmem:[#allocation2 + $0x30] sm:$0xff] %vm79, %v239
    %265 = vst.msk [vmem:[#allocation2 + $0x38] sm:$0xff] %vm79, %v241
    %266 = vst.msk [vmem:[#allocation2 + $0x40] sm:$0xff] %vm79, %v243
    %267 = vst.msk [vmem:[#allocation2 + $0x48] sm:$0xff] %vm79, %v245
    %268 = vst.msk [vmem:[#allocation2 + $0x50] sm:$0xff] %vm79, %v247
    %269 = vst.msk [vmem:[#allocation2 + $0x58] sm:$0xff] %vm79, %v249
    %270 = vst.msk [vmem:[#allocation2 + $0x60] sm:$0xff] %vm79, %v251
    %271 = vst.msk [vmem:[#allocation2 + $0x68] sm:$0xff] %vm79, %v253
    %272 = vst.msk [vmem:[#allocation2 + $0x70] sm:$0xff] %vm79, %v255
    %273 = vst.msk [vmem:[#allocation2 + $0x78] sm:$0xff] %vm79, %v257
    %v290 = vrot.slane %v176, 4
    %v291 = vrot.slane %v177, 4
    %v292 = vrot.slane %v178, 4
    %v293 = vrot.slane %v179, 4
    %v294 = vrot.slane %v180, 4
    %v295 = vrot.slane %v181, 4
    %v296 = vrot.slane %v182, 4
    %v297 = vrot.slane %v183, 4
    %v298 = vrot.slane %v184, 4
    %v299 = vrot.slane %v185, 4
    %v300 = vrot.slane %v186, 4
    %v301 = vrot.slane %v187, 4
    %v302 = vrot.slane %v188, 4
    %v303 = vrot.slane %v189, 4
    %v304 = vrot.slane %v190, 4
    %v305 = vrot.slane %v191, 4
    %v322 = vunpack.c.l.bf16 %v290
    %v323 = vunpack.c.l.bf16 %v291
    %v324 = vunpack.c.l.bf16 %v292
    %v325 = vunpack.c.l.bf16 %v293
    %v326 = vunpack.c.l.bf16 %v294
    %v327 = vunpack.c.l.bf16 %v295
    %v328 = vunpack.c.l.bf16 %v296
    %v329 = vunpack.c.l.bf16 %v297
    %v330 = vunpack.c.l.bf16 %v298
    %v331 = vunpack.c.l.bf16 %v299
    %v332 = vunpack.c.l.bf16 %v300
    %v333 = vunpack.c.l.bf16 %v301
    %v334 = vunpack.c.l.bf16 %v302
    %v335 = vunpack.c.l.bf16 %v303
    %v336 = vunpack.c.l.bf16 %v304
    %v337 = vunpack.c.l.bf16 %v305
    %v338 = vld [vmem:[%s3 + $0x1] sm:$0x1]
    %v339 = vperm.slane %v338, 0
    %v340 = vmul.f32 %v322, %v339
    %v341 = vmul.f32 %v323, %v339
    %v342 = vmul.f32 %v324, %v339
    %v343 = vmul.f32 %v325, %v339
    %v344 = vmul.f32 %v326, %v339
    %v345 = vmul.f32 %v327, %v339
    %v346 = vmul.f32 %v328, %v339
    %v347 = vmul.f32 %v329, %v339
    %v348 = vmul.f32 %v330, %v339
    %v349 = vmul.f32 %v331, %v339
    %v350 = vmul.f32 %v332, %v339
    %v351 = vmul.f32 %v333, %v339
    %v352 = vmul.f32 %v334, %v339
    %v353 = vmul.f32 %v335, %v339
    %v354 = vmul.f32 %v336, %v339
    %v355 = vmul.f32 %v337, %v339
    %356 = vadd.xlane.f32.xlu0 %v340
    %v357 = vpop.xlane.xlu0 %356
    %358 = vadd.xlane.f32.xlu0 %v341
    %v359 = vpop.xlane.xlu0 %358
    %360 = vadd.xlane.f32.xlu0 %v342
    %v361 = vpop.xlane.xlu0 %360
    %362 = vadd.xlane.f32.xlu0 %v343
    %v363 = vpop.xlane.xlu0 %362
    %364 = vadd.xlane.f32.xlu0 %v344
    %v365 = vpop.xlane.xlu0 %364
    %366 = vadd.xlane.f32.xlu0 %v345
    %v367 = vpop.xlane.xlu0 %366
    %368 = vadd.xlane.f32.xlu0 %v346
    %v369 = vpop.xlane.xlu0 %368
    %370 = vadd.xlane.f32.xlu0 %v347
    %v371 = vpop.xlane.xlu0 %370
    %372 = vadd.xlane.f32.xlu0 %v348
    %v373 = vpop.xlane.xlu0 %372
    %374 = vadd.xlane.f32.xlu0 %v349
    %v375 = vpop.xlane.xlu0 %374
    %376 = vadd.xlane.f32.xlu0 %v350
    %v377 = vpop.xlane.xlu0 %376
    %378 = vadd.xlane.f32.xlu0 %v351
    %v379 = vpop.xlane.xlu0 %378
    %380 = vadd.xlane.f32.xlu0 %v352
    %v381 = vpop.xlane.xlu0 %380
    %382 = vadd.xlane.f32.xlu0 %v353
    %v383 = vpop.xlane.xlu0 %382
    %384 = vadd.xlane.f32.xlu0 %v354
    %v385 = vpop.xlane.xlu0 %384
    %386 = vadd.xlane.f32.xlu0 %v355
    %v387 = vpop.xlane.xlu0 %386
    %s388 = scalar_lea.vmem [#allocation2], 128
    %389 = vst.msk [vmem:[%s388] sm:$0xff] %vm79, %v357
    %390 = vst.msk [vmem:[%s388 + $0x8] sm:$0xff] %vm79, %v359
    %391 = vst.msk [vmem:[%s388 + $0x10] sm:$0xff] %vm79, %v361
    %392 = vst.msk [vmem:[%s388 + $0x18] sm:$0xff] %vm79, %v363
    %393 = vst.msk [vmem:[%s388 + $0x20] sm:$0xff] %vm79, %v365
    %394 = vst.msk [vmem:[%s388 + $0x28] sm:$0xff] %vm79, %v367
    %395 = vst.msk [vmem:[%s388 + $0x30] sm:$0xff] %vm79, %v369
    %396 = vst.msk [vmem:[%s388 + $0x38] sm:$0xff] %vm79, %v371
    %397 = vst.msk [vmem:[%s388 + $0x40] sm:$0xff] %vm79, %v373
    %398 = vst.msk [vmem:[%s388 + $0x48] sm:$0xff] %vm79, %v375
    %399 = vst.msk [vmem:[%s388 + $0x50] sm:$0xff] %vm79, %v377
    %400 = vst.msk [vmem:[%s388 + $0x58] sm:$0xff] %vm79, %v379
    %401 = vst.msk [vmem:[%s388 + $0x60] sm:$0xff] %vm79, %v381
    %402 = vst.msk [vmem:[%s388 + $0x68] sm:$0xff] %vm79, %v383
    %403 = vst.msk [vmem:[%s388 + $0x70] sm:$0xff] %vm79, %v385
    %404 = vst.msk [vmem:[%s388 + $0x78] sm:$0xff] %vm79, %v387
  $region29: #{spgat_forward.4} parent=0 // pred_fallthru
    _
  %v405 = vld [vmem:[%s2] sm:$0xff]
  %v406 = vld [vmem:[%s2 + $0x8] sm:$0xff]
  %v407 = vld [vmem:[%s2 + $0x10] sm:$0xff]
  %v408 = vld [vmem:[%s2 + $0x18] sm:$0xff]
  %v409 = vld [vmem:[%s2 + $0x20] sm:$0xff]
  %v410 = vld [vmem:[%s2 + $0x28] sm:$0xff]
  %v411 = vld [vmem:[%s2 + $0x30] sm:$0xff]
  %v412 = vld [vmem:[%s2 + $0x38] sm:$0xff]
  %v413 = vld [vmem:[%s2 + $0x40] sm:$0xff]
  %v414 = vld [vmem:[%s2 + $0x48] sm:$0xff]
  %v415 = vld [vmem:[%s2 + $0x50] sm:$0xff]
  %v416 = vld [vmem:[%s2 + $0x58] sm:$0xff]
  %v417 = vld [vmem:[%s2 + $0x60] sm:$0xff]
  %v418 = vld [vmem:[%s2 + $0x68] sm:$0xff]
  %v419 = vld [vmem:[%s2 + $0x70] sm:$0xff]
  %v420 = vld [vmem:[%s2 + $0x78] sm:$0xff]
  %v421 = vld [vmem:[%s4] sm:$0x1]
  %v422 = vunpack.c.l.bf16 %v405
  %v423 = vunpack.c.l.bf16 %v406
  %v424 = vunpack.c.l.bf16 %v407
  %v425 = vunpack.c.l.bf16 %v408
  %v426 = vunpack.c.l.bf16 %v409
  %v427 = vunpack.c.l.bf16 %v410
  %v428 = vunpack.c.l.bf16 %v411
  %v429 = vunpack.c.l.bf16 %v412
  %v430 = vunpack.c.l.bf16 %v413
  %v431 = vunpack.c.l.bf16 %v414
  %v432 = vunpack.c.l.bf16 %v415
  %v433 = vunpack.c.l.bf16 %v416
  %v434 = vunpack.c.l.bf16 %v417
  %v435 = vunpack.c.l.bf16 %v418
  %v436 = vunpack.c.l.bf16 %v419
  %v437 = vunpack.c.l.bf16 %v420
  %438 = vmatpush.xpose.msra.mxu0 %v437
  %439 = vmatpush.xpose.msra.mxu0 %v436
  %440 = vmatpush.xpose.msra.mxu0 %v435
  %441 = vmatpush.xpose.msra.mxu0 %v434
  %442 = vmatpush.xpose.msra.mxu0 %v433
  %443 = vmatpush.xpose.msra.mxu0 %v432
  %444 = vmatpush.xpose.msra.mxu0 %v431
  %445 = vmatpush.xpose.msra.mxu0 %v430
  %446 = vmatpush.xpose.msra.mxu0 %v429
  %447 = vmatpush.xpose.msra.mxu0 %v428
  %448 = vmatpush.xpose.msra.mxu0 %v427
  %449 = vmatpush.xpose.msra.mxu0 %v426
  %450 = vmatpush.xpose.msra.mxu0 %v425
  %451 = vmatpush.xpose.msra.mxu0 %v424
  %452 = vmatpush.xpose.msra.mxu0 %v423
  %453 = vmatpush.xpose.msra.mxu0 %v422
  %454 = vmatmul.f32.gmra.mxu0 %v421
  %v455 = vpop.f32.mrf.mxu0
  %v456 = vadd.f32 0.0, %v455
  %457 = vdwg.mxu0
  %v458 = vld [vmem:[#allocation2] sm:$0xff]
  %v459 = vld [vmem:[#allocation2 + $0x8] sm:$0xff]
  %v460 = vld [vmem:[#allocation2 + $0x10] sm:$0xff]
  %v461 = vld [vmem:[#allocation2 + $0x18] sm:$0xff]
  %v462 = vld [vmem:[#allocation2 + $0x20] sm:$0xff]
  %v463 = vld [vmem:[#allocation2 + $0x28] sm:$0xff]
  %v464 = vld [vmem:[#allocation2 + $0x30] sm:$0xff]
  %v465 = vld [vmem:[#allocation2 + $0x38] sm:$0xff]
  %v466 = vld [vmem:[#allocation2 + $0x40] sm:$0xff]
  %v467 = vld [vmem:[#allocation2 + $0x48] sm:$0xff]
  %v468 = vld [vmem:[#allocation2 + $0x50] sm:$0xff]
  %v469 = vld [vmem:[#allocation2 + $0x58] sm:$0xff]
  %v470 = vld [vmem:[#allocation2 + $0x60] sm:$0xff]
  %v471 = vld [vmem:[#allocation2 + $0x68] sm:$0xff]
  %v472 = vld [vmem:[#allocation2 + $0x70] sm:$0xff]
  %v473 = vld [vmem:[#allocation2 + $0x78] sm:$0xff]
  %475 = vset.pattern.permute.xlu0 0
  %476 = vperm.xlu0 %475, %v458
  %v477 = vpop.permute.xlu0 %476
  %480 = vset.pattern.permute.xlu0 0
  %481 = vperm.xlu0 %480, %v459
  %v482 = vpop.permute.xlu0 %481
  %485 = vset.pattern.permute.xlu0 0
  %486 = vperm.xlu0 %485, %v460
  %v487 = vpop.permute.xlu0 %486
  %490 = vset.pattern.permute.xlu0 0
  %491 = vperm.xlu0 %490, %v461
  %v492 = vpop.permute.xlu0 %491
  %495 = vset.pattern.permute.xlu0 0
  %496 = vperm.xlu0 %495, %v462
  %v497 = vpop.permute.xlu0 %496
  %500 = vset.pattern.permute.xlu0 0
  %501 = vperm.xlu0 %500, %v463
  %v502 = vpop.permute.xlu0 %501
  %505 = vset.pattern.permute.xlu0 0
  %506 = vperm.xlu0 %505, %v464
  %v507 = vpop.permute.xlu0 %506
  %510 = vset.pattern.permute.xlu0 0
  %511 = vperm.xlu0 %510, %v465
  %v512 = vpop.permute.xlu0 %511
  %515 = vset.pattern.permute.xlu0 0
  %516 = vperm.xlu0 %515, %v466
  %v517 = vpop.permute.xlu0 %516
  %520 = vset.pattern.permute.xlu0 0
  %521 = vperm.xlu0 %520, %v467
  %v522 = vpop.permute.xlu0 %521
  %525 = vset.pattern.permute.xlu0 0
  %526 = vperm.xlu0 %525, %v468
  %v527 = vpop.permute.xlu0 %526
  %530 = vset.pattern.permute.xlu0 0
  %531 = vperm.xlu0 %530, %v469
  %v532 = vpop.permute.xlu0 %531
  %535 = vset.pattern.permute.xlu0 0
  %536 = vperm.xlu0 %535, %v470
  %v537 = vpop.permute.xlu0 %536
  %540 = vset.pattern.permute.xlu0 0
  %541 = vperm.xlu0 %540, %v471
  %v542 = vpop.permute.xlu0 %541
  %545 = vset.pattern.permute.xlu0 0
  %546 = vperm.xlu0 %545, %v472
  %v547 = vpop.permute.xlu0 %546
  %550 = vset.pattern.permute.xlu0 0
  %551 = vperm.xlu0 %550, %v473
  %v552 = vpop.permute.xlu0 %551
  %v554 = vperm.slane %v456, 0
  %v555 = vadd.f32 %v477, %v554
  %v556 = vadd.f32 %v482, %v554
  %v557 = vadd.f32 %v487, %v554
  %v558 = vadd.f32 %v492, %v554
  %v559 = vadd.f32 %v497, %v554
  %v560 = vadd.f32 %v502, %v554
  %v561 = vadd.f32 %v507, %v554
  %v562 = vadd.f32 %v512, %v554
  %v563 = vadd.f32 %v517, %v554
  %v564 = vadd.f32 %v522, %v554
  %v565 = vadd.f32 %v527, %v554
  %v566 = vadd.f32 %v532, %v554
  %v567 = vadd.f32 %v537, %v554
  %v568 = vadd.f32 %v542, %v554
  %v569 = vadd.f32 %v547, %v554
  %v570 = vadd.f32 %v552, %v554
  %vm571 = vcmp.gt.f32.partialorder %v555, 0.0
  %vm572 = vcmp.gt.f32.partialorder %v556, 0.0
  %vm573 = vcmp.gt.f32.partialorder %v557, 0.0
  %vm574 = vcmp.gt.f32.partialorder %v558, 0.0
  %vm575 = vcmp.gt.f32.partialorder %v559, 0.0
  %vm576 = vcmp.gt.f32.partialorder %v560, 0.0
  %vm577 = vcmp.gt.f32.partialorder %v561, 0.0
  %vm578 = vcmp.gt.f32.partialorder %v562, 0.0
  %vm579 = vcmp.gt.f32.partialorder %v563, 0.0
  %vm580 = vcmp.gt.f32.partialorder %v564, 0.0
  %vm581 = vcmp.gt.f32.partialorder %v565, 0.0
  %vm582 = vcmp.gt.f32.partialorder %v566, 0.0
  %vm583 = vcmp.gt.f32.partialorder %v567, 0.0
  %vm584 = vcmp.gt.f32.partialorder %v568, 0.0
  %vm585 = vcmp.gt.f32.partialorder %v569, 0.0
  %vm586 = vcmp.gt.f32.partialorder %v570, 0.0
  %v587 = vmul.f32 %v555, 0.2
  %v588 = vmul.f32 %v556, 0.2
  %v589 = vmul.f32 %v557, 0.2
  %v590 = vmul.f32 %v558, 0.2
  %v591 = vmul.f32 %v559, 0.2
  %v592 = vmul.f32 %v560, 0.2
  %v593 = vmul.f32 %v561, 0.2
  %v594 = vmul.f32 %v562, 0.2
  %v595 = vmul.f32 %v563, 0.2
  %v596 = vmul.f32 %v564, 0.2
  %v597 = vmul.f32 %v565, 0.2
  %v598 = vmul.f32 %v566, 0.2
  %v599 = vmul.f32 %v567, 0.2
  %v600 = vmul.f32 %v568, 0.2
  %v601 = vmul.f32 %v569, 0.2
  %v602 = vmul.f32 %v570, 0.2
  %v603 = vsel %vm571, %v555, %v587
  %v604 = vsel %vm572, %v556, %v588
  %v605 = vsel %vm573, %v557, %v589
  %v606 = vsel %vm574, %v558, %v590
  %v607 = vsel %vm575, %v559, %v591
  %v608 = vsel %vm576, %v560, %v592
  %v609 = vsel %vm577, %v561, %v593
  %v610 = vsel %vm578, %v562, %v594
  %v611 = vsel %vm579, %v563, %v595
  %v612 = vsel %vm580, %v564, %v596
  %v613 = vsel %vm581, %v565, %v597
  %v614 = vsel %vm582, %v566, %v598
  %v615 = vsel %vm583, %v567, %v599
  %v616 = vsel %vm584, %v568, %v600
  %v617 = vsel %vm585, %v569, %v601
  %v618 = vsel %vm586, %v570, %v602
  %v619 = vsub.f32 0.0, %v603
  %v620 = vsub.f32 0.0, %v604
  %v621 = vsub.f32 0.0, %v605
  %v622 = vsub.f32 0.0, %v606
  %v623 = vsub.f32 0.0, %v607
  %v624 = vsub.f32 0.0, %v608
  %v625 = vsub.f32 0.0, %v609
  %v626 = vsub.f32 0.0, %v610
  %v627 = vsub.f32 0.0, %v611
  %v628 = vsub.f32 0.0, %v612
  %v629 = vsub.f32 0.0, %v613
  %v630 = vsub.f32 0.0, %v614
  %v631 = vsub.f32 0.0, %v615
  %v632 = vsub.f32 0.0, %v616
  %v633 = vsub.f32 0.0, %v617
  %v634 = vsub.f32 0.0, %v618
  %v635 = vsel %vm59, %v619, -1e+30
  %v636 = vsel %vm60, %v620, -1e+30
  %v637 = vsel %vm61, %v621, -1e+30
  %v638 = vsel %vm62, %v622, -1e+30
  %v639 = vsel %vm63, %v623, -1e+30
  %v640 = vsel %vm64, %v624, -1e+30
  %v641 = vsel %vm65, %v625, -1e+30
  %v642 = vsel %vm66, %v626, -1e+30
  %v643 = vsel %vm67, %v627, -1e+30
  %v644 = vsel %vm68, %v628, -1e+30
  %v645 = vsel %vm69, %v629, -1e+30
  %v646 = vsel %vm70, %v630, -1e+30
  %v647 = vsel %vm71, %v631, -1e+30
  %v648 = vsel %vm72, %v632, -1e+30
  %v649 = vsel %vm73, %v633, -1e+30
  %v650 = vsel %vm74, %v634, -1e+30
  %v651 = vld [vmem:[#allocation3] sm:$0xff]
  %v652 = vld [vmem:[#allocation3 + $0x8] sm:$0xff]
  %v653 = vld [vmem:[#allocation3 + $0x10] sm:$0xff]
  %v654 = vld [vmem:[#allocation3 + $0x18] sm:$0xff]
  %v655 = vld [vmem:[#allocation3 + $0x20] sm:$0xff]
  %v656 = vld [vmem:[#allocation3 + $0x28] sm:$0xff]
  %v657 = vld [vmem:[#allocation3 + $0x30] sm:$0xff]
  %v658 = vld [vmem:[#allocation3 + $0x38] sm:$0xff]
  %v659 = vld [vmem:[#allocation3 + $0x40] sm:$0xff]
  %v660 = vld [vmem:[#allocation3 + $0x48] sm:$0xff]
  %v661 = vld [vmem:[#allocation3 + $0x50] sm:$0xff]
  %v662 = vld [vmem:[#allocation3 + $0x58] sm:$0xff]
  %v663 = vld [vmem:[#allocation3 + $0x60] sm:$0xff]
  %v664 = vld [vmem:[#allocation3 + $0x68] sm:$0xff]
  %v665 = vld [vmem:[#allocation3 + $0x70] sm:$0xff]
  %v666 = vld [vmem:[#allocation3 + $0x78] sm:$0xff]
  %667 = vmax.xlane.f32.xlu0 %v635
  %v668 = vpop.xlane.xlu0 %667
  %669 = vmax.xlane.f32.xlu0 %v636
  %v670 = vpop.xlane.xlu0 %669
  %671 = vmax.xlane.f32.xlu0 %v637
  %v672 = vpop.xlane.xlu0 %671
  %673 = vmax.xlane.f32.xlu0 %v638
  %v674 = vpop.xlane.xlu0 %673
  %675 = vmax.xlane.f32.xlu0 %v639
  %v676 = vpop.xlane.xlu0 %675
  %677 = vmax.xlane.f32.xlu0 %v640
  %v678 = vpop.xlane.xlu0 %677
  %679 = vmax.xlane.f32.xlu0 %v641
  %v680 = vpop.xlane.xlu0 %679
  %681 = vmax.xlane.f32.xlu0 %v642
  %v682 = vpop.xlane.xlu0 %681
  %683 = vmax.xlane.f32.xlu0 %v643
  %v684 = vpop.xlane.xlu0 %683
  %685 = vmax.xlane.f32.xlu0 %v644
  %v686 = vpop.xlane.xlu0 %685
  %687 = vmax.xlane.f32.xlu0 %v645
  %v688 = vpop.xlane.xlu0 %687
  %689 = vmax.xlane.f32.xlu0 %v646
  %v690 = vpop.xlane.xlu0 %689
  %691 = vmax.xlane.f32.xlu0 %v647
  %v692 = vpop.xlane.xlu0 %691
  %693 = vmax.xlane.f32.xlu0 %v648
  %v694 = vpop.xlane.xlu0 %693
  %695 = vmax.xlane.f32.xlu0 %v649
  %v696 = vpop.xlane.xlu0 %695
  %697 = vmax.xlane.f32.xlu0 %v650
  %v698 = vpop.xlane.xlu0 %697
  %v699 = vmax.f32 %v651, %v668
  %v700 = vmax.f32 %v652, %v670
  %v701 = vmax.f32 %v653, %v672
  %v702 = vmax.f32 %v654, %v674
  %v703 = vmax.f32 %v655, %v676
  %v704 = vmax.f32 %v656, %v678
  %v705 = vmax.f32 %v657, %v680
  %v706 = vmax.f32 %v658, %v682
  %v707 = vmax.f32 %v659, %v684
  %v708 = vmax.f32 %v660, %v686
  %v709 = vmax.f32 %v661, %v688
  %v710 = vmax.f32 %v662, %v690
  %v711 = vmax.f32 %v663, %v692
  %v712 = vmax.f32 %v664, %v694
  %v713 = vmax.f32 %v665, %v696
  %v714 = vmax.f32 %v666, %v698
  %v715 = vsub.f32 %v651, %v699
  %v716 = vsub.f32 %v652, %v700
  %v717 = vsub.f32 %v653, %v701
  %v718 = vsub.f32 %v654, %v702
  %v719 = vsub.f32 %v655, %v703
  %v720 = vsub.f32 %v656, %v704
  %v721 = vsub.f32 %v657, %v705
  %v722 = vsub.f32 %v658, %v706
  %v723 = vsub.f32 %v659, %v707
  %v724 = vsub.f32 %v660, %v708
  %v725 = vsub.f32 %v661, %v709
  %v726 = vsub.f32 %v662, %v710
  %v727 = vsub.f32 %v663, %v711
  %v728 = vsub.f32 %v664, %v712
  %v729 = vsub.f32 %v665, %v713
  %v730 = vsub.f32 %v666, %v714
  %v731 = vmul.f32 %v715, 1.442695
  %v732 = vpow.pop %v731
  %v733 = vmul.f32 %v716, 1.442695
  %v734 = vpow.pop %v733
  %v735 = vmul.f32 %v717, 1.442695
  %v736 = vpow.pop %v735
  %v737 = vmul.f32 %v718, 1.442695
  %v738 = vpow.pop %v737
  %v739 = vmul.f32 %v719, 1.442695
  %v740 = vpow.pop %v739
  %v741 = vmul.f32 %v720, 1.442695
  %v742 = vpow.pop %v741
  %v743 = vmul.f32 %v721, 1.442695
  %v744 = vpow.pop %v743
  %v745 = vmul.f32 %v722, 1.442695
  %v746 = vpow.pop %v745
  %v747 = vmul.f32 %v723, 1.442695
  %v748 = vpow.pop %v747
  %v749 = vmul.f32 %v724, 1.442695
  %v750 = vpow.pop %v749
  %v751 = vmul.f32 %v725, 1.442695
  %v752 = vpow.pop %v751
  %v753 = vmul.f32 %v726, 1.442695
  %v754 = vpow.pop %v753
  %v755 = vmul.f32 %v727, 1.442695
  %v756 = vpow.pop %v755
  %v757 = vmul.f32 %v728, 1.442695
  %v758 = vpow.pop %v757
  %v759 = vmul.f32 %v729, 1.442695
  %v760 = vpow.pop %v759
  %v761 = vmul.f32 %v730, 1.442695
  %v762 = vpow.pop %v761
  %764 = vset.pattern.permute.xlu0 0
  %765 = vperm.xlu0 %764, %v699
  %v766 = vpop.permute.xlu0 %765
  %769 = vset.pattern.permute.xlu0 0
  %770 = vperm.xlu0 %769, %v700
  %v771 = vpop.permute.xlu0 %770
  %774 = vset.pattern.permute.xlu0 0
  %775 = vperm.xlu0 %774, %v701
  %v776 = vpop.permute.xlu0 %775
  %779 = vset.pattern.permute.xlu0 0
  %780 = vperm.xlu0 %779, %v702
  %v781 = vpop.permute.xlu0 %780
  %784 = vset.pattern.permute.xlu0 0
  %785 = vperm.xlu0 %784, %v703
  %v786 = vpop.permute.xlu0 %785
  %789 = vset.pattern.permute.xlu0 0
  %790 = vperm.xlu0 %789, %v704
  %v791 = vpop.permute.xlu0 %790
  %794 = vset.pattern.permute.xlu0 0
  %795 = vperm.xlu0 %794, %v705
  %v796 = vpop.permute.xlu0 %795
  %799 = vset.pattern.permute.xlu0 0
  %800 = vperm.xlu0 %799, %v706
  %v801 = vpop.permute.xlu0 %800
  %804 = vset.pattern.permute.xlu0 0
  %805 = vperm.xlu0 %804, %v707
  %v806 = vpop.permute.xlu0 %805
  %809 = vset.pattern.permute.xlu0 0
  %810 = vperm.xlu0 %809, %v708
  %v811 = vpop.permute.xlu0 %810
  %814 = vset.pattern.permute.xlu0 0
  %815 = vperm.xlu0 %814, %v709
  %v816 = vpop.permute.xlu0 %815
  %819 = vset.pattern.permute.xlu0 0
  %820 = vperm.xlu0 %819, %v710
  %v821 = vpop.permute.xlu0 %820
  %824 = vset.pattern.permute.xlu0 0
  %825 = vperm.xlu0 %824, %v711
  %v826 = vpop.permute.xlu0 %825
  %829 = vset.pattern.permute.xlu0 0
  %830 = vperm.xlu0 %829, %v712
  %v831 = vpop.permute.xlu0 %830
  %834 = vset.pattern.permute.xlu0 0
  %835 = vperm.xlu0 %834, %v713
  %v836 = vpop.permute.xlu0 %835
  %839 = vset.pattern.permute.xlu0 0
  %840 = vperm.xlu0 %839, %v714
  %v841 = vpop.permute.xlu0 %840
  %v843 = vsub.f32 %v635, %v766
  %v844 = vsub.f32 %v636, %v771
  %v845 = vsub.f32 %v637, %v776
  %v846 = vsub.f32 %v638, %v781
  %v847 = vsub.f32 %v639, %v786
  %v848 = vsub.f32 %v640, %v791
  %v849 = vsub.f32 %v641, %v796
  %v850 = vsub.f32 %v642, %v801
  %v851 = vsub.f32 %v643, %v806
  %v852 = vsub.f32 %v644, %v811
  %v853 = vsub.f32 %v645, %v816
  %v854 = vsub.f32 %v646, %v821
  %v855 = vsub.f32 %v647, %v826
  %v856 = vsub.f32 %v648, %v831
  %v857 = vsub.f32 %v649, %v836
  %v858 = vsub.f32 %v650, %v841
  %v859 = vmul.f32 %v843, 1.442695
  %v860 = vpow.pop %v859
  %v861 = vmul.f32 %v844, 1.442695
  %v862 = vpow.pop %v861
  %v863 = vmul.f32 %v845, 1.442695
  %v864 = vpow.pop %v863
  %v865 = vmul.f32 %v846, 1.442695
  %v866 = vpow.pop %v865
  %v867 = vmul.f32 %v847, 1.442695
  %v868 = vpow.pop %v867
  %v869 = vmul.f32 %v848, 1.442695
  %v870 = vpow.pop %v869
  %v871 = vmul.f32 %v849, 1.442695
  %v872 = vpow.pop %v871
  %v873 = vmul.f32 %v850, 1.442695
  %v874 = vpow.pop %v873
  %v875 = vmul.f32 %v851, 1.442695
  %v876 = vpow.pop %v875
  %v877 = vmul.f32 %v852, 1.442695
  %v878 = vpow.pop %v877
  %v879 = vmul.f32 %v853, 1.442695
  %v880 = vpow.pop %v879
  %v881 = vmul.f32 %v854, 1.442695
  %v882 = vpow.pop %v881
  %v883 = vmul.f32 %v855, 1.442695
  %v884 = vpow.pop %v883
  %v885 = vmul.f32 %v856, 1.442695
  %v886 = vpow.pop %v885
  %v887 = vmul.f32 %v857, 1.442695
  %v888 = vpow.pop %v887
  %v889 = vmul.f32 %v858, 1.442695
  %v890 = vpow.pop %v889
  %v891 = vld [vmem:[#allocation4] sm:$0xff]
  %v892 = vld [vmem:[#allocation4 + $0x8] sm:$0xff]
  %v893 = vld [vmem:[#allocation4 + $0x10] sm:$0xff]
  %v894 = vld [vmem:[#allocation4 + $0x18] sm:$0xff]
  %v895 = vld [vmem:[#allocation4 + $0x20] sm:$0xff]
  %v896 = vld [vmem:[#allocation4 + $0x28] sm:$0xff]
  %v897 = vld [vmem:[#allocation4 + $0x30] sm:$0xff]
  %v898 = vld [vmem:[#allocation4 + $0x38] sm:$0xff]
  %v899 = vld [vmem:[#allocation4 + $0x40] sm:$0xff]
  %v900 = vld [vmem:[#allocation4 + $0x48] sm:$0xff]
  %v901 = vld [vmem:[#allocation4 + $0x50] sm:$0xff]
  %v902 = vld [vmem:[#allocation4 + $0x58] sm:$0xff]
  %v903 = vld [vmem:[#allocation4 + $0x60] sm:$0xff]
  %v904 = vld [vmem:[#allocation4 + $0x68] sm:$0xff]
  %v905 = vld [vmem:[#allocation4 + $0x70] sm:$0xff]
  %v906 = vld [vmem:[#allocation4 + $0x78] sm:$0xff]
  %v907 = vmul.f32 %v732, %v891
  %v908 = vmul.f32 %v734, %v892
  %v909 = vmul.f32 %v736, %v893
  %v910 = vmul.f32 %v738, %v894
  %v911 = vmul.f32 %v740, %v895
  %v912 = vmul.f32 %v742, %v896
  %v913 = vmul.f32 %v744, %v897
  %v914 = vmul.f32 %v746, %v898
  %v915 = vmul.f32 %v748, %v899
  %v916 = vmul.f32 %v750, %v900
  %v917 = vmul.f32 %v752, %v901
  %v918 = vmul.f32 %v754, %v902
  %v919 = vmul.f32 %v756, %v903
  %v920 = vmul.f32 %v758, %v904
  %v921 = vmul.f32 %v760, %v905
  %v922 = vmul.f32 %v762, %v906
  %923 = vadd.xlane.f32.xlu0 %v860
  %v924 = vpop.xlane.xlu0 %923
  %925 = vadd.xlane.f32.xlu0 %v862
  %v926 = vpop.xlane.xlu0 %925
  %927 = vadd.xlane.f32.xlu0 %v864
  %v928 = vpop.xlane.xlu0 %927
  %929 = vadd.xlane.f32.xlu0 %v866
  %v930 = vpop.xlane.xlu0 %929
  %931 = vadd.xlane.f32.xlu0 %v868
  %v932 = vpop.xlane.xlu0 %931
  %933 = vadd.xlane.f32.xlu0 %v870
  %v934 = vpop.xlane.xlu0 %933
  %935 = vadd.xlane.f32.xlu0 %v872
  %v936 = vpop.xlane.xlu0 %935
  %937 = vadd.xlane.f32.xlu0 %v874
  %v938 = vpop.xlane.xlu0 %937
  %939 = vadd.xlane.f32.xlu0 %v876
  %v940 = vpop.xlane.xlu0 %939
  %941 = vadd.xlane.f32.xlu0 %v878
  %v942 = vpop.xlane.xlu0 %941
  %943 = vadd.xlane.f32.xlu0 %v880
  %v944 = vpop.xlane.xlu0 %943
  %945 = vadd.xlane.f32.xlu0 %v882
  %v946 = vpop.xlane.xlu0 %945
  %947 = vadd.xlane.f32.xlu0 %v884
  %v948 = vpop.xlane.xlu0 %947
  %949 = vadd.xlane.f32.xlu0 %v886
  %v950 = vpop.xlane.xlu0 %949
  %951 = vadd.xlane.f32.xlu0 %v888
  %v952 = vpop.xlane.xlu0 %951
  %953 = vadd.xlane.f32.xlu0 %v890
  %v954 = vpop.xlane.xlu0 %953
  %v955 = vadd.f32 %v907, %v924
  %v956 = vadd.f32 %v908, %v926
  %v957 = vadd.f32 %v909, %v928
  %v958 = vadd.f32 %v910, %v930
  %v959 = vadd.f32 %v911, %v932
  %v960 = vadd.f32 %v912, %v934
  %v961 = vadd.f32 %v913, %v936
  %v962 = vadd.f32 %v914, %v938
  %v963 = vadd.f32 %v915, %v940
  %v964 = vadd.f32 %v916, %v942
  %v965 = vadd.f32 %v917, %v944
  %v966 = vadd.f32 %v918, %v946
  %v967 = vadd.f32 %v919, %v948
  %v968 = vadd.f32 %v920, %v950
  %v969 = vadd.f32 %v921, %v952
  %v970 = vadd.f32 %v922, %v954
  %vm971 = vcmask 7168
  %972 = vst.msk [vmem:[#allocation4] sm:$0xff] %vm971, %v955
  %973 = vst.msk [vmem:[#allocation4 + $0x8] sm:$0xff] %vm971, %v956
  %974 = vst.msk [vmem:[#allocation4 + $0x10] sm:$0xff] %vm971, %v957
  %975 = vst.msk [vmem:[#allocation4 + $0x18] sm:$0xff] %vm971, %v958
  %976 = vst.msk [vmem:[#allocation4 + $0x20] sm:$0xff] %vm971, %v959
  %977 = vst.msk [vmem:[#allocation4 + $0x28] sm:$0xff] %vm971, %v960
  %978 = vst.msk [vmem:[#allocation4 + $0x30] sm:$0xff] %vm971, %v961
  %979 = vst.msk [vmem:[#allocation4 + $0x38] sm:$0xff] %vm971, %v962
  %980 = vst.msk [vmem:[#allocation4 + $0x40] sm:$0xff] %vm971, %v963
  %981 = vst.msk [vmem:[#allocation4 + $0x48] sm:$0xff] %vm971, %v964
  %982 = vst.msk [vmem:[#allocation4 + $0x50] sm:$0xff] %vm971, %v965
  %983 = vst.msk [vmem:[#allocation4 + $0x58] sm:$0xff] %vm971, %v966
  %984 = vst.msk [vmem:[#allocation4 + $0x60] sm:$0xff] %vm971, %v967
  %985 = vst.msk [vmem:[#allocation4 + $0x68] sm:$0xff] %vm971, %v968
  %986 = vst.msk [vmem:[#allocation4 + $0x70] sm:$0xff] %vm971, %v969
  %987 = vst.msk [vmem:[#allocation4 + $0x78] sm:$0xff] %vm971, %v970
  %v988 = vld [vmem:[#allocation5] sm:$0xff]
  %v989 = vld [vmem:[#allocation5 + $0x8] sm:$0xff]
  %v990 = vld [vmem:[#allocation5 + $0x10] sm:$0xff]
  %v991 = vld [vmem:[#allocation5 + $0x18] sm:$0xff]
  %v992 = vld [vmem:[#allocation5 + $0x20] sm:$0xff]
  %v993 = vld [vmem:[#allocation5 + $0x28] sm:$0xff]
  %v994 = vld [vmem:[#allocation5 + $0x30] sm:$0xff]
  %v995 = vld [vmem:[#allocation5 + $0x38] sm:$0xff]
  %v996 = vld [vmem:[#allocation5 + $0x40] sm:$0xff]
  %v997 = vld [vmem:[#allocation5 + $0x48] sm:$0xff]
  %v998 = vld [vmem:[#allocation5 + $0x50] sm:$0xff]
  %v999 = vld [vmem:[#allocation5 + $0x58] sm:$0xff]
  %v1000 = vld [vmem:[#allocation5 + $0x60] sm:$0xff]
  %v1001 = vld [vmem:[#allocation5 + $0x68] sm:$0xff]
  %v1002 = vld [vmem:[#allocation5 + $0x70] sm:$0xff]
  %v1003 = vld [vmem:[#allocation5 + $0x78] sm:$0xff]
  %1005 = vset.pattern.permute.xlu0 0
  %1006 = vperm.xlu0 %1005, %v732
  %v1007 = vpop.permute.xlu0 %1006
  %1010 = vset.pattern.permute.xlu0 0
  %1011 = vperm.xlu0 %1010, %v734
  %v1012 = vpop.permute.xlu0 %1011
  %1015 = vset.pattern.permute.xlu0 0
  %1016 = vperm.xlu0 %1015, %v736
  %v1017 = vpop.permute.xlu0 %1016
  %1020 = vset.pattern.permute.xlu0 0
  %1021 = vperm.xlu0 %1020, %v738
  %v1022 = vpop.permute.xlu0 %1021
  %1025 = vset.pattern.permute.xlu0 0
  %1026 = vperm.xlu0 %1025, %v740
  %v1027 = vpop.permute.xlu0 %1026
  %1030 = vset.pattern.permute.xlu0 0
  %1031 = vperm.xlu0 %1030, %v742
  %v1032 = vpop.permute.xlu0 %1031
  %1035 = vset.pattern.permute.xlu0 0
  %1036 = vperm.xlu0 %1035, %v744
  %v1037 = vpop.permute.xlu0 %1036
  %1040 = vset.pattern.permute.xlu0 0
  %1041 = vperm.xlu0 %1040, %v746
  %v1042 = vpop.permute.xlu0 %1041
  %1045 = vset.pattern.permute.xlu0 0
  %1046 = vperm.xlu0 %1045, %v748
  %v1047 = vpop.permute.xlu0 %1046
  %1050 = vset.pattern.permute.xlu0 0
  %1051 = vperm.xlu0 %1050, %v750
  %v1052 = vpop.permute.xlu0 %1051
  %1055 = vset.pattern.permute.xlu0 0
  %1056 = vperm.xlu0 %1055, %v752
  %v1057 = vpop.permute.xlu0 %1056
  %1060 = vset.pattern.permute.xlu0 0
  %1061 = vperm.xlu0 %1060, %v754
  %v1062 = vpop.permute.xlu0 %1061
  %1065 = vset.pattern.permute.xlu0 0
  %1066 = vperm.xlu0 %1065, %v756
  %v1067 = vpop.permute.xlu0 %1066
  %1070 = vset.pattern.permute.xlu0 0
  %1071 = vperm.xlu0 %1070, %v758
  %v1072 = vpop.permute.xlu0 %1071
  %1075 = vset.pattern.permute.xlu0 0
  %1076 = vperm.xlu0 %1075, %v760
  %v1077 = vpop.permute.xlu0 %1076
  %1080 = vset.pattern.permute.xlu0 0
  %1081 = vperm.xlu0 %1080, %v762
  %v1082 = vpop.permute.xlu0 %1081
  %v1084 = vmul.f32 %v1007, %v988
  %v1085 = vmul.f32 %v1012, %v989
  %v1086 = vmul.f32 %v1017, %v990
  %v1087 = vmul.f32 %v1022, %v991
  %v1088 = vmul.f32 %v1027, %v992
  %v1089 = vmul.f32 %v1032, %v993
  %v1090 = vmul.f32 %v1037, %v994
  %v1091 = vmul.f32 %v1042, %v995
  %v1092 = vmul.f32 %v1047, %v996
  %v1093 = vmul.f32 %v1052, %v997
  %v1094 = vmul.f32 %v1057, %v998
  %v1095 = vmul.f32 %v1062, %v999
  %v1096 = vmul.f32 %v1067, %v1000
  %v1097 = vmul.f32 %v1072, %v1001
  %v1098 = vmul.f32 %v1077, %v1002
  %v1099 = vmul.f32 %v1082, %v1003
  %v1100 = vpack.c.bf16 %v862, %v860
  %v1101 = vpack.c.bf16 %v866, %v864
  %v1102 = vpack.c.bf16 %v870, %v868
  %v1103 = vpack.c.bf16 %v874, %v872
  %v1104 = vpack.c.bf16 %v878, %v876
  %v1105 = vpack.c.bf16 %v882, %v880
  %v1106 = vpack.c.bf16 %v886, %v884
  %v1107 = vpack.c.bf16 %v890, %v888
  %v1124 = vunpack.c.l.b16 %v405
  %v1125 = vunpack.c.l.b16 %v406
  %v1126 = vunpack.c.l.b16 %v407
  %v1127 = vunpack.c.l.b16 %v408
  %v1128 = vunpack.c.l.b16 %v409
  %v1129 = vunpack.c.l.b16 %v410
  %v1130 = vunpack.c.l.b16 %v411
  %v1131 = vunpack.c.l.b16 %v412
  %v1132 = vunpack.c.l.b16 %v413
  %v1133 = vunpack.c.l.b16 %v414
  %v1134 = vunpack.c.l.b16 %v415
  %v1135 = vunpack.c.l.b16 %v416
  %v1136 = vunpack.c.l.b16 %v417
  %v1137 = vunpack.c.l.b16 %v418
  %v1138 = vunpack.c.l.b16 %v419
  %v1139 = vunpack.c.l.b16 %v420
  %v1140 = vpack.c.b16 %v1125, %v1124
  %v1141 = vpack.c.b16 %v1127, %v1126
  %v1142 = vpack.c.b16 %v1129, %v1128
  %v1143 = vpack.c.b16 %v1131, %v1130
  %v1144 = vpack.c.b16 %v1133, %v1132
  %v1145 = vpack.c.b16 %v1135, %v1134
  %v1146 = vpack.c.b16 %v1137, %v1136
  %v1147 = vpack.c.b16 %v1139, %v1138
  %1156 = vmatpush.bf16.msra.mxu0 %v1147
  %1157 = vmatpush.bf16.msra.mxu0 %v1146
  %1158 = vmatpush.bf16.msra.mxu0 %v1145
  %1159 = vmatpush.bf16.msra.mxu0 %v1144
  %1160 = vmatpush.bf16.msra.mxu0 %v1143
  %1161 = vmatpush.bf16.msra.mxu0 %v1142
  %1162 = vmatpush.bf16.msra.mxu0 %v1141
  %1163 = vmatpush.bf16.msra.mxu0 %v1140
  %1164 = vmatmul.bf16.gmra.mxu0 %v1100
  %v1165 = vpop.f32.mrf.mxu0
  %v1166 = vadd.f32 0.0, %v1165
  %v1167 = vpop.f32.mrf.mxu0
  %v1168 = vadd.f32 0.0, %v1167
  %1169 = vmatmul.bf16.gmra.mxu0 %v1101
  %v1170 = vpop.f32.mrf.mxu0
  %v1171 = vadd.f32 0.0, %v1170
  %v1172 = vpop.f32.mrf.mxu0
  %v1173 = vadd.f32 0.0, %v1172
  %1174 = vmatmul.bf16.gmra.mxu0 %v1102
  %v1175 = vpop.f32.mrf.mxu0
  %v1176 = vadd.f32 0.0, %v1175
  %v1177 = vpop.f32.mrf.mxu0
  %v1178 = vadd.f32 0.0, %v1177
  %1179 = vmatmul.bf16.gmra.mxu0 %v1103
  %v1180 = vpop.f32.mrf.mxu0
  %v1181 = vadd.f32 0.0, %v1180
  %v1182 = vpop.f32.mrf.mxu0
  %v1183 = vadd.f32 0.0, %v1182
  %1184 = vmatmul.bf16.gmra.mxu0 %v1104
  %v1185 = vpop.f32.mrf.mxu0
  %v1186 = vadd.f32 0.0, %v1185
  %v1187 = vpop.f32.mrf.mxu0
  %v1188 = vadd.f32 0.0, %v1187
  %1189 = vmatmul.bf16.gmra.mxu0 %v1105
  %v1190 = vpop.f32.mrf.mxu0
  %v1191 = vadd.f32 0.0, %v1190
  %v1192 = vpop.f32.mrf.mxu0
  %v1193 = vadd.f32 0.0, %v1192
  %1194 = vmatmul.bf16.gmra.mxu0 %v1106
  %v1195 = vpop.f32.mrf.mxu0
  %v1196 = vadd.f32 0.0, %v1195
  %v1197 = vpop.f32.mrf.mxu0
  %v1198 = vadd.f32 0.0, %v1197
  %1199 = vmatmul.bf16.gmra.mxu0 %v1107
  %v1200 = vpop.f32.mrf.mxu0
  %v1201 = vadd.f32 0.0, %v1200
  %v1202 = vpop.f32.mrf.mxu0
  %v1203 = vadd.f32 0.0, %v1202
  %1204 = vdwg.mxu0
  %v1205 = vadd.f32 %v1084, %v1166
  %v1206 = vadd.f32 %v1085, %v1168
  %v1207 = vadd.f32 %v1086, %v1171
  %v1208 = vadd.f32 %v1087, %v1173
  %v1209 = vadd.f32 %v1088, %v1176
  %v1210 = vadd.f32 %v1089, %v1178
  %v1211 = vadd.f32 %v1090, %v1181
  %v1212 = vadd.f32 %v1091, %v1183
  %v1213 = vadd.f32 %v1092, %v1186
  %v1214 = vadd.f32 %v1093, %v1188
  %v1215 = vadd.f32 %v1094, %v1191
  %v1216 = vadd.f32 %v1095, %v1193
  %v1217 = vadd.f32 %v1096, %v1196
  %v1218 = vadd.f32 %v1097, %v1198
  %v1219 = vadd.f32 %v1098, %v1201
  %v1220 = vadd.f32 %v1099, %v1203
  %1221 = vst [vmem:[#allocation5] sm:$0xff] %v1205
  %1222 = vst [vmem:[#allocation5 + $0x8] sm:$0xff] %v1206
  %1223 = vst [vmem:[#allocation5 + $0x10] sm:$0xff] %v1207
  %1224 = vst [vmem:[#allocation5 + $0x18] sm:$0xff] %v1208
  %1225 = vst [vmem:[#allocation5 + $0x20] sm:$0xff] %v1209
  %1226 = vst [vmem:[#allocation5 + $0x28] sm:$0xff] %v1210
  %1227 = vst [vmem:[#allocation5 + $0x30] sm:$0xff] %v1211
  %1228 = vst [vmem:[#allocation5 + $0x38] sm:$0xff] %v1212
  %1229 = vst [vmem:[#allocation5 + $0x40] sm:$0xff] %v1213
  %1230 = vst [vmem:[#allocation5 + $0x48] sm:$0xff] %v1214
  %1231 = vst [vmem:[#allocation5 + $0x50] sm:$0xff] %v1215
  %1232 = vst [vmem:[#allocation5 + $0x58] sm:$0xff] %v1216
  %1233 = vst [vmem:[#allocation5 + $0x60] sm:$0xff] %v1217
  %1234 = vst [vmem:[#allocation5 + $0x68] sm:$0xff] %v1218
  %1235 = vst [vmem:[#allocation5 + $0x70] sm:$0xff] %v1219
  %1236 = vst [vmem:[#allocation5 + $0x78] sm:$0xff] %v1220
  %1237 = vst.msk [vmem:[#allocation3] sm:$0xff] %vm971, %v699
  %1238 = vst.msk [vmem:[#allocation3 + $0x8] sm:$0xff] %vm971, %v700
  %1239 = vst.msk [vmem:[#allocation3 + $0x10] sm:$0xff] %vm971, %v701
  %1240 = vst.msk [vmem:[#allocation3 + $0x18] sm:$0xff] %vm971, %v702
  %1241 = vst.msk [vmem:[#allocation3 + $0x20] sm:$0xff] %vm971, %v703
  %1242 = vst.msk [vmem:[#allocation3 + $0x28] sm:$0xff] %vm971, %v704
  %1243 = vst.msk [vmem:[#allocation3 + $0x30] sm:$0xff] %vm971, %v705
  %1244 = vst.msk [vmem:[#allocation3 + $0x38] sm:$0xff] %vm971, %v706
  %1245 = vst.msk [vmem:[#allocation3 + $0x40] sm:$0xff] %vm971, %v707
  %1246 = vst.msk [vmem:[#allocation3 + $0x48] sm:$0xff] %vm971, %v708
  %1247 = vst.msk [vmem:[#allocation3 + $0x50] sm:$0xff] %vm971, %v709
  %1248 = vst.msk [vmem:[#allocation3 + $0x58] sm:$0xff] %vm971, %v710
  %1249 = vst.msk [vmem:[#allocation3 + $0x60] sm:$0xff] %vm971, %v711
  %1250 = vst.msk [vmem:[#allocation3 + $0x68] sm:$0xff] %vm971, %v712
  %1251 = vst.msk [vmem:[#allocation3 + $0x70] sm:$0xff] %vm971, %v713
  %1252 = vst.msk [vmem:[#allocation3 + $0x78] sm:$0xff] %vm971, %v714
  %v1253 = vld [vmem:[%s4 + $0x1] sm:$0x1]
  %v1254 = vrot.slane %v405, 4
  %v1255 = vrot.slane %v406, 4
  %v1256 = vrot.slane %v407, 4
  %v1257 = vrot.slane %v408, 4
  %v1258 = vrot.slane %v409, 4
  %v1259 = vrot.slane %v410, 4
  %v1260 = vrot.slane %v411, 4
  %v1261 = vrot.slane %v412, 4
  %v1262 = vrot.slane %v413, 4
  %v1263 = vrot.slane %v414, 4
  %v1264 = vrot.slane %v415, 4
  %v1265 = vrot.slane %v416, 4
  %v1266 = vrot.slane %v417, 4
  %v1267 = vrot.slane %v418, 4
  %v1268 = vrot.slane %v419, 4
  %v1269 = vrot.slane %v420, 4
  %v1286 = vunpack.c.l.bf16 %v1254
  %v1287 = vunpack.c.l.bf16 %v1255
  %v1288 = vunpack.c.l.bf16 %v1256
  %v1289 = vunpack.c.l.bf16 %v1257
  %v1290 = vunpack.c.l.bf16 %v1258
  %v1291 = vunpack.c.l.bf16 %v1259
  %v1292 = vunpack.c.l.bf16 %v1260
  %v1293 = vunpack.c.l.bf16 %v1261
  %v1294 = vunpack.c.l.bf16 %v1262
  %v1295 = vunpack.c.l.bf16 %v1263
  %v1296 = vunpack.c.l.bf16 %v1264
  %v1297 = vunpack.c.l.bf16 %v1265
  %v1298 = vunpack.c.l.bf16 %v1266
  %v1299 = vunpack.c.l.bf16 %v1267
  %v1300 = vunpack.c.l.bf16 %v1268
  %v1301 = vunpack.c.l.bf16 %v1269
  %1302 = vmatpush.xpose.msra.mxu0 %v1301
  %1303 = vmatpush.xpose.msra.mxu0 %v1300
  %1304 = vmatpush.xpose.msra.mxu0 %v1299
  %1305 = vmatpush.xpose.msra.mxu0 %v1298
  %1306 = vmatpush.xpose.msra.mxu0 %v1297
  %1307 = vmatpush.xpose.msra.mxu0 %v1296
  %1308 = vmatpush.xpose.msra.mxu0 %v1295
  %1309 = vmatpush.xpose.msra.mxu0 %v1294
  %1310 = vmatpush.xpose.msra.mxu0 %v1293
  %1311 = vmatpush.xpose.msra.mxu0 %v1292
  %1312 = vmatpush.xpose.msra.mxu0 %v1291
  %1313 = vmatpush.xpose.msra.mxu0 %v1290
  %1314 = vmatpush.xpose.msra.mxu0 %v1289
  %1315 = vmatpush.xpose.msra.mxu0 %v1288
  %1316 = vmatpush.xpose.msra.mxu0 %v1287
  %1317 = vmatpush.xpose.msra.mxu0 %v1286
  %1318 = vmatmul.f32.gmra.mxu0 %v1253
  %v1319 = vpop.f32.mrf.mxu0
  %v1320 = vadd.f32 0.0, %v1319
  %1321 = vdwg.mxu0
  %s1322 = scalar_lea.vmem [#allocation2], 128
  %v1323 = vld [vmem:[%s1322] sm:$0xff]
  %v1324 = vld [vmem:[%s1322 + $0x8] sm:$0xff]
  %v1325 = vld [vmem:[%s1322 + $0x10] sm:$0xff]
  %v1326 = vld [vmem:[%s1322 + $0x18] sm:$0xff]
  %v1327 = vld [vmem:[%s1322 + $0x20] sm:$0xff]
  %v1328 = vld [vmem:[%s1322 + $0x28] sm:$0xff]
  %v1329 = vld [vmem:[%s1322 + $0x30] sm:$0xff]
  %v1330 = vld [vmem:[%s1322 + $0x38] sm:$0xff]
  %v1331 = vld [vmem:[%s1322 + $0x40] sm:$0xff]
  %v1332 = vld [vmem:[%s1322 + $0x48] sm:$0xff]
  %v1333 = vld [vmem:[%s1322 + $0x50] sm:$0xff]
  %v1334 = vld [vmem:[%s1322 + $0x58] sm:$0xff]
  %v1335 = vld [vmem:[%s1322 + $0x60] sm:$0xff]
  %v1336 = vld [vmem:[%s1322 + $0x68] sm:$0xff]
  %v1337 = vld [vmem:[%s1322 + $0x70] sm:$0xff]
  %v1338 = vld [vmem:[%s1322 + $0x78] sm:$0xff]
  %1340 = vset.pattern.permute.xlu0 0
  %1341 = vperm.xlu0 %1340, %v1323
  %v1342 = vpop.permute.xlu0 %1341
  %1345 = vset.pattern.permute.xlu0 0
  %1346 = vperm.xlu0 %1345, %v1324
  %v1347 = vpop.permute.xlu0 %1346
  %1350 = vset.pattern.permute.xlu0 0
  %1351 = vperm.xlu0 %1350, %v1325
  %v1352 = vpop.permute.xlu0 %1351
  %1355 = vset.pattern.permute.xlu0 0
  %1356 = vperm.xlu0 %1355, %v1326
  %v1357 = vpop.permute.xlu0 %1356
  %1360 = vset.pattern.permute.xlu0 0
  %1361 = vperm.xlu0 %1360, %v1327
  %v1362 = vpop.permute.xlu0 %1361
  %1365 = vset.pattern.permute.xlu0 0
  %1366 = vperm.xlu0 %1365, %v1328
  %v1367 = vpop.permute.xlu0 %1366
  %1370 = vset.pattern.permute.xlu0 0
  %1371 = vperm.xlu0 %1370, %v1329
  %v1372 = vpop.permute.xlu0 %1371
  %1375 = vset.pattern.permute.xlu0 0
  %1376 = vperm.xlu0 %1375, %v1330
  %v1377 = vpop.permute.xlu0 %1376
  %1380 = vset.pattern.permute.xlu0 0
  %1381 = vperm.xlu0 %1380, %v1331
  %v1382 = vpop.permute.xlu0 %1381
  %1385 = vset.pattern.permute.xlu0 0
  %1386 = vperm.xlu0 %1385, %v1332
  %v1387 = vpop.permute.xlu0 %1386
  %1390 = vset.pattern.permute.xlu0 0
  %1391 = vperm.xlu0 %1390, %v1333
  %v1392 = vpop.permute.xlu0 %1391
  %1395 = vset.pattern.permute.xlu0 0
  %1396 = vperm.xlu0 %1395, %v1334
  %v1397 = vpop.permute.xlu0 %1396
  %1400 = vset.pattern.permute.xlu0 0
  %1401 = vperm.xlu0 %1400, %v1335
  %v1402 = vpop.permute.xlu0 %1401
  %1405 = vset.pattern.permute.xlu0 0
  %1406 = vperm.xlu0 %1405, %v1336
  %v1407 = vpop.permute.xlu0 %1406
  %1410 = vset.pattern.permute.xlu0 0
  %1411 = vperm.xlu0 %1410, %v1337
  %v1412 = vpop.permute.xlu0 %1411
  %1415 = vset.pattern.permute.xlu0 0
  %1416 = vperm.xlu0 %1415, %v1338
  %v1417 = vpop.permute.xlu0 %1416
  %v1419 = vperm.slane %v1320, 0
  %v1420 = vadd.f32 %v1342, %v1419
  %v1421 = vadd.f32 %v1347, %v1419
  %v1422 = vadd.f32 %v1352, %v1419
  %v1423 = vadd.f32 %v1357, %v1419
  %v1424 = vadd.f32 %v1362, %v1419
  %v1425 = vadd.f32 %v1367, %v1419
  %v1426 = vadd.f32 %v1372, %v1419
  %v1427 = vadd.f32 %v1377, %v1419
  %v1428 = vadd.f32 %v1382, %v1419
  %v1429 = vadd.f32 %v1387, %v1419
  %v1430 = vadd.f32 %v1392, %v1419
  %v1431 = vadd.f32 %v1397, %v1419
  %v1432 = vadd.f32 %v1402, %v1419
  %v1433 = vadd.f32 %v1407, %v1419
  %v1434 = vadd.f32 %v1412, %v1419
  %v1435 = vadd.f32 %v1417, %v1419
  %vm1436 = vcmp.gt.f32.partialorder %v1420, 0.0
  %vm1437 = vcmp.gt.f32.partialorder %v1421, 0.0
  %vm1438 = vcmp.gt.f32.partialorder %v1422, 0.0
  %vm1439 = vcmp.gt.f32.partialorder %v1423, 0.0
  %vm1440 = vcmp.gt.f32.partialorder %v1424, 0.0
  %vm1441 = vcmp.gt.f32.partialorder %v1425, 0.0
  %vm1442 = vcmp.gt.f32.partialorder %v1426, 0.0
  %vm1443 = vcmp.gt.f32.partialorder %v1427, 0.0
  %vm1444 = vcmp.gt.f32.partialorder %v1428, 0.0
  %vm1445 = vcmp.gt.f32.partialorder %v1429, 0.0
  %vm1446 = vcmp.gt.f32.partialorder %v1430, 0.0
  %vm1447 = vcmp.gt.f32.partialorder %v1431, 0.0
  %vm1448 = vcmp.gt.f32.partialorder %v1432, 0.0
  %vm1449 = vcmp.gt.f32.partialorder %v1433, 0.0
  %vm1450 = vcmp.gt.f32.partialorder %v1434, 0.0
  %vm1451 = vcmp.gt.f32.partialorder %v1435, 0.0
  %v1452 = vmul.f32 %v1420, 0.2
  %v1453 = vmul.f32 %v1421, 0.2
  %v1454 = vmul.f32 %v1422, 0.2
  %v1455 = vmul.f32 %v1423, 0.2
  %v1456 = vmul.f32 %v1424, 0.2
  %v1457 = vmul.f32 %v1425, 0.2
  %v1458 = vmul.f32 %v1426, 0.2
  %v1459 = vmul.f32 %v1427, 0.2
  %v1460 = vmul.f32 %v1428, 0.2
  %v1461 = vmul.f32 %v1429, 0.2
  %v1462 = vmul.f32 %v1430, 0.2
  %v1463 = vmul.f32 %v1431, 0.2
  %v1464 = vmul.f32 %v1432, 0.2
  %v1465 = vmul.f32 %v1433, 0.2
  %v1466 = vmul.f32 %v1434, 0.2
  %v1467 = vmul.f32 %v1435, 0.2
  %v1468 = vsel %vm1436, %v1420, %v1452
  %v1469 = vsel %vm1437, %v1421, %v1453
  %v1470 = vsel %vm1438, %v1422, %v1454
  %v1471 = vsel %vm1439, %v1423, %v1455
  %v1472 = vsel %vm1440, %v1424, %v1456
  %v1473 = vsel %vm1441, %v1425, %v1457
  %v1474 = vsel %vm1442, %v1426, %v1458
  %v1475 = vsel %vm1443, %v1427, %v1459
  %v1476 = vsel %vm1444, %v1428, %v1460
  %v1477 = vsel %vm1445, %v1429, %v1461
  %v1478 = vsel %vm1446, %v1430, %v1462
  %v1479 = vsel %vm1447, %v1431, %v1463
  %v1480 = vsel %vm1448, %v1432, %v1464
  %v1481 = vsel %vm1449, %v1433, %v1465
  %v1482 = vsel %vm1450, %v1434, %v1466
  %v1483 = vsel %vm1451, %v1435, %v1467
  %v1484 = vsub.f32 0.0, %v1468
  %v1485 = vsub.f32 0.0, %v1469
  %v1486 = vsub.f32 0.0, %v1470
  %v1487 = vsub.f32 0.0, %v1471
  %v1488 = vsub.f32 0.0, %v1472
  %v1489 = vsub.f32 0.0, %v1473
  %v1490 = vsub.f32 0.0, %v1474
  %v1491 = vsub.f32 0.0, %v1475
  %v1492 = vsub.f32 0.0, %v1476
  %v1493 = vsub.f32 0.0, %v1477
  %v1494 = vsub.f32 0.0, %v1478
  %v1495 = vsub.f32 0.0, %v1479
  %v1496 = vsub.f32 0.0, %v1480
  %v1497 = vsub.f32 0.0, %v1481
  %v1498 = vsub.f32 0.0, %v1482
  %v1499 = vsub.f32 0.0, %v1483
  %v1500 = vsel %vm59, %v1484, -1e+30
  %v1501 = vsel %vm60, %v1485, -1e+30
  %v1502 = vsel %vm61, %v1486, -1e+30
  %v1503 = vsel %vm62, %v1487, -1e+30
  %v1504 = vsel %vm63, %v1488, -1e+30
  %v1505 = vsel %vm64, %v1489, -1e+30
  %v1506 = vsel %vm65, %v1490, -1e+30
  %v1507 = vsel %vm66, %v1491, -1e+30
  %v1508 = vsel %vm67, %v1492, -1e+30
  %v1509 = vsel %vm68, %v1493, -1e+30
  %v1510 = vsel %vm69, %v1494, -1e+30
  %v1511 = vsel %vm70, %v1495, -1e+30
  %v1512 = vsel %vm71, %v1496, -1e+30
  %v1513 = vsel %vm72, %v1497, -1e+30
  %v1514 = vsel %vm73, %v1498, -1e+30
  %v1515 = vsel %vm74, %v1499, -1e+30
  %s1516 = scalar_lea.vmem [#allocation3], 128
  %v1517 = vld [vmem:[%s1516] sm:$0xff]
  %v1518 = vld [vmem:[%s1516 + $0x8] sm:$0xff]
  %v1519 = vld [vmem:[%s1516 + $0x10] sm:$0xff]
  %v1520 = vld [vmem:[%s1516 + $0x18] sm:$0xff]
  %v1521 = vld [vmem:[%s1516 + $0x20] sm:$0xff]
  %v1522 = vld [vmem:[%s1516 + $0x28] sm:$0xff]
  %v1523 = vld [vmem:[%s1516 + $0x30] sm:$0xff]
  %v1524 = vld [vmem:[%s1516 + $0x38] sm:$0xff]
  %v1525 = vld [vmem:[%s1516 + $0x40] sm:$0xff]
  %v1526 = vld [vmem:[%s1516 + $0x48] sm:$0xff]
  %v1527 = vld [vmem:[%s1516 + $0x50] sm:$0xff]
  %v1528 = vld [vmem:[%s1516 + $0x58] sm:$0xff]
  %v1529 = vld [vmem:[%s1516 + $0x60] sm:$0xff]
  %v1530 = vld [vmem:[%s1516 + $0x68] sm:$0xff]
  %v1531 = vld [vmem:[%s1516 + $0x70] sm:$0xff]
  %v1532 = vld [vmem:[%s1516 + $0x78] sm:$0xff]
  %1533 = vmax.xlane.f32.xlu0 %v1500
  %v1534 = vpop.xlane.xlu0 %1533
  %1535 = vmax.xlane.f32.xlu0 %v1501
  %v1536 = vpop.xlane.xlu0 %1535
  %1537 = vmax.xlane.f32.xlu0 %v1502
  %v1538 = vpop.xlane.xlu0 %1537
  %1539 = vmax.xlane.f32.xlu0 %v1503
  %v1540 = vpop.xlane.xlu0 %1539
  %1541 = vmax.xlane.f32.xlu0 %v1504
  %v1542 = vpop.xlane.xlu0 %1541
  %1543 = vmax.xlane.f32.xlu0 %v1505
  %v1544 = vpop.xlane.xlu0 %1543
  %1545 = vmax.xlane.f32.xlu0 %v1506
  %v1546 = vpop.xlane.xlu0 %1545
  %1547 = vmax.xlane.f32.xlu0 %v1507
  %v1548 = vpop.xlane.xlu0 %1547
  %1549 = vmax.xlane.f32.xlu0 %v1508
  %v1550 = vpop.xlane.xlu0 %1549
  %1551 = vmax.xlane.f32.xlu0 %v1509
  %v1552 = vpop.xlane.xlu0 %1551
  %1553 = vmax.xlane.f32.xlu0 %v1510
  %v1554 = vpop.xlane.xlu0 %1553
  %1555 = vmax.xlane.f32.xlu0 %v1511
  %v1556 = vpop.xlane.xlu0 %1555
  %1557 = vmax.xlane.f32.xlu0 %v1512
  %v1558 = vpop.xlane.xlu0 %1557
  %1559 = vmax.xlane.f32.xlu0 %v1513
  %v1560 = vpop.xlane.xlu0 %1559
  %1561 = vmax.xlane.f32.xlu0 %v1514
  %v1562 = vpop.xlane.xlu0 %1561
  %1563 = vmax.xlane.f32.xlu0 %v1515
  %v1564 = vpop.xlane.xlu0 %1563
  %v1565 = vmax.f32 %v1517, %v1534
  %v1566 = vmax.f32 %v1518, %v1536
  %v1567 = vmax.f32 %v1519, %v1538
  %v1568 = vmax.f32 %v1520, %v1540
  %v1569 = vmax.f32 %v1521, %v1542
  %v1570 = vmax.f32 %v1522, %v1544
  %v1571 = vmax.f32 %v1523, %v1546
  %v1572 = vmax.f32 %v1524, %v1548
  %v1573 = vmax.f32 %v1525, %v1550
  %v1574 = vmax.f32 %v1526, %v1552
  %v1575 = vmax.f32 %v1527, %v1554
  %v1576 = vmax.f32 %v1528, %v1556
  %v1577 = vmax.f32 %v1529, %v1558
  %v1578 = vmax.f32 %v1530, %v1560
  %v1579 = vmax.f32 %v1531, %v1562
  %v1580 = vmax.f32 %v1532, %v1564
  %v1581 = vsub.f32 %v1517, %v1565
  %v1582 = vsub.f32 %v1518, %v1566
  %v1583 = vsub.f32 %v1519, %v1567
  %v1584 = vsub.f32 %v1520, %v1568
  %v1585 = vsub.f32 %v1521, %v1569
  %v1586 = vsub.f32 %v1522, %v1570
  %v1587 = vsub.f32 %v1523, %v1571
  %v1588 = vsub.f32 %v1524, %v1572
  %v1589 = vsub.f32 %v1525, %v1573
  %v1590 = vsub.f32 %v1526, %v1574
  %v1591 = vsub.f32 %v1527, %v1575
  %v1592 = vsub.f32 %v1528, %v1576
  %v1593 = vsub.f32 %v1529, %v1577
  %v1594 = vsub.f32 %v1530, %v1578
  %v1595 = vsub.f32 %v1531, %v1579
  %v1596 = vsub.f32 %v1532, %v1580
  %v1597 = vmul.f32 %v1581, 1.442695
  %v1598 = vpow.pop %v1597
  %v1599 = vmul.f32 %v1582, 1.442695
  %v1600 = vpow.pop %v1599
  %v1601 = vmul.f32 %v1583, 1.442695
  %v1602 = vpow.pop %v1601
  %v1603 = vmul.f32 %v1584, 1.442695
  %v1604 = vpow.pop %v1603
  %v1605 = vmul.f32 %v1585, 1.442695
  %v1606 = vpow.pop %v1605
  %v1607 = vmul.f32 %v1586, 1.442695
  %v1608 = vpow.pop %v1607
  %v1609 = vmul.f32 %v1587, 1.442695
  %v1610 = vpow.pop %v1609
  %v1611 = vmul.f32 %v1588, 1.442695
  %v1612 = vpow.pop %v1611
  %v1613 = vmul.f32 %v1589, 1.442695
  %v1614 = vpow.pop %v1613
  %v1615 = vmul.f32 %v1590, 1.442695
  %v1616 = vpow.pop %v1615
  %v1617 = vmul.f32 %v1591, 1.442695
  %v1618 = vpow.pop %v1617
  %v1619 = vmul.f32 %v1592, 1.442695
  %v1620 = vpow.pop %v1619
  %v1621 = vmul.f32 %v1593, 1.442695
  %v1622 = vpow.pop %v1621
  %v1623 = vmul.f32 %v1594, 1.442695
  %v1624 = vpow.pop %v1623
  %v1625 = vmul.f32 %v1595, 1.442695
  %v1626 = vpow.pop %v1625
  %v1627 = vmul.f32 %v1596, 1.442695
  %v1628 = vpow.pop %v1627
  %1630 = vset.pattern.permute.xlu0 0
  %1631 = vperm.xlu0 %1630, %v1565
  %v1632 = vpop.permute.xlu0 %1631
  %1635 = vset.pattern.permute.xlu0 0
  %1636 = vperm.xlu0 %1635, %v1566
  %v1637 = vpop.permute.xlu0 %1636
  %1640 = vset.pattern.permute.xlu0 0
  %1641 = vperm.xlu0 %1640, %v1567
  %v1642 = vpop.permute.xlu0 %1641
  %1645 = vset.pattern.permute.xlu0 0
  %1646 = vperm.xlu0 %1645, %v1568
  %v1647 = vpop.permute.xlu0 %1646
  %1650 = vset.pattern.permute.xlu0 0
  %1651 = vperm.xlu0 %1650, %v1569
  %v1652 = vpop.permute.xlu0 %1651
  %1655 = vset.pattern.permute.xlu0 0
  %1656 = vperm.xlu0 %1655, %v1570
  %v1657 = vpop.permute.xlu0 %1656
  %1660 = vset.pattern.permute.xlu0 0
  %1661 = vperm.xlu0 %1660, %v1571
  %v1662 = vpop.permute.xlu0 %1661
  %1665 = vset.pattern.permute.xlu0 0
  %1666 = vperm.xlu0 %1665, %v1572
  %v1667 = vpop.permute.xlu0 %1666
  %1670 = vset.pattern.permute.xlu0 0
  %1671 = vperm.xlu0 %1670, %v1573
  %v1672 = vpop.permute.xlu0 %1671
  %1675 = vset.pattern.permute.xlu0 0
  %1676 = vperm.xlu0 %1675, %v1574
  %v1677 = vpop.permute.xlu0 %1676
  %1680 = vset.pattern.permute.xlu0 0
  %1681 = vperm.xlu0 %1680, %v1575
  %v1682 = vpop.permute.xlu0 %1681
  %1685 = vset.pattern.permute.xlu0 0
  %1686 = vperm.xlu0 %1685, %v1576
  %v1687 = vpop.permute.xlu0 %1686
  %1690 = vset.pattern.permute.xlu0 0
  %1691 = vperm.xlu0 %1690, %v1577
  %v1692 = vpop.permute.xlu0 %1691
  %1695 = vset.pattern.permute.xlu0 0
  %1696 = vperm.xlu0 %1695, %v1578
  %v1697 = vpop.permute.xlu0 %1696
  %1700 = vset.pattern.permute.xlu0 0
  %1701 = vperm.xlu0 %1700, %v1579
  %v1702 = vpop.permute.xlu0 %1701
  %1705 = vset.pattern.permute.xlu0 0
  %1706 = vperm.xlu0 %1705, %v1580
  %v1707 = vpop.permute.xlu0 %1706
  %v1709 = vsub.f32 %v1500, %v1632
  %v1710 = vsub.f32 %v1501, %v1637
  %v1711 = vsub.f32 %v1502, %v1642
  %v1712 = vsub.f32 %v1503, %v1647
  %v1713 = vsub.f32 %v1504, %v1652
  %v1714 = vsub.f32 %v1505, %v1657
  %v1715 = vsub.f32 %v1506, %v1662
  %v1716 = vsub.f32 %v1507, %v1667
  %v1717 = vsub.f32 %v1508, %v1672
  %v1718 = vsub.f32 %v1509, %v1677
  %v1719 = vsub.f32 %v1510, %v1682
  %v1720 = vsub.f32 %v1511, %v1687
  %v1721 = vsub.f32 %v1512, %v1692
  %v1722 = vsub.f32 %v1513, %v1697
  %v1723 = vsub.f32 %v1514, %v1702
  %v1724 = vsub.f32 %v1515, %v1707
  %v1725 = vmul.f32 %v1709, 1.442695
  %v1726 = vpow.pop %v1725
  %v1727 = vmul.f32 %v1710, 1.442695
  %v1728 = vpow.pop %v1727
  %v1729 = vmul.f32 %v1711, 1.442695
  %v1730 = vpow.pop %v1729
  %v1731 = vmul.f32 %v1712, 1.442695
  %v1732 = vpow.pop %v1731
  %v1733 = vmul.f32 %v1713, 1.442695
  %v1734 = vpow.pop %v1733
  %v1735 = vmul.f32 %v1714, 1.442695
  %v1736 = vpow.pop %v1735
  %v1737 = vmul.f32 %v1715, 1.442695
  %v1738 = vpow.pop %v1737
  %v1739 = vmul.f32 %v1716, 1.442695
  %v1740 = vpow.pop %v1739
  %v1741 = vmul.f32 %v1717, 1.442695
  %v1742 = vpow.pop %v1741
  %v1743 = vmul.f32 %v1718, 1.442695
  %v1744 = vpow.pop %v1743
  %v1745 = vmul.f32 %v1719, 1.442695
  %v1746 = vpow.pop %v1745
  %v1747 = vmul.f32 %v1720, 1.442695
  %v1748 = vpow.pop %v1747
  %v1749 = vmul.f32 %v1721, 1.442695
  %v1750 = vpow.pop %v1749
  %v1751 = vmul.f32 %v1722, 1.442695
  %v1752 = vpow.pop %v1751
  %v1753 = vmul.f32 %v1723, 1.442695
  %v1754 = vpow.pop %v1753
  %v1755 = vmul.f32 %v1724, 1.442695
  %v1756 = vpow.pop %v1755
  %s1757 = scalar_lea.vmem [#allocation4], 128
  %v1758 = vld [vmem:[%s1757] sm:$0xff]
  %v1759 = vld [vmem:[%s1757 + $0x8] sm:$0xff]
  %v1760 = vld [vmem:[%s1757 + $0x10] sm:$0xff]
  %v1761 = vld [vmem:[%s1757 + $0x18] sm:$0xff]
  %v1762 = vld [vmem:[%s1757 + $0x20] sm:$0xff]
  %v1763 = vld [vmem:[%s1757 + $0x28] sm:$0xff]
  %v1764 = vld [vmem:[%s1757 + $0x30] sm:$0xff]
  %v1765 = vld [vmem:[%s1757 + $0x38] sm:$0xff]
  %v1766 = vld [vmem:[%s1757 + $0x40] sm:$0xff]
  %v1767 = vld [vmem:[%s1757 + $0x48] sm:$0xff]
  %v1768 = vld [vmem:[%s1757 + $0x50] sm:$0xff]
  %v1769 = vld [vmem:[%s1757 + $0x58] sm:$0xff]
  %v1770 = vld [vmem:[%s1757 + $0x60] sm:$0xff]
  %v1771 = vld [vmem:[%s1757 + $0x68] sm:$0xff]
  %v1772 = vld [vmem:[%s1757 + $0x70] sm:$0xff]
  %v1773 = vld [vmem:[%s1757 + $0x78] sm:$0xff]
  %v1774 = vmul.f32 %v1598, %v1758
  %v1775 = vmul.f32 %v1600, %v1759
  %v1776 = vmul.f32 %v1602, %v1760
  %v1777 = vmul.f32 %v1604, %v1761
  %v1778 = vmul.f32 %v1606, %v1762
  %v1779 = vmul.f32 %v1608, %v1763
  %v1780 = vmul.f32 %v1610, %v1764
  %v1781 = vmul.f32 %v1612, %v1765
  %v1782 = vmul.f32 %v1614, %v1766
  %v1783 = vmul.f32 %v1616, %v1767
  %v1784 = vmul.f32 %v1618, %v1768
  %v1785 = vmul.f32 %v1620, %v1769
  %v1786 = vmul.f32 %v1622, %v1770
  %v1787 = vmul.f32 %v1624, %v1771
  %v1788 = vmul.f32 %v1626, %v1772
  %v1789 = vmul.f32 %v1628, %v1773
  %1790 = vadd.xlane.f32.xlu0 %v1726
  %v1791 = vpop.xlane.xlu0 %1790
  %1792 = vadd.xlane.f32.xlu0 %v1728
  %v1793 = vpop.xlane.xlu0 %1792
  %1794 = vadd.xlane.f32.xlu0 %v1730
  %v1795 = vpop.xlane.xlu0 %1794
  %1796 = vadd.xlane.f32.xlu0 %v1732
  %v1797 = vpop.xlane.xlu0 %1796
  %1798 = vadd.xlane.f32.xlu0 %v1734
  %v1799 = vpop.xlane.xlu0 %1798
  %1800 = vadd.xlane.f32.xlu0 %v1736
  %v1801 = vpop.xlane.xlu0 %1800
  %1802 = vadd.xlane.f32.xlu0 %v1738
  %v1803 = vpop.xlane.xlu0 %1802
  %1804 = vadd.xlane.f32.xlu0 %v1740
  %v1805 = vpop.xlane.xlu0 %1804
  %1806 = vadd.xlane.f32.xlu0 %v1742
  %v1807 = vpop.xlane.xlu0 %1806
  %1808 = vadd.xlane.f32.xlu0 %v1744
  %v1809 = vpop.xlane.xlu0 %1808
  %1810 = vadd.xlane.f32.xlu0 %v1746
  %v1811 = vpop.xlane.xlu0 %1810
  %1812 = vadd.xlane.f32.xlu0 %v1748
  %v1813 = vpop.xlane.xlu0 %1812
  %1814 = vadd.xlane.f32.xlu0 %v1750
  %v1815 = vpop.xlane.xlu0 %1814
  %1816 = vadd.xlane.f32.xlu0 %v1752
  %v1817 = vpop.xlane.xlu0 %1816
  %1818 = vadd.xlane.f32.xlu0 %v1754
  %v1819 = vpop.xlane.xlu0 %1818
  %1820 = vadd.xlane.f32.xlu0 %v1756
  %v1821 = vpop.xlane.xlu0 %1820
  %v1822 = vadd.f32 %v1774, %v1791
  %v1823 = vadd.f32 %v1775, %v1793
  %v1824 = vadd.f32 %v1776, %v1795
  %v1825 = vadd.f32 %v1777, %v1797
  %v1826 = vadd.f32 %v1778, %v1799
  %v1827 = vadd.f32 %v1779, %v1801
  %v1828 = vadd.f32 %v1780, %v1803
  %v1829 = vadd.f32 %v1781, %v1805
  %v1830 = vadd.f32 %v1782, %v1807
  %v1831 = vadd.f32 %v1783, %v1809
  %v1832 = vadd.f32 %v1784, %v1811
  %v1833 = vadd.f32 %v1785, %v1813
  %v1834 = vadd.f32 %v1786, %v1815
  %v1835 = vadd.f32 %v1787, %v1817
  %v1836 = vadd.f32 %v1788, %v1819
  %v1837 = vadd.f32 %v1789, %v1821
  %1838 = vst.msk [vmem:[%s1757] sm:$0xff] %vm971, %v1822
  %1839 = vst.msk [vmem:[%s1757 + $0x8] sm:$0xff] %vm971, %v1823
  %1840 = vst.msk [vmem:[%s1757 + $0x10] sm:$0xff] %vm971, %v1824
  %1841 = vst.msk [vmem:[%s1757 + $0x18] sm:$0xff] %vm971, %v1825
  %1842 = vst.msk [vmem:[%s1757 + $0x20] sm:$0xff] %vm971, %v1826
  %1843 = vst.msk [vmem:[%s1757 + $0x28] sm:$0xff] %vm971, %v1827
  %1844 = vst.msk [vmem:[%s1757 + $0x30] sm:$0xff] %vm971, %v1828
  %1845 = vst.msk [vmem:[%s1757 + $0x38] sm:$0xff] %vm971, %v1829
  %1846 = vst.msk [vmem:[%s1757 + $0x40] sm:$0xff] %vm971, %v1830
  %1847 = vst.msk [vmem:[%s1757 + $0x48] sm:$0xff] %vm971, %v1831
  %1848 = vst.msk [vmem:[%s1757 + $0x50] sm:$0xff] %vm971, %v1832
  %1849 = vst.msk [vmem:[%s1757 + $0x58] sm:$0xff] %vm971, %v1833
  %1850 = vst.msk [vmem:[%s1757 + $0x60] sm:$0xff] %vm971, %v1834
  %1851 = vst.msk [vmem:[%s1757 + $0x68] sm:$0xff] %vm971, %v1835
  %1852 = vst.msk [vmem:[%s1757 + $0x70] sm:$0xff] %vm971, %v1836
  %1853 = vst.msk [vmem:[%s1757 + $0x78] sm:$0xff] %vm971, %v1837
  %s1854 = scalar_lea.vmem [#allocation5], 128
  %v1855 = vld [vmem:[%s1854] sm:$0xff]
  %v1856 = vld [vmem:[%s1854 + $0x8] sm:$0xff]
  %v1857 = vld [vmem:[%s1854 + $0x10] sm:$0xff]
  %v1858 = vld [vmem:[%s1854 + $0x18] sm:$0xff]
  %v1859 = vld [vmem:[%s1854 + $0x20] sm:$0xff]
  %v1860 = vld [vmem:[%s1854 + $0x28] sm:$0xff]
  %v1861 = vld [vmem:[%s1854 + $0x30] sm:$0xff]
  %v1862 = vld [vmem:[%s1854 + $0x38] sm:$0xff]
  %v1863 = vld [vmem:[%s1854 + $0x40] sm:$0xff]
  %v1864 = vld [vmem:[%s1854 + $0x48] sm:$0xff]
  %v1865 = vld [vmem:[%s1854 + $0x50] sm:$0xff]
  %v1866 = vld [vmem:[%s1854 + $0x58] sm:$0xff]
  %v1867 = vld [vmem:[%s1854 + $0x60] sm:$0xff]
  %v1868 = vld [vmem:[%s1854 + $0x68] sm:$0xff]
  %v1869 = vld [vmem:[%s1854 + $0x70] sm:$0xff]
  %v1870 = vld [vmem:[%s1854 + $0x78] sm:$0xff]
  %1872 = vset.pattern.permute.xlu0 0
  %1873 = vperm.xlu0 %1872, %v1598
  %v1874 = vpop.permute.xlu0 %1873
  %1877 = vset.pattern.permute.xlu0 0
  %1878 = vperm.xlu0 %1877, %v1600
  %v1879 = vpop.permute.xlu0 %1878
  %1882 = vset.pattern.permute.xlu0 0
  %1883 = vperm.xlu0 %1882, %v1602
  %v1884 = vpop.permute.xlu0 %1883
  %1887 = vset.pattern.permute.xlu0 0
  %1888 = vperm.xlu0 %1887, %v1604
  %v1889 = vpop.permute.xlu0 %1888
  %1892 = vset.pattern.permute.xlu0 0
  %1893 = vperm.xlu0 %1892, %v1606
  %v1894 = vpop.permute.xlu0 %1893
  %1897 = vset.pattern.permute.xlu0 0
  %1898 = vperm.xlu0 %1897, %v1608
  %v1899 = vpop.permute.xlu0 %1898
  %1902 = vset.pattern.permute.xlu0 0
  %1903 = vperm.xlu0 %1902, %v1610
  %v1904 = vpop.permute.xlu0 %1903
  %1907 = vset.pattern.permute.xlu0 0
  %1908 = vperm.xlu0 %1907, %v1612
  %v1909 = vpop.permute.xlu0 %1908
  %1912 = vset.pattern.permute.xlu0 0
  %1913 = vperm.xlu0 %1912, %v1614
  %v1914 = vpop.permute.xlu0 %1913
  %1917 = vset.pattern.permute.xlu0 0
  %1918 = vperm.xlu0 %1917, %v1616
  %v1919 = vpop.permute.xlu0 %1918
  %1922 = vset.pattern.permute.xlu0 0
  %1923 = vperm.xlu0 %1922, %v1618
  %v1924 = vpop.permute.xlu0 %1923
  %1927 = vset.pattern.permute.xlu0 0
  %1928 = vperm.xlu0 %1927, %v1620
  %v1929 = vpop.permute.xlu0 %1928
  %1932 = vset.pattern.permute.xlu0 0
  %1933 = vperm.xlu0 %1932, %v1622
  %v1934 = vpop.permute.xlu0 %1933
  %1937 = vset.pattern.permute.xlu0 0
  %1938 = vperm.xlu0 %1937, %v1624
  %v1939 = vpop.permute.xlu0 %1938
  %1942 = vset.pattern.permute.xlu0 0
  %1943 = vperm.xlu0 %1942, %v1626
  %v1944 = vpop.permute.xlu0 %1943
  %1947 = vset.pattern.permute.xlu0 0
  %1948 = vperm.xlu0 %1947, %v1628
  %v1949 = vpop.permute.xlu0 %1948
  %v1951 = vmul.f32 %v1874, %v1855
  %v1952 = vmul.f32 %v1879, %v1856
  %v1953 = vmul.f32 %v1884, %v1857
  %v1954 = vmul.f32 %v1889, %v1858
  %v1955 = vmul.f32 %v1894, %v1859
  %v1956 = vmul.f32 %v1899, %v1860
  %v1957 = vmul.f32 %v1904, %v1861
  %v1958 = vmul.f32 %v1909, %v1862
  %v1959 = vmul.f32 %v1914, %v1863
  %v1960 = vmul.f32 %v1919, %v1864
  %v1961 = vmul.f32 %v1924, %v1865
  %v1962 = vmul.f32 %v1929, %v1866
  %v1963 = vmul.f32 %v1934, %v1867
  %v1964 = vmul.f32 %v1939, %v1868
  %v1965 = vmul.f32 %v1944, %v1869
  %v1966 = vmul.f32 %v1949, %v1870
  %v1967 = vpack.c.bf16 %v1728, %v1726
  %v1968 = vpack.c.bf16 %v1732, %v1730
  %v1969 = vpack.c.bf16 %v1736, %v1734
  %v1970 = vpack.c.bf16 %v1740, %v1738
  %v1971 = vpack.c.bf16 %v1744, %v1742
  %v1972 = vpack.c.bf16 %v1748, %v1746
  %v1973 = vpack.c.bf16 %v1752, %v1750
  %v1974 = vpack.c.bf16 %v1756, %v1754
  %v1975 = vunpack.c.h.b16 %v405
  %v1976 = vunpack.c.h.b16 %v406
  %v1977 = vunpack.c.h.b16 %v407
  %v1978 = vunpack.c.h.b16 %v408
  %v1979 = vunpack.c.h.b16 %v409
  %v1980 = vunpack.c.h.b16 %v410
  %v1981 = vunpack.c.h.b16 %v411
  %v1982 = vunpack.c.h.b16 %v412
  %v1983 = vunpack.c.h.b16 %v413
  %v1984 = vunpack.c.h.b16 %v414
  %v1985 = vunpack.c.h.b16 %v415
  %v1986 = vunpack.c.h.b16 %v416
  %v1987 = vunpack.c.h.b16 %v417
  %v1988 = vunpack.c.h.b16 %v418
  %v1989 = vunpack.c.h.b16 %v419
  %v1990 = vunpack.c.h.b16 %v420
  %v1991 = vpack.c.b16 %v1976, %v1975
  %v1992 = vpack.c.b16 %v1978, %v1977
  %v1993 = vpack.c.b16 %v1980, %v1979
  %v1994 = vpack.c.b16 %v1982, %v1981
  %v1995 = vpack.c.b16 %v1984, %v1983
  %v1996 = vpack.c.b16 %v1986, %v1985
  %v1997 = vpack.c.b16 %v1988, %v1987
  %v1998 = vpack.c.b16 %v1990, %v1989
  %2007 = vmatpush.bf16.msra.mxu0 %v1998
  %2008 = vmatpush.bf16.msra.mxu0 %v1997
  %2009 = vmatpush.bf16.msra.mxu0 %v1996
  %2010 = vmatpush.bf16.msra.mxu0 %v1995
  %2011 = vmatpush.bf16.msra.mxu0 %v1994
  %2012 = vmatpush.bf16.msra.mxu0 %v1993
  %2013 = vmatpush.bf16.msra.mxu0 %v1992
  %2014 = vmatpush.bf16.msra.mxu0 %v1991
  %2015 = vmatmul.bf16.gmra.mxu0 %v1967
  %v2016 = vpop.f32.mrf.mxu0
  %v2017 = vadd.f32 0.0, %v2016
  %v2018 = vpop.f32.mrf.mxu0
  %v2019 = vadd.f32 0.0, %v2018
  %2020 = vmatmul.bf16.gmra.mxu0 %v1968
  %v2021 = vpop.f32.mrf.mxu0
  %v2022 = vadd.f32 0.0, %v2021
  %v2023 = vpop.f32.mrf.mxu0
  %v2024 = vadd.f32 0.0, %v2023
  %2025 = vmatmul.bf16.gmra.mxu0 %v1969
  %v2026 = vpop.f32.mrf.mxu0
  %v2027 = vadd.f32 0.0, %v2026
  %v2028 = vpop.f32.mrf.mxu0
  %v2029 = vadd.f32 0.0, %v2028
  %2030 = vmatmul.bf16.gmra.mxu0 %v1970
  %v2031 = vpop.f32.mrf.mxu0
  %v2032 = vadd.f32 0.0, %v2031
  %v2033 = vpop.f32.mrf.mxu0
  %v2034 = vadd.f32 0.0, %v2033
  %2035 = vmatmul.bf16.gmra.mxu0 %v1971
  %v2036 = vpop.f32.mrf.mxu0
  %v2037 = vadd.f32 0.0, %v2036
  %v2038 = vpop.f32.mrf.mxu0
  %v2039 = vadd.f32 0.0, %v2038
  %2040 = vmatmul.bf16.gmra.mxu0 %v1972
  %v2041 = vpop.f32.mrf.mxu0
  %v2042 = vadd.f32 0.0, %v2041
  %v2043 = vpop.f32.mrf.mxu0
  %v2044 = vadd.f32 0.0, %v2043
  %2045 = vmatmul.bf16.gmra.mxu0 %v1973
  %v2046 = vpop.f32.mrf.mxu0
  %v2047 = vadd.f32 0.0, %v2046
  %v2048 = vpop.f32.mrf.mxu0
  %v2049 = vadd.f32 0.0, %v2048
  %2050 = vmatmul.bf16.gmra.mxu0 %v1974
  %v2051 = vpop.f32.mrf.mxu0
  %v2052 = vadd.f32 0.0, %v2051
  %v2053 = vpop.f32.mrf.mxu0
  %v2054 = vadd.f32 0.0, %v2053
  %2055 = vdwg.mxu0
  %v2056 = vadd.f32 %v1951, %v2017
  %v2057 = vadd.f32 %v1952, %v2019
  %v2058 = vadd.f32 %v1953, %v2022
  %v2059 = vadd.f32 %v1954, %v2024
  %v2060 = vadd.f32 %v1955, %v2027
  %v2061 = vadd.f32 %v1956, %v2029
  %v2062 = vadd.f32 %v1957, %v2032
  %v2063 = vadd.f32 %v1958, %v2034
  %v2064 = vadd.f32 %v1959, %v2037
  %v2065 = vadd.f32 %v1960, %v2039
  %v2066 = vadd.f32 %v1961, %v2042
  %v2067 = vadd.f32 %v1962, %v2044
  %v2068 = vadd.f32 %v1963, %v2047
  %v2069 = vadd.f32 %v1964, %v2049
  %v2070 = vadd.f32 %v1965, %v2052
  %v2071 = vadd.f32 %v1966, %v2054
  %2072 = vst [vmem:[%s1854] sm:$0xff] %v2056
  %2073 = vst [vmem:[%s1854 + $0x8] sm:$0xff] %v2057
  %2074 = vst [vmem:[%s1854 + $0x10] sm:$0xff] %v2058
  %2075 = vst [vmem:[%s1854 + $0x18] sm:$0xff] %v2059
  %2076 = vst [vmem:[%s1854 + $0x20] sm:$0xff] %v2060
  %2077 = vst [vmem:[%s1854 + $0x28] sm:$0xff] %v2061
  %2078 = vst [vmem:[%s1854 + $0x30] sm:$0xff] %v2062
  %2079 = vst [vmem:[%s1854 + $0x38] sm:$0xff] %v2063
  %2080 = vst [vmem:[%s1854 + $0x40] sm:$0xff] %v2064
  %2081 = vst [vmem:[%s1854 + $0x48] sm:$0xff] %v2065
  %2082 = vst [vmem:[%s1854 + $0x50] sm:$0xff] %v2066
  %2083 = vst [vmem:[%s1854 + $0x58] sm:$0xff] %v2067
  %2084 = vst [vmem:[%s1854 + $0x60] sm:$0xff] %v2068
  %2085 = vst [vmem:[%s1854 + $0x68] sm:$0xff] %v2069
  %2086 = vst [vmem:[%s1854 + $0x70] sm:$0xff] %v2070
  %2087 = vst [vmem:[%s1854 + $0x78] sm:$0xff] %v2071
  %2088 = vst.msk [vmem:[%s1516] sm:$0xff] %vm971, %v1565
  %2089 = vst.msk [vmem:[%s1516 + $0x8] sm:$0xff] %vm971, %v1566
  %2090 = vst.msk [vmem:[%s1516 + $0x10] sm:$0xff] %vm971, %v1567
  %2091 = vst.msk [vmem:[%s1516 + $0x18] sm:$0xff] %vm971, %v1568
  %2092 = vst.msk [vmem:[%s1516 + $0x20] sm:$0xff] %vm971, %v1569
  %2093 = vst.msk [vmem:[%s1516 + $0x28] sm:$0xff] %vm971, %v1570
  %2094 = vst.msk [vmem:[%s1516 + $0x30] sm:$0xff] %vm971, %v1571
  %2095 = vst.msk [vmem:[%s1516 + $0x38] sm:$0xff] %vm971, %v1572
  %2096 = vst.msk [vmem:[%s1516 + $0x40] sm:$0xff] %vm971, %v1573
  %2097 = vst.msk [vmem:[%s1516 + $0x48] sm:$0xff] %vm971, %v1574
  %2098 = vst.msk [vmem:[%s1516 + $0x50] sm:$0xff] %vm971, %v1575
  %2099 = vst.msk [vmem:[%s1516 + $0x58] sm:$0xff] %vm971, %v1576
  %2100 = vst.msk [vmem:[%s1516 + $0x60] sm:$0xff] %vm971, %v1577
  %2101 = vst.msk [vmem:[%s1516 + $0x68] sm:$0xff] %vm971, %v1578
  %2102 = vst.msk [vmem:[%s1516 + $0x70] sm:$0xff] %vm971, %v1579
  %2103 = vst.msk [vmem:[%s1516 + $0x78] sm:$0xff] %vm971, %v1580
  // Predicated region
  $region30: #{spgat_forward.4} parent=0 // pred_check
    %p2104 = pneg %p75
  $region31: #{spgat_forward.4} parent=0 // pred_check_branch
    %2106 = sbr.rel (%p2104) target = $region33
  $region32: #{spgat_forward.4} parent=0 // pred_region
    %v2107 = vld [vmem:[#allocation5] sm:$0xff]
    %v2108 = vld [vmem:[#allocation5 + $0x8] sm:$0xff]
    %v2109 = vld [vmem:[#allocation5 + $0x10] sm:$0xff]
    %v2110 = vld [vmem:[#allocation5 + $0x18] sm:$0xff]
    %v2111 = vld [vmem:[#allocation5 + $0x20] sm:$0xff]
    %v2112 = vld [vmem:[#allocation5 + $0x28] sm:$0xff]
    %v2113 = vld [vmem:[#allocation5 + $0x30] sm:$0xff]
    %v2114 = vld [vmem:[#allocation5 + $0x38] sm:$0xff]
    %v2115 = vld [vmem:[#allocation5 + $0x40] sm:$0xff]
    %v2116 = vld [vmem:[#allocation5 + $0x48] sm:$0xff]
    %v2117 = vld [vmem:[#allocation5 + $0x50] sm:$0xff]
    %v2118 = vld [vmem:[#allocation5 + $0x58] sm:$0xff]
    %v2119 = vld [vmem:[#allocation5 + $0x60] sm:$0xff]
    %v2120 = vld [vmem:[#allocation5 + $0x68] sm:$0xff]
    %v2121 = vld [vmem:[#allocation5 + $0x70] sm:$0xff]
    %v2122 = vld [vmem:[#allocation5 + $0x78] sm:$0xff]
    %v2123 = vld [vmem:[#allocation4] sm:$0xff]
    %v2124 = vld [vmem:[#allocation4 + $0x8] sm:$0xff]
    %v2125 = vld [vmem:[#allocation4 + $0x10] sm:$0xff]
    %v2126 = vld [vmem:[#allocation4 + $0x18] sm:$0xff]
    %v2127 = vld [vmem:[#allocation4 + $0x20] sm:$0xff]
    %v2128 = vld [vmem:[#allocation4 + $0x28] sm:$0xff]
    %v2129 = vld [vmem:[#allocation4 + $0x30] sm:$0xff]
    %v2130 = vld [vmem:[#allocation4 + $0x38] sm:$0xff]
    %v2131 = vld [vmem:[#allocation4 + $0x40] sm:$0xff]
    %v2132 = vld [vmem:[#allocation4 + $0x48] sm:$0xff]
    %v2133 = vld [vmem:[#allocation4 + $0x50] sm:$0xff]
    %v2134 = vld [vmem:[#allocation4 + $0x58] sm:$0xff]
    %v2135 = vld [vmem:[#allocation4 + $0x60] sm:$0xff]
    %v2136 = vld [vmem:[#allocation4 + $0x68] sm:$0xff]
    %v2137 = vld [vmem:[#allocation4 + $0x70] sm:$0xff]
    %v2138 = vld [vmem:[#allocation4 + $0x78] sm:$0xff]
    %v2139 = vrcp.pop %v2123
    %v2140 = vrcp.pop %v2124
    %v2141 = vrcp.pop %v2125
    %v2142 = vrcp.pop %v2126
    %v2143 = vrcp.pop %v2127
    %v2144 = vrcp.pop %v2128
    %v2145 = vrcp.pop %v2129
    %v2146 = vrcp.pop %v2130
    %v2147 = vrcp.pop %v2131
    %v2148 = vrcp.pop %v2132
    %v2149 = vrcp.pop %v2133
    %v2150 = vrcp.pop %v2134
    %v2151 = vrcp.pop %v2135
    %v2152 = vrcp.pop %v2136
    %v2153 = vrcp.pop %v2137
    %v2154 = vrcp.pop %v2138
    %2156 = vset.pattern.permute.xlu0 0
    %2157 = vperm.xlu0 %2156, %v2139
    %v2158 = vpop.permute.xlu0 %2157
    %2161 = vset.pattern.permute.xlu0 0
    %2162 = vperm.xlu0 %2161, %v2140
    %v2163 = vpop.permute.xlu0 %2162
    %2166 = vset.pattern.permute.xlu0 0
    %2167 = vperm.xlu0 %2166, %v2141
    %v2168 = vpop.permute.xlu0 %2167
    %2171 = vset.pattern.permute.xlu0 0
    %2172 = vperm.xlu0 %2171, %v2142
    %v2173 = vpop.permute.xlu0 %2172
    %2176 = vset.pattern.permute.xlu0 0
    %2177 = vperm.xlu0 %2176, %v2143
    %v2178 = vpop.permute.xlu0 %2177
    %2181 = vset.pattern.permute.xlu0 0
    %2182 = vperm.xlu0 %2181, %v2144
    %v2183 = vpop.permute.xlu0 %2182
    %2186 = vset.pattern.permute.xlu0 0
    %2187 = vperm.xlu0 %2186, %v2145
    %v2188 = vpop.permute.xlu0 %2187
    %2191 = vset.pattern.permute.xlu0 0
    %2192 = vperm.xlu0 %2191, %v2146
    %v2193 = vpop.permute.xlu0 %2192
    %2196 = vset.pattern.permute.xlu0 0
    %2197 = vperm.xlu0 %2196, %v2147
    %v2198 = vpop.permute.xlu0 %2197
    %2201 = vset.pattern.permute.xlu0 0
    %2202 = vperm.xlu0 %2201, %v2148
    %v2203 = vpop.permute.xlu0 %2202
    %2206 = vset.pattern.permute.xlu0 0
    %2207 = vperm.xlu0 %2206, %v2149
    %v2208 = vpop.permute.xlu0 %2207
    %2211 = vset.pattern.permute.xlu0 0
    %2212 = vperm.xlu0 %2211, %v2150
    %v2213 = vpop.permute.xlu0 %2212
    %2216 = vset.pattern.permute.xlu0 0
    %2217 = vperm.xlu0 %2216, %v2151
    %v2218 = vpop.permute.xlu0 %2217
    %2221 = vset.pattern.permute.xlu0 0
    %2222 = vperm.xlu0 %2221, %v2152
    %v2223 = vpop.permute.xlu0 %2222
    %2226 = vset.pattern.permute.xlu0 0
    %2227 = vperm.xlu0 %2226, %v2153
    %v2228 = vpop.permute.xlu0 %2227
    %2231 = vset.pattern.permute.xlu0 0
    %2232 = vperm.xlu0 %2231, %v2154
    %v2233 = vpop.permute.xlu0 %2232
    %v2235 = vmul.f32 %v2107, %v2158
    %v2236 = vmul.f32 %v2108, %v2163
    %v2237 = vmul.f32 %v2109, %v2168
    %v2238 = vmul.f32 %v2110, %v2173
    %v2239 = vmul.f32 %v2111, %v2178
    %v2240 = vmul.f32 %v2112, %v2183
    %v2241 = vmul.f32 %v2113, %v2188
    %v2242 = vmul.f32 %v2114, %v2193
    %v2243 = vmul.f32 %v2115, %v2198
    %v2244 = vmul.f32 %v2116, %v2203
    %v2245 = vmul.f32 %v2117, %v2208
    %v2246 = vmul.f32 %v2118, %v2213
    %v2247 = vmul.f32 %v2119, %v2218
    %v2248 = vmul.f32 %v2120, %v2223
    %v2249 = vmul.f32 %v2121, %v2228
    %v2250 = vmul.f32 %v2122, %v2233
    %vm2251 = vcmp.gt.f32.partialorder %v2235, 0.0
    %vm2252 = vcmp.gt.f32.partialorder %v2236, 0.0
    %vm2253 = vcmp.gt.f32.partialorder %v2237, 0.0
    %vm2254 = vcmp.gt.f32.partialorder %v2238, 0.0
    %vm2255 = vcmp.gt.f32.partialorder %v2239, 0.0
    %vm2256 = vcmp.gt.f32.partialorder %v2240, 0.0
    %vm2257 = vcmp.gt.f32.partialorder %v2241, 0.0
    %vm2258 = vcmp.gt.f32.partialorder %v2242, 0.0
    %vm2259 = vcmp.gt.f32.partialorder %v2243, 0.0
    %vm2260 = vcmp.gt.f32.partialorder %v2244, 0.0
    %vm2261 = vcmp.gt.f32.partialorder %v2245, 0.0
    %vm2262 = vcmp.gt.f32.partialorder %v2246, 0.0
    %vm2263 = vcmp.gt.f32.partialorder %v2247, 0.0
    %vm2264 = vcmp.gt.f32.partialorder %v2248, 0.0
    %vm2265 = vcmp.gt.f32.partialorder %v2249, 0.0
    %vm2266 = vcmp.gt.f32.partialorder %v2250, 0.0
    %v2267 = vmin.f32 %v2235, 0.0
    %v2268 = vmin.f32 %v2236, 0.0
    %v2269 = vmin.f32 %v2237, 0.0
    %v2270 = vmin.f32 %v2238, 0.0
    %v2271 = vmin.f32 %v2239, 0.0
    %v2272 = vmin.f32 %v2240, 0.0
    %v2273 = vmin.f32 %v2241, 0.0
    %v2274 = vmin.f32 %v2242, 0.0
    %v2275 = vmin.f32 %v2243, 0.0
    %v2276 = vmin.f32 %v2244, 0.0
    %v2277 = vmin.f32 %v2245, 0.0
    %v2278 = vmin.f32 %v2246, 0.0
    %v2279 = vmin.f32 %v2247, 0.0
    %v2280 = vmin.f32 %v2248, 0.0
    %v2281 = vmin.f32 %v2249, 0.0
    %v2282 = vmin.f32 %v2250, 0.0
    %v2283 = vmul.f32 %v2267, 1.442695
    %v2284 = vpow.pop %v2283
    %v2285 = vmul.f32 %v2268, 1.442695
    %v2286 = vpow.pop %v2285
    %v2287 = vmul.f32 %v2269, 1.442695
    %v2288 = vpow.pop %v2287
    %v2289 = vmul.f32 %v2270, 1.442695
    %v2290 = vpow.pop %v2289
    %v2291 = vmul.f32 %v2271, 1.442695
    %v2292 = vpow.pop %v2291
    %v2293 = vmul.f32 %v2272, 1.442695
    %v2294 = vpow.pop %v2293
    %v2295 = vmul.f32 %v2273, 1.442695
    %v2296 = vpow.pop %v2295
    %v2297 = vmul.f32 %v2274, 1.442695
    %v2298 = vpow.pop %v2297
    %v2299 = vmul.f32 %v2275, 1.442695
    %v2300 = vpow.pop %v2299
    %v2301 = vmul.f32 %v2276, 1.442695
    %v2302 = vpow.pop %v2301
    %v2303 = vmul.f32 %v2277, 1.442695
    %v2304 = vpow.pop %v2303
    %v2305 = vmul.f32 %v2278, 1.442695
    %v2306 = vpow.pop %v2305
    %v2307 = vmul.f32 %v2279, 1.442695
    %v2308 = vpow.pop %v2307
    %v2309 = vmul.f32 %v2280, 1.442695
    %v2310 = vpow.pop %v2309
    %v2311 = vmul.f32 %v2281, 1.442695
    %v2312 = vpow.pop %v2311
    %v2313 = vmul.f32 %v2282, 1.442695
    %v2314 = vpow.pop %v2313
    %v2315 = vsub.f32 %v2284, 1.0
    %v2316 = vsub.f32 %v2286, 1.0
    %v2317 = vsub.f32 %v2288, 1.0
    %v2318 = vsub.f32 %v2290, 1.0
    %v2319 = vsub.f32 %v2292, 1.0
    %v2320 = vsub.f32 %v2294, 1.0
    %v2321 = vsub.f32 %v2296, 1.0
    %v2322 = vsub.f32 %v2298, 1.0
    %v2323 = vsub.f32 %v2300, 1.0
    %v2324 = vsub.f32 %v2302, 1.0
    %v2325 = vsub.f32 %v2304, 1.0
    %v2326 = vsub.f32 %v2306, 1.0
    %v2327 = vsub.f32 %v2308, 1.0
    %v2328 = vsub.f32 %v2310, 1.0
    %v2329 = vsub.f32 %v2312, 1.0
    %v2330 = vsub.f32 %v2314, 1.0
    %v2331 = vsel %vm2251, %v2235, %v2315
    %v2332 = vsel %vm2252, %v2236, %v2316
    %v2333 = vsel %vm2253, %v2237, %v2317
    %v2334 = vsel %vm2254, %v2238, %v2318
    %v2335 = vsel %vm2255, %v2239, %v2319
    %v2336 = vsel %vm2256, %v2240, %v2320
    %v2337 = vsel %vm2257, %v2241, %v2321
    %v2338 = vsel %vm2258, %v2242, %v2322
    %v2339 = vsel %vm2259, %v2243, %v2323
    %v2340 = vsel %vm2260, %v2244, %v2324
    %v2341 = vsel %vm2261, %v2245, %v2325
    %v2342 = vsel %vm2262, %v2246, %v2326
    %v2343 = vsel %vm2263, %v2247, %v2327
    %v2344 = vsel %vm2264, %v2248, %v2328
    %v2345 = vsel %vm2265, %v2249, %v2329
    %v2346 = vsel %vm2266, %v2250, %v2330
    %v2347 = vpack.c.bf16 %v2332, %v2331
    %v2348 = vpack.c.bf16 %v2334, %v2333
    %v2349 = vpack.c.bf16 %v2336, %v2335
    %v2350 = vpack.c.bf16 %v2338, %v2337
    %v2351 = vpack.c.bf16 %v2340, %v2339
    %v2352 = vpack.c.bf16 %v2342, %v2341
    %v2353 = vpack.c.bf16 %v2344, %v2343
    %v2354 = vpack.c.bf16 %v2346, %v2345
    %v2355 = vld [vmem:[%s5] sm:$0xf]
    %v2356 = vld [vmem:[%s5 + $0x4] sm:$0xf]
    %v2357 = vld [vmem:[%s5 + $0x8] sm:$0xf]
    %v2358 = vld [vmem:[%s5 + $0xc] sm:$0xf]
    %v2359 = vld [vmem:[%s5 + $0x10] sm:$0xf]
    %v2360 = vld [vmem:[%s5 + $0x14] sm:$0xf]
    %v2361 = vld [vmem:[%s5 + $0x18] sm:$0xf]
    %v2362 = vld [vmem:[%s5 + $0x1c] sm:$0xf]
    %v2363 = vld [vmem:[%s5 + $0x20] sm:$0xf]
    %v2364 = vld [vmem:[%s5 + $0x24] sm:$0xf]
    %v2365 = vld [vmem:[%s5 + $0x28] sm:$0xf]
    %v2366 = vld [vmem:[%s5 + $0x2c] sm:$0xf]
    %v2367 = vld [vmem:[%s5 + $0x30] sm:$0xf]
    %v2368 = vld [vmem:[%s5 + $0x34] sm:$0xf]
    %v2369 = vld [vmem:[%s5 + $0x38] sm:$0xf]
    %v2370 = vld [vmem:[%s5 + $0x3c] sm:$0xf]
    %v2371 = vld [vmem:[%s1854] sm:$0xff]
    %v2372 = vld [vmem:[%s1854 + $0x8] sm:$0xff]
    %v2373 = vld [vmem:[%s1854 + $0x10] sm:$0xff]
    %v2374 = vld [vmem:[%s1854 + $0x18] sm:$0xff]
    %v2375 = vld [vmem:[%s1854 + $0x20] sm:$0xff]
    %v2376 = vld [vmem:[%s1854 + $0x28] sm:$0xff]
    %v2377 = vld [vmem:[%s1854 + $0x30] sm:$0xff]
    %v2378 = vld [vmem:[%s1854 + $0x38] sm:$0xff]
    %v2379 = vld [vmem:[%s1854 + $0x40] sm:$0xff]
    %v2380 = vld [vmem:[%s1854 + $0x48] sm:$0xff]
    %v2381 = vld [vmem:[%s1854 + $0x50] sm:$0xff]
    %v2382 = vld [vmem:[%s1854 + $0x58] sm:$0xff]
    %v2383 = vld [vmem:[%s1854 + $0x60] sm:$0xff]
    %v2384 = vld [vmem:[%s1854 + $0x68] sm:$0xff]
    %v2385 = vld [vmem:[%s1854 + $0x70] sm:$0xff]
    %v2386 = vld [vmem:[%s1854 + $0x78] sm:$0xff]
    %v2387 = vld [vmem:[%s1757] sm:$0xff]
    %v2388 = vld [vmem:[%s1757 + $0x8] sm:$0xff]
    %v2389 = vld [vmem:[%s1757 + $0x10] sm:$0xff]
    %v2390 = vld [vmem:[%s1757 + $0x18] sm:$0xff]
    %v2391 = vld [vmem:[%s1757 + $0x20] sm:$0xff]
    %v2392 = vld [vmem:[%s1757 + $0x28] sm:$0xff]
    %v2393 = vld [vmem:[%s1757 + $0x30] sm:$0xff]
    %v2394 = vld [vmem:[%s1757 + $0x38] sm:$0xff]
    %v2395 = vld [vmem:[%s1757 + $0x40] sm:$0xff]
    %v2396 = vld [vmem:[%s1757 + $0x48] sm:$0xff]
    %v2397 = vld [vmem:[%s1757 + $0x50] sm:$0xff]
    %v2398 = vld [vmem:[%s1757 + $0x58] sm:$0xff]
    %v2399 = vld [vmem:[%s1757 + $0x60] sm:$0xff]
    %v2400 = vld [vmem:[%s1757 + $0x68] sm:$0xff]
    %v2401 = vld [vmem:[%s1757 + $0x70] sm:$0xff]
    %v2402 = vld [vmem:[%s1757 + $0x78] sm:$0xff]
    %v2403 = vrcp.pop %v2387
    %v2404 = vrcp.pop %v2388
    %v2405 = vrcp.pop %v2389
    %v2406 = vrcp.pop %v2390
    %v2407 = vrcp.pop %v2391
    %v2408 = vrcp.pop %v2392
    %v2409 = vrcp.pop %v2393
    %v2410 = vrcp.pop %v2394
    %v2411 = vrcp.pop %v2395
    %v2412 = vrcp.pop %v2396
    %v2413 = vrcp.pop %v2397
    %v2414 = vrcp.pop %v2398
    %v2415 = vrcp.pop %v2399
    %v2416 = vrcp.pop %v2400
    %v2417 = vrcp.pop %v2401
    %v2418 = vrcp.pop %v2402
    %2420 = vset.pattern.permute.xlu0 0
    %2421 = vperm.xlu0 %2420, %v2403
    %v2422 = vpop.permute.xlu0 %2421
    %2425 = vset.pattern.permute.xlu0 0
    %2426 = vperm.xlu0 %2425, %v2404
    %v2427 = vpop.permute.xlu0 %2426
    %2430 = vset.pattern.permute.xlu0 0
    %2431 = vperm.xlu0 %2430, %v2405
    %v2432 = vpop.permute.xlu0 %2431
    %2435 = vset.pattern.permute.xlu0 0
    %2436 = vperm.xlu0 %2435, %v2406
    %v2437 = vpop.permute.xlu0 %2436
    %2440 = vset.pattern.permute.xlu0 0
    %2441 = vperm.xlu0 %2440, %v2407
    %v2442 = vpop.permute.xlu0 %2441
    %2445 = vset.pattern.permute.xlu0 0
    %2446 = vperm.xlu0 %2445, %v2408
    %v2447 = vpop.permute.xlu0 %2446
    %2450 = vset.pattern.permute.xlu0 0
    %2451 = vperm.xlu0 %2450, %v2409
    %v2452 = vpop.permute.xlu0 %2451
    %2455 = vset.pattern.permute.xlu0 0
    %2456 = vperm.xlu0 %2455, %v2410
    %v2457 = vpop.permute.xlu0 %2456
    %2460 = vset.pattern.permute.xlu0 0
    %2461 = vperm.xlu0 %2460, %v2411
    %v2462 = vpop.permute.xlu0 %2461
    %2465 = vset.pattern.permute.xlu0 0
    %2466 = vperm.xlu0 %2465, %v2412
    %v2467 = vpop.permute.xlu0 %2466
    %2470 = vset.pattern.permute.xlu0 0
    %2471 = vperm.xlu0 %2470, %v2413
    %v2472 = vpop.permute.xlu0 %2471
    %2475 = vset.pattern.permute.xlu0 0
    %2476 = vperm.xlu0 %2475, %v2414
    %v2477 = vpop.permute.xlu0 %2476
    %2480 = vset.pattern.permute.xlu0 0
    %2481 = vperm.xlu0 %2480, %v2415
    %v2482 = vpop.permute.xlu0 %2481
    %2485 = vset.pattern.permute.xlu0 0
    %2486 = vperm.xlu0 %2485, %v2416
    %v2487 = vpop.permute.xlu0 %2486
    %2490 = vset.pattern.permute.xlu0 0
    %2491 = vperm.xlu0 %2490, %v2417
    %v2492 = vpop.permute.xlu0 %2491
    %2495 = vset.pattern.permute.xlu0 0
    %2496 = vperm.xlu0 %2495, %v2418
    %v2497 = vpop.permute.xlu0 %2496
    %v2499 = vmul.f32 %v2371, %v2422
    %v2500 = vmul.f32 %v2372, %v2427
    %v2501 = vmul.f32 %v2373, %v2432
    %v2502 = vmul.f32 %v2374, %v2437
    %v2503 = vmul.f32 %v2375, %v2442
    %v2504 = vmul.f32 %v2376, %v2447
    %v2505 = vmul.f32 %v2377, %v2452
    %v2506 = vmul.f32 %v2378, %v2457
    %v2507 = vmul.f32 %v2379, %v2462
    %v2508 = vmul.f32 %v2380, %v2467
    %v2509 = vmul.f32 %v2381, %v2472
    %v2510 = vmul.f32 %v2382, %v2477
    %v2511 = vmul.f32 %v2383, %v2482
    %v2512 = vmul.f32 %v2384, %v2487
    %v2513 = vmul.f32 %v2385, %v2492
    %v2514 = vmul.f32 %v2386, %v2497
    %vm2515 = vcmp.gt.f32.partialorder %v2499, 0.0
    %vm2516 = vcmp.gt.f32.partialorder %v2500, 0.0
    %vm2517 = vcmp.gt.f32.partialorder %v2501, 0.0
    %vm2518 = vcmp.gt.f32.partialorder %v2502, 0.0
    %vm2519 = vcmp.gt.f32.partialorder %v2503, 0.0
    %vm2520 = vcmp.gt.f32.partialorder %v2504, 0.0
    %vm2521 = vcmp.gt.f32.partialorder %v2505, 0.0
    %vm2522 = vcmp.gt.f32.partialorder %v2506, 0.0
    %vm2523 = vcmp.gt.f32.partialorder %v2507, 0.0
    %vm2524 = vcmp.gt.f32.partialorder %v2508, 0.0
    %vm2525 = vcmp.gt.f32.partialorder %v2509, 0.0
    %vm2526 = vcmp.gt.f32.partialorder %v2510, 0.0
    %vm2527 = vcmp.gt.f32.partialorder %v2511, 0.0
    %vm2528 = vcmp.gt.f32.partialorder %v2512, 0.0
    %vm2529 = vcmp.gt.f32.partialorder %v2513, 0.0
    %vm2530 = vcmp.gt.f32.partialorder %v2514, 0.0
    %v2531 = vmin.f32 %v2499, 0.0
    %v2532 = vmin.f32 %v2500, 0.0
    %v2533 = vmin.f32 %v2501, 0.0
    %v2534 = vmin.f32 %v2502, 0.0
    %v2535 = vmin.f32 %v2503, 0.0
    %v2536 = vmin.f32 %v2504, 0.0
    %v2537 = vmin.f32 %v2505, 0.0
    %v2538 = vmin.f32 %v2506, 0.0
    %v2539 = vmin.f32 %v2507, 0.0
    %v2540 = vmin.f32 %v2508, 0.0
    %v2541 = vmin.f32 %v2509, 0.0
    %v2542 = vmin.f32 %v2510, 0.0
    %v2543 = vmin.f32 %v2511, 0.0
    %v2544 = vmin.f32 %v2512, 0.0
    %v2545 = vmin.f32 %v2513, 0.0
    %v2546 = vmin.f32 %v2514, 0.0
    %v2547 = vmul.f32 %v2531, 1.442695
    %v2548 = vpow.pop %v2547
    %v2549 = vmul.f32 %v2532, 1.442695
    %v2550 = vpow.pop %v2549
    %v2551 = vmul.f32 %v2533, 1.442695
    %v2552 = vpow.pop %v2551
    %v2553 = vmul.f32 %v2534, 1.442695
    %v2554 = vpow.pop %v2553
    %v2555 = vmul.f32 %v2535, 1.442695
    %v2556 = vpow.pop %v2555
    %v2557 = vmul.f32 %v2536, 1.442695
    %v2558 = vpow.pop %v2557
    %v2559 = vmul.f32 %v2537, 1.442695
    %v2560 = vpow.pop %v2559
    %v2561 = vmul.f32 %v2538, 1.442695
    %v2562 = vpow.pop %v2561
    %v2563 = vmul.f32 %v2539, 1.442695
    %v2564 = vpow.pop %v2563
    %v2565 = vmul.f32 %v2540, 1.442695
    %v2566 = vpow.pop %v2565
    %v2567 = vmul.f32 %v2541, 1.442695
    %v2568 = vpow.pop %v2567
    %v2569 = vmul.f32 %v2542, 1.442695
    %v2570 = vpow.pop %v2569
    %v2571 = vmul.f32 %v2543, 1.442695
    %v2572 = vpow.pop %v2571
    %v2573 = vmul.f32 %v2544, 1.442695
    %v2574 = vpow.pop %v2573
    %v2575 = vmul.f32 %v2545, 1.442695
    %v2576 = vpow.pop %v2575
    %v2577 = vmul.f32 %v2546, 1.442695
    %v2578 = vpow.pop %v2577
    %v2579 = vsub.f32 %v2548, 1.0
    %v2580 = vsub.f32 %v2550, 1.0
    %v2581 = vsub.f32 %v2552, 1.0
    %v2582 = vsub.f32 %v2554, 1.0
    %v2583 = vsub.f32 %v2556, 1.0
    %v2584 = vsub.f32 %v2558, 1.0
    %v2585 = vsub.f32 %v2560, 1.0
    %v2586 = vsub.f32 %v2562, 1.0
    %v2587 = vsub.f32 %v2564, 1.0
    %v2588 = vsub.f32 %v2566, 1.0
    %v2589 = vsub.f32 %v2568, 1.0
    %v2590 = vsub.f32 %v2570, 1.0
    %v2591 = vsub.f32 %v2572, 1.0
    %v2592 = vsub.f32 %v2574, 1.0
    %v2593 = vsub.f32 %v2576, 1.0
    %v2594 = vsub.f32 %v2578, 1.0
    %v2595 = vsel %vm2515, %v2499, %v2579
    %v2596 = vsel %vm2516, %v2500, %v2580
    %v2597 = vsel %vm2517, %v2501, %v2581
    %v2598 = vsel %vm2518, %v2502, %v2582
    %v2599 = vsel %vm2519, %v2503, %v2583
    %v2600 = vsel %vm2520, %v2504, %v2584
    %v2601 = vsel %vm2521, %v2505, %v2585
    %v2602 = vsel %vm2522, %v2506, %v2586
    %v2603 = vsel %vm2523, %v2507, %v2587
    %v2604 = vsel %vm2524, %v2508, %v2588
    %v2605 = vsel %vm2525, %v2509, %v2589
    %v2606 = vsel %vm2526, %v2510, %v2590
    %v2607 = vsel %vm2527, %v2511, %v2591
    %v2608 = vsel %vm2528, %v2512, %v2592
    %v2609 = vsel %vm2529, %v2513, %v2593
    %v2610 = vsel %vm2530, %v2514, %v2594
    %v2611 = vpack.c.bf16 %v2596, %v2595
    %v2612 = vpack.c.bf16 %v2598, %v2597
    %v2613 = vpack.c.bf16 %v2600, %v2599
    %v2614 = vpack.c.bf16 %v2602, %v2601
    %v2615 = vpack.c.bf16 %v2604, %v2603
    %v2616 = vpack.c.bf16 %v2606, %v2605
    %v2617 = vpack.c.bf16 %v2608, %v2607
    %v2618 = vpack.c.bf16 %v2610, %v2609
    %s2619 = scalar_lea.vmem %s5, 64
    %v2620 = vld [vmem:[%s2619] sm:$0xf]
    %v2621 = vld [vmem:[%s2619 + $0x4] sm:$0xf]
    %v2622 = vld [vmem:[%s2619 + $0x8] sm:$0xf]
    %v2623 = vld [vmem:[%s2619 + $0xc] sm:$0xf]
    %v2624 = vld [vmem:[%s2619 + $0x10] sm:$0xf]
    %v2625 = vld [vmem:[%s2619 + $0x14] sm:$0xf]
    %v2626 = vld [vmem:[%s2619 + $0x18] sm:$0xf]
    %v2627 = vld [vmem:[%s2619 + $0x1c] sm:$0xf]
    %v2628 = vld [vmem:[%s2619 + $0x20] sm:$0xf]
    %v2629 = vld [vmem:[%s2619 + $0x24] sm:$0xf]
    %v2630 = vld [vmem:[%s2619 + $0x28] sm:$0xf]
    %v2631 = vld [vmem:[%s2619 + $0x2c] sm:$0xf]
    %v2632 = vld [vmem:[%s2619 + $0x30] sm:$0xf]
    %v2633 = vld [vmem:[%s2619 + $0x34] sm:$0xf]
    %v2634 = vld [vmem:[%s2619 + $0x38] sm:$0xf]
    %v2635 = vld [vmem:[%s2619 + $0x3c] sm:$0xf]
    %v2652 = vunpack.c.l.b16 %v2620
    %v2653 = vunpack.c.l.b16 %v2621
    %v2654 = vunpack.c.l.b16 %v2622
    %v2655 = vunpack.c.l.b16 %v2623
    %v2656 = vunpack.c.l.b16 %v2624
    %v2657 = vunpack.c.l.b16 %v2625
    %v2658 = vunpack.c.l.b16 %v2626
    %v2659 = vunpack.c.l.b16 %v2627
    %v2660 = vunpack.c.l.b16 %v2628
    %v2661 = vunpack.c.l.b16 %v2629
    %v2662 = vunpack.c.l.b16 %v2630
    %v2663 = vunpack.c.l.b16 %v2631
    %v2664 = vunpack.c.l.b16 %v2632
    %v2665 = vunpack.c.l.b16 %v2633
    %v2666 = vunpack.c.l.b16 %v2634
    %v2667 = vunpack.c.l.b16 %v2635
    %v2668 = vpack.c.b16 %v2653, %v2652
    %v2669 = vpack.c.b16 %v2655, %v2654
    %v2670 = vpack.c.b16 %v2657, %v2656
    %v2671 = vpack.c.b16 %v2659, %v2658
    %v2672 = vpack.c.b16 %v2661, %v2660
    %v2673 = vpack.c.b16 %v2663, %v2662
    %v2674 = vpack.c.b16 %v2665, %v2664
    %v2675 = vpack.c.b16 %v2667, %v2666
    %2684 = vmatpush.bf16.msra.mxu0 %v2675
    %2685 = vmatpush.bf16.msra.mxu0 %v2674
    %2686 = vmatpush.bf16.msra.mxu0 %v2673
    %2687 = vmatpush.bf16.msra.mxu0 %v2672
    %2688 = vmatpush.bf16.msra.mxu0 %v2671
    %2689 = vmatpush.bf16.msra.mxu0 %v2670
    %2690 = vmatpush.bf16.msra.mxu0 %v2669
    %2691 = vmatpush.bf16.msra.mxu0 %v2668
    %2692 = vmatmul.bf16.gmra.mxu0 %v2611
    %v2693 = vpop.f32.mrf.mxu0
    %v2694 = vadd.f32 0.0, %v2693
    %v2695 = vpop.f32.mrf.mxu0
    %v2696 = vadd.f32 0.0, %v2695
    %2697 = vmatmul.bf16.gmra.mxu0 %v2612
    %v2698 = vpop.f32.mrf.mxu0
    %v2699 = vadd.f32 0.0, %v2698
    %v2700 = vpop.f32.mrf.mxu0
    %v2701 = vadd.f32 0.0, %v2700
    %2702 = vmatmul.bf16.gmra.mxu0 %v2613
    %v2703 = vpop.f32.mrf.mxu0
    %v2704 = vadd.f32 0.0, %v2703
    %v2705 = vpop.f32.mrf.mxu0
    %v2706 = vadd.f32 0.0, %v2705
    %2707 = vmatmul.bf16.gmra.mxu0 %v2614
    %v2708 = vpop.f32.mrf.mxu0
    %v2709 = vadd.f32 0.0, %v2708
    %v2710 = vpop.f32.mrf.mxu0
    %v2711 = vadd.f32 0.0, %v2710
    %2712 = vmatmul.bf16.gmra.mxu0 %v2615
    %v2713 = vpop.f32.mrf.mxu0
    %v2714 = vadd.f32 0.0, %v2713
    %v2715 = vpop.f32.mrf.mxu0
    %v2716 = vadd.f32 0.0, %v2715
    %2717 = vmatmul.bf16.gmra.mxu0 %v2616
    %v2718 = vpop.f32.mrf.mxu0
    %v2719 = vadd.f32 0.0, %v2718
    %v2720 = vpop.f32.mrf.mxu0
    %v2721 = vadd.f32 0.0, %v2720
    %2722 = vmatmul.bf16.gmra.mxu0 %v2617
    %v2723 = vpop.f32.mrf.mxu0
    %v2724 = vadd.f32 0.0, %v2723
    %v2725 = vpop.f32.mrf.mxu0
    %v2726 = vadd.f32 0.0, %v2725
    %2727 = vmatmul.bf16.gmra.mxu0 %v2618
    %v2728 = vpop.f32.mrf.mxu0
    %v2729 = vadd.f32 0.0, %v2728
    %v2730 = vpop.f32.mrf.mxu0
    %v2731 = vadd.f32 0.0, %v2730
    %2732 = vdwg.mxu0
    %v2749 = vunpack.c.l.b16 %v2355
    %v2750 = vunpack.c.l.b16 %v2356
    %v2751 = vunpack.c.l.b16 %v2357
    %v2752 = vunpack.c.l.b16 %v2358
    %v2753 = vunpack.c.l.b16 %v2359
    %v2754 = vunpack.c.l.b16 %v2360
    %v2755 = vunpack.c.l.b16 %v2361
    %v2756 = vunpack.c.l.b16 %v2362
    %v2757 = vunpack.c.l.b16 %v2363
    %v2758 = vunpack.c.l.b16 %v2364
    %v2759 = vunpack.c.l.b16 %v2365
    %v2760 = vunpack.c.l.b16 %v2366
    %v2761 = vunpack.c.l.b16 %v2367
    %v2762 = vunpack.c.l.b16 %v2368
    %v2763 = vunpack.c.l.b16 %v2369
    %v2764 = vunpack.c.l.b16 %v2370
    %v2765 = vpack.c.b16 %v2750, %v2749
    %v2766 = vpack.c.b16 %v2752, %v2751
    %v2767 = vpack.c.b16 %v2754, %v2753
    %v2768 = vpack.c.b16 %v2756, %v2755
    %v2769 = vpack.c.b16 %v2758, %v2757
    %v2770 = vpack.c.b16 %v2760, %v2759
    %v2771 = vpack.c.b16 %v2762, %v2761
    %v2772 = vpack.c.b16 %v2764, %v2763
    %2781 = vmatpush.bf16.msra.mxu0 %v2772
    %2782 = vmatpush.bf16.msra.mxu0 %v2771
    %2783 = vmatpush.bf16.msra.mxu0 %v2770
    %2784 = vmatpush.bf16.msra.mxu0 %v2769
    %2785 = vmatpush.bf16.msra.mxu0 %v2768
    %2786 = vmatpush.bf16.msra.mxu0 %v2767
    %2787 = vmatpush.bf16.msra.mxu0 %v2766
    %2788 = vmatpush.bf16.msra.mxu0 %v2765
    %2789 = vmatmul.bf16.gmra.mxu0 %v2347
    %v2790 = vpop.f32.mrf.mxu0
    %v2791 = vadd.f32 %v2694, %v2790
    %v2792 = vpop.f32.mrf.mxu0
    %v2793 = vadd.f32 %v2696, %v2792
    %2794 = vmatmul.bf16.gmra.mxu0 %v2348
    %v2795 = vpop.f32.mrf.mxu0
    %v2796 = vadd.f32 %v2699, %v2795
    %v2797 = vpop.f32.mrf.mxu0
    %v2798 = vadd.f32 %v2701, %v2797
    %2799 = vmatmul.bf16.gmra.mxu0 %v2349
    %v2800 = vpop.f32.mrf.mxu0
    %v2801 = vadd.f32 %v2704, %v2800
    %v2802 = vpop.f32.mrf.mxu0
    %v2803 = vadd.f32 %v2706, %v2802
    %2804 = vmatmul.bf16.gmra.mxu0 %v2350
    %v2805 = vpop.f32.mrf.mxu0
    %v2806 = vadd.f32 %v2709, %v2805
    %v2807 = vpop.f32.mrf.mxu0
    %v2808 = vadd.f32 %v2711, %v2807
    %2809 = vmatmul.bf16.gmra.mxu0 %v2351
    %v2810 = vpop.f32.mrf.mxu0
    %v2811 = vadd.f32 %v2714, %v2810
    %v2812 = vpop.f32.mrf.mxu0
    %v2813 = vadd.f32 %v2716, %v2812
    %2814 = vmatmul.bf16.gmra.mxu0 %v2352
    %v2815 = vpop.f32.mrf.mxu0
    %v2816 = vadd.f32 %v2719, %v2815
    %v2817 = vpop.f32.mrf.mxu0
    %v2818 = vadd.f32 %v2721, %v2817
    %2819 = vmatmul.bf16.gmra.mxu0 %v2353
    %v2820 = vpop.f32.mrf.mxu0
    %v2821 = vadd.f32 %v2724, %v2820
    %v2822 = vpop.f32.mrf.mxu0
    %v2823 = vadd.f32 %v2726, %v2822
    %2824 = vmatmul.bf16.gmra.mxu0 %v2354
    %v2825 = vpop.f32.mrf.mxu0
    %v2826 = vadd.f32 %v2729, %v2825
    %v2827 = vpop.f32.mrf.mxu0
    %v2828 = vadd.f32 %v2731, %v2827
    %2829 = vdwg.mxu0
    %v2830 = vpack.c.bf16 %v2791, %v2791
    %v2831 = vpack.c.bf16 %v2793, %v2793
    %v2832 = vpack.c.bf16 %v2796, %v2796
    %v2833 = vpack.c.bf16 %v2798, %v2798
    %v2834 = vpack.c.bf16 %v2801, %v2801
    %v2835 = vpack.c.bf16 %v2803, %v2803
    %v2836 = vpack.c.bf16 %v2806, %v2806
    %v2837 = vpack.c.bf16 %v2808, %v2808
    %v2838 = vpack.c.bf16 %v2811, %v2811
    %v2839 = vpack.c.bf16 %v2813, %v2813
    %v2840 = vpack.c.bf16 %v2816, %v2816
    %v2841 = vpack.c.bf16 %v2818, %v2818
    %v2842 = vpack.c.bf16 %v2821, %v2821
    %v2843 = vpack.c.bf16 %v2823, %v2823
    %v2844 = vpack.c.bf16 %v2826, %v2826
    %v2845 = vpack.c.bf16 %v2828, %v2828
    %2846 = vst [vmem:[%s6] sm:$0xf] %v2830
    %2847 = vst [vmem:[%s6 + $0x4] sm:$0xf] %v2831
    %2848 = vst [vmem:[%s6 + $0x8] sm:$0xf] %v2832
    %2849 = vst [vmem:[%s6 + $0xc] sm:$0xf] %v2833
    %2850 = vst [vmem:[%s6 + $0x10] sm:$0xf] %v2834
    %2851 = vst [vmem:[%s6 + $0x14] sm:$0xf] %v2835
    %2852 = vst [vmem:[%s6 + $0x18] sm:$0xf] %v2836
    %2853 = vst [vmem:[%s6 + $0x1c] sm:$0xf] %v2837
    %2854 = vst [vmem:[%s6 + $0x20] sm:$0xf] %v2838
    %2855 = vst [vmem:[%s6 + $0x24] sm:$0xf] %v2839
    %2856 = vst [vmem:[%s6 + $0x28] sm:$0xf] %v2840
    %2857 = vst [vmem:[%s6 + $0x2c] sm:$0xf] %v2841
    %2858 = vst [vmem:[%s6 + $0x30] sm:$0xf] %v2842
    %2859 = vst [vmem:[%s6 + $0x34] sm:$0xf] %v2843
    %2860 = vst [vmem:[%s6 + $0x38] sm:$0xf] %v2844
    %2861 = vst [vmem:[%s6 + $0x3c] sm:$0xf] %v2845
  $region33: #{spgat_forward.4} parent=0 // pred_fallthru
    _
  // Predicated region
  $region34: #{spgat_forward.4} parent=0 // pred_check
    _
  $region35: #{spgat_forward.4} parent=0 // pred_check_branch
    %2863 = sbr.rel (0) target = $region37
  $region36: #{spgat_forward.4} parent=0 // pred_region
    _
  $region37: #{spgat_forward.4} parent=0 // pred_fallthru
    _
  // Predicated region
  $region38: #{spgat_forward.4} parent=0 // pred_check
    _
  $region39: #{spgat_forward.4} parent=0 // pred_check_branch
    %2865 = sbr.rel (0) target = $region41
  $region40: #{spgat_forward.4} parent=0 // pred_region
    _
  $region41: #{spgat_forward.4} parent=0 // pred_fallthru
    _

</llo_original>
